<compile_context>
chip_gen: v7x
topology: tpu7x:2x2x1
jax: 0.10.0
libtpu: 0.0.40
codegen_flags: <defaults>
</compile_context>

<pallas_src>
import functools

import numpy as np
import jax
import jax.numpy as jnp
from jax import lax
from jax.experimental import pallas as pl
from jax.experimental.pallas import tpu as pltpu

EPS = 1e-5  # nn.InstanceNorm2d default eps


# ----------------------------------------------------------------------------
# Fused Group kernel (bt lane-stacked batch samples per grid step)
# ----------------------------------------------------------------------------
def _group_kernel(x_ref, w_ref, gb_ref, wse_ref, bse_ref, mask_ref, o_ref,
                  xpad_ref, col_ref, *, Cp, H, W, bt, seg, base, dils):
    """x_ref/o_ref: (Cp, bt*HW) lane-dense activations.
    w_ref: (4, Cp, 27*Cp) im2col-packed PSConv weights (one row of 27*Cp input
    features per output channel, per layer).
    gb_ref: (Cp, 8) InstanceNorm gamma/beta for the 4 norms.
    wse_ref: (1, Cp) spatial-SE 1x1 conv weight, bse_ref: SMEM (1,) bias.
    mask_ref: (6, HW) horizontal row-wrap masks (L/R per branch dilation).
    xpad_ref: (Cp, bt*seg) flat zero-halo padded scratch.
    col_ref: (27*Cp, bt*HW) im2col scratch."""
    HW = H * W
    f32 = jnp.float32

    # Zero ONLY the halo regions; interiors are fully overwritten every layer.
    # Scratch persists across grid steps and "parallel" steps may run on
    # different cores, so do it every step (2*bt small lane-aligned stores).
    zhalo = jnp.zeros((Cp, base), f32)
    for s in range(bt):
        xpad_ref[:, s * seg: s * seg + base] = zhalo
        xpad_ref[:, s * seg + base + HW: (s + 1) * seg] = zhalo

    # Hoisted mask broadcasts: one broadcast_in_dim per mask for the whole
    # kernel (do NOT inline these into the tap loop).
    mL = [jnp.broadcast_to(mask_ref[2 * b: 2 * b + 1, :], (Cp, HW)) for b in range(3)]
    mR = [jnp.broadcast_to(mask_ref[2 * b + 1: 2 * b + 2, :], (Cp, HW)) for b in range(3)]

    def psconv(layer, act):
        # 1) stage the activation into each sample's zero-halo interior.
        for s in range(bt):
            xpad_ref[:, s * seg + base: s * seg + base + HW] = act[:, s * HW:(s + 1) * HW]
        # 2) im2col: 27 shifted (+masked) windows, sublane-major by tap.
        t = 0
        for b, d in enumerate(dils):                 # gwconv, gwconv_shift, conv
            for kh in range(3):
                for kw in range(3):
                    off = base + (kh - 1) * d * W + (kw - 1) * d
                    for s in range(bt):
                        win = xpad_ref[:, s * seg + off: s * seg + off + HW]
                        if kw == 0:
                            win = win * mL[b]
                        elif kw == 2:
                            win = win * mR[b]
                        col_ref[t * Cp:(t + 1) * Cp, s * HW:(s + 1) * HW] = win
                    t += 1
        # 3) single big-K MXU matmul (K = 27*Cp), f32 accumulation on the MXU.
        return jnp.dot(w_ref[layer], col_ref[...], preferred_element_type=f32)

    def inorm(z, idx):
        g = gb_ref[:, 2 * idx: 2 * idx + 1]          # (Cp, 1)
        b = gb_ref[:, 2 * idx + 1: 2 * idx + 2]      # (Cp, 1)
        cols = []
        for s in range(bt):                           # per-sample statistics
            zs = z[:, s * HW:(s + 1) * HW]
            mu = jnp.mean(zs, axis=1, keepdims=True)
            var = jnp.mean(zs * zs, axis=1, keepdims=True) - mu * mu
            cols.append((zs - mu) * lax.rsqrt(var + EPS))
        zn = cols[0] if bt == 1 else jnp.concatenate(cols, axis=1)
        return zn * g + b

    x = x_ref[...]

    # ---- res1: t1 = relu(IN1(conv1(x))) + x ; r1 = relu(x + IN2(conv2(t1))) ----
    t1 = jnp.maximum(inorm(psconv(0, x), 0), 0.0) + x
    r1 = jnp.maximum(x + inorm(psconv(1, t1), 1), 0.0)
    # Group.act1 ReLU is a no-op on r1 (already >= 0) -> folded away.

    # ---- res2 (its own input r1 is the residual) ----
    t2 = jnp.maximum(inorm(psconv(2, r1), 2), 0.0) + r1
    r2 = jnp.maximum(r1 + inorm(psconv(3, t2), 3), 0.0)

    # ---- spatial SE (1x1 conv + bias + sigmoid gate) + final Group residual ----
    s = jnp.dot(wse_ref[...], r2, preferred_element_type=f32) + bse_ref[0]   # (1, LW)
    sig = pl.reciprocal(1.0 + jnp.exp(-s), approx=True)   # EUP exp + EUP recip
    o_ref[...] = x + r2 * sig


# ----------------------------------------------------------------------------
# pallas_call wrapper
# ----------------------------------------------------------------------------
def _pick_bt(N, HW, lane_target=2048):
    """Samples to lane-stack per grid step; keeps >= 2 grid steps when N >= 2
    so both v7x TensorCores get work."""
    cap = max(1, lane_target // HW)
    for b in range(min(cap, N), 0, -1):
        if N % b == 0 and (N // b >= 2 or N < 2):
            return b
    return 1


def group_forward(x, params, dilation=2):
    N, C, H, W = x.shape
    Cp = params["w_all"].shape[1]                 # channel dim padded to x8
    HW = H * W
    dils = (dilation, 2 * dilation, 1)            # gwconv, gwconv_shift, conv
    halo = max(dils) * W + max(dils)              # max |flat offset| of any tap
    base = ((halo + 127) // 128) * 128            # lane-aligned interior start
    seg = base + HW + base                        # per-sample padded segment
    assert base >= halo and (seg - base - HW) >= halo, "halo does not fit padding"

    bt = _pick_bt(N, HW)
    G = N // bt
    LW = bt * HW

    # Horizontal row-wrap masks: (left, right) pair per branch dilation.
    col_idx = np.arange(HW) % W
    m = []
    for d in dils:
        m.append((col_idx >= d).astype(np.float32))       # kw == 0 (reads col-d)
        m.append((col_idx < W - d).astype(np.float32))    # kw == 2 (reads col+d)
    masks = jnp.asarray(np.stack(m))                      # (6, HW)

    # Host-side layout plumbing: pad channels to Cp, lane-stack bt samples.
    x_f = x.reshape(N, C, HW)
    if Cp > C:
        x_f = jnp.pad(x_f, ((0, 0), (0, Cp - C), (0, 0)))
    x_f = x_f.reshape(G, bt, Cp, HW).transpose(0, 2, 1, 3).reshape(G, Cp, LW)

    # VMEM budget estimate (f32): double-buffered inputs/outputs + scratch.
    w_bytes = params["w_all"].size * 4
    blk_bytes = (2 * Cp * LW + Cp * 8 + Cp + 6 * HW) * 4
    scratch_bytes = (Cp * bt * seg + 27 * Cp * LW) * 4
    vmem_limit = int(min(64 * 2 ** 20,
                         max(16 * 2 ** 20, 2 * (w_bytes + blk_bytes) + scratch_bytes + (4 << 20))))

    kernel = functools.partial(_group_kernel, Cp=Cp, H=H, W=W, bt=bt, seg=seg,
                               base=base, dils=dils)
    out = pl.pallas_call(
        kernel,
        out_shape=jax.ShapeDtypeStruct((G, Cp, LW), jnp.float32),
        grid=(G,),
        in_specs=[
            pl.BlockSpec((None, Cp, LW), lambda g: (g, 0, 0)),       # x (lane-stacked)
            pl.BlockSpec((4, Cp, 27 * Cp), lambda g: (0, 0, 0)),     # packed conv weights
            pl.BlockSpec((Cp, 8), lambda g: (0, 0)),                 # IN gamma/beta
            pl.BlockSpec((1, Cp), lambda g: (0, 0)),                 # SE weight
            pl.BlockSpec(memory_space=pltpu.MemorySpace.SMEM),       # SE bias (scalar)
            pl.BlockSpec((6, HW), lambda g: (0, 0)),                 # wrap masks
        ],
        out_specs=pl.BlockSpec((None, Cp, LW), lambda g: (g, 0, 0)),
        scratch_shapes=[
            pltpu.VMEM((Cp, bt * seg), jnp.float32),                 # zero-halo buffer
            pltpu.VMEM((27 * Cp, LW), jnp.float32),                  # im2col buffer
        ],
        compiler_params=pltpu.CompilerParams(
            dimension_semantics=("parallel",),
            vmem_limit_bytes=vmem_limit),
    )(x_f, params["w_all"], params["gb"], params["w_se"], params["b_se"], masks)

    out = out.reshape(G, Cp, bt, HW).transpose(0, 2, 1, 3).reshape(N, Cp, HW)
    return out[:, :C].reshape(N, C, H, W)


# ----------------------------------------------------------------------------
# Parameter construction (PyTorch-default-like, deterministic)
# ----------------------------------------------------------------------------
def _expand_grouped(w, groups, cin):
    # (cout, cin//groups, 3, 3) grouped weight -> dense (cout, cin, 3, 3)
    w = np.asarray(w)
    cout = w.shape[0]
    cpg_out, cpg_in = cout // groups, cin // groups
    dense = np.zeros((cout, cin, 3, 3), np.float32)
    for o in range(cout):
        g = o // cpg_out
        dense[o, g * cpg_in:(g + 1) * cpg_in] = w[o]
    return dense


def _psconv_dense_taps(key, cin, cout, parts=4):
    """One PSConv2d as (27, cout, cin) dense per-tap weights: 3 branches x 9
    taps (branch-major, then kh, kw), with the channel shift folded into
    gwconv_shift's input channels and the forward weight mask applied."""
    assert cin % parts == 0 and cout % parts == 0 and cin % 2 == 0
    k1, k2, k3 = jax.random.split(key, 3)
    bg = 1.0 / np.sqrt((cin // parts) * 9)
    bc = 1.0 / np.sqrt(cin * 9)
    w_gw = np.asarray(jax.random.uniform(k1, (cout, cin // parts, 3, 3), jnp.float32, -bg, bg))
    w_sh = np.asarray(jax.random.uniform(k2, (cout, cin // parts, 3, 3), jnp.float32, -bg, bg))
    w_cv = np.asarray(jax.random.uniform(k3, (cout, cin, 3, 3), jnp.float32, -bc, bc))

    w_gw_d = _expand_grouped(w_gw, parts, cin)
    w_sh_d = _expand_grouped(w_sh, parts, cin)
    # fold the cat(x2, x1) channel shift into the shift-conv input channels
    perm = (np.arange(cin) + cin // 2) % cin
    w_sh_d = w_sh_d[:, perm]

    # PSConv2d forward weight masking of the dense conv (mask==1 -> weight=0)
    mask = np.zeros((cout, cin, 3, 3), dtype=bool)
    _i, _o = cin // parts, cout // parts
    for i in range(parts):
        mask[i * _o:(i + 1) * _o, i * _i:(i + 1) * _i] = True
        j = (i + parts // 2) % parts
        mask[j * _o:(j + 1) * _o, i * _i:(i + 1) * _i] = True
    w_cv = np.where(mask, 0.0, w_cv).astype(np.float32)

    # (3, cout, cin, 3, 3) -> (3, kh, kw, cout, cin) -> (27, cout, cin)
    stacked = np.stack([w_gw_d, w_sh_d, w_cv])
    return np.transpose(stacked, (0, 3, 4, 1, 2)).reshape(27, cout, cin)


def _pack_layer(w27, Cp):
    """(27, C, C) per-tap weights -> (Cp, 27*Cp) im2col-matched weight matrix
    (column block t holds the input channels of tap t, zero-padded to Cp)."""
    n_t, cout, cin = w27.shape
    wp = np.zeros((n_t, Cp, Cp), np.float32)
    wp[:, :cout, :cin] = w27
    return np.transpose(wp, (1, 0, 2)).reshape(Cp, n_t * Cp)


def init_group_params(key, inc, outc, parts=4):
    assert inc == outc and inc % parts == 0 and inc % 2 == 0
    C = outc
    Cp = ((C + 7) // 8) * 8                 # pad channels to a sublane multiple
    keys = jax.random.split(key, 6)
    w_all = np.stack([
        _pack_layer(_psconv_dense_taps(keys[0], C, C, parts), Cp),   # res1.conv1
        _pack_layer(_psconv_dense_taps(keys[1], C, C, parts), Cp),   # res1.conv2
        _pack_layer(_psconv_dense_taps(keys[2], C, C, parts), Cp),   # res2.conv1
        _pack_layer(_psconv_dense_taps(keys[3], C, C, parts), Cp),   # res2.conv2
    ])                                                               # (4, Cp, 27*Cp)

    gb = np.zeros((Cp, 8), np.float32)
    gb[:, 0::2] = 1.0                       # InstanceNorm affine: gamma=1, beta=0

    bse = 1.0 / np.sqrt(C)
    w_se = np.zeros((1, Cp), np.float32)
    w_se[:, :C] = np.asarray(jax.random.uniform(keys[4], (1, C), jnp.float32, -bse, bse))
    b_se = jax.random.uniform(keys[5], (1,), jnp.float32, -bse, bse)

    return dict(w_all=jnp.asarray(w_all), gb=jnp.asarray(gb),
                w_se=jnp.asarray(w_se), b_se=jnp.asarray(b_se))


# ----------------------------------------------------------------------------
if __name__ == "__main__":
    key = jax.random.PRNGKey(0)
    kx, kp = jax.random.split(key)

    N, C, H, W = 2, 4, 16, 16          # parts=4 requires C % 4 == 0
    x = jax.random.normal(kx, (N, C, H, W), jnp.float32)
    params = init_group_params(kp, inc=C, outc=C)

    fwd = jax.jit(functools.partial(group_forward, dilation=2))
    out = fwd(x, params)
    jax.block_until_ready(out)
    assert out.shape == (N, C, H, W) and out.dtype == jnp.float32
    print("KERNEL_OK")
</pallas_src>

<mosaic_0001>
module attributes {stable_mosaic.version = 11 : i64} {
  func.func @_group_kernel(%arg0: i32, %arg1: memref<1x8x256xf32, #tpu.memory_space<vmem>>, %arg2: memref<4x8x216xf32, #tpu.memory_space<vmem>>, %arg3: memref<8x8xf32, #tpu.memory_space<vmem>>, %arg4: memref<1x8xf32, #tpu.memory_space<vmem>>, %arg5: memref<1xf32, #tpu.memory_space<smem>>, %arg6: memref<6x256xf32, #tpu.memory_space<vmem>>, %arg7: memref<1x8x256xf32, #tpu.memory_space<vmem>>, %arg8: memref<8x512xf32, #tpu.memory_space<vmem>>, %arg9: memref<216x256xf32, #tpu.memory_space<vmem>>) attributes {dimension_semantics = [#tpu.dimension_semantics<parallel>], iteration_bounds = array<i64: 2>, scalar_prefetch = 0 : i64, scratch_operands = 2 : i64, tpu.core_type = #tpu.core_type<tc>, window_params = [{transform_indices = @transform_0, window_bounds = array<i64: 1, 8, 256>}, {pipeline_mode = #tpu.pipeline_mode<synchronous>, transform_indices = @transform_1, window_bounds = array<i64: 4, 8, 216>}, {pipeline_mode = #tpu.pipeline_mode<synchronous>, transform_indices = @transform_2, window_bounds = array<i64: 8, 8>}, {pipeline_mode = #tpu.pipeline_mode<synchronous>, transform_indices = @transform_3, window_bounds = array<i64: 1, 8>}, {transform_indices = @transform_4, window_bounds = array<i64: 1>}, {pipeline_mode = #tpu.pipeline_mode<synchronous>, transform_indices = @transform_5, window_bounds = array<i64: 6, 256>}, {transform_indices = @transform_6, window_bounds = array<i64: 1, 8, 256>}]} {
    %cst = arith.constant 0.000000e+00 : f32
    %0 = vector.broadcast %cst : f32 to vector<8x128xf32>
    %c0 = arith.constant 0 : index
    %c0_0 = arith.constant 0 : index
    %1 = vector.load %arg8[%c0, %c0_0] : memref<8x512xf32, #tpu.memory_space<vmem>>, vector<8x128xf32>
    tpu.vector_store %arg8[%c0, %c0_0], %0 {strides = array<i32>} : memref<8x512xf32, #tpu.memory_space<vmem>>, vector<8x128xf32>,
    %c0_1 = arith.constant 0 : index
    %c384 = arith.constant 384 : index
    %2 = vector.load %arg8[%c0_1, %c384] : memref<8x512xf32, #tpu.memory_space<vmem>>, vector<8x128xf32>
    tpu.vector_store %arg8[%c0_1, %c384], %0 {strides = array<i32>} : memref<8x512xf32, #tpu.memory_space<vmem>>, vector<8x128xf32>,
    %c0_2 = arith.constant 0 : index
    %c0_3 = arith.constant 0 : index
    %3 = vector.load %arg6[%c0_2, %c0_3] : memref<6x256xf32, #tpu.memory_space<vmem>>, vector<1x256xf32>
    %4 = vector.shape_cast %3 : vector<1x256xf32> to vector<1x256xf32>
    %5 = vector.broadcast %4 : vector<1x256xf32> to vector<8x256xf32>
    %c2 = arith.constant 2 : index
    %c0_4 = arith.constant 0 : index
    %6 = vector.load %arg6[%c2, %c0_4] : memref<6x256xf32, #tpu.memory_space<vmem>>, vector<1x256xf32>
    %7 = vector.shape_cast %6 : vector<1x256xf32> to vector<1x256xf32>
    %8 = vector.broadcast %7 : vector<1x256xf32> to vector<8x256xf32>
    %c4 = arith.constant 4 : index
    %c0_5 = arith.constant 0 : index
    %9 = vector.load %arg6[%c4, %c0_5] : memref<6x256xf32, #tpu.memory_space<vmem>>, vector<1x256xf32>
    %10 = vector.shape_cast %9 : vector<1x256xf32> to vector<1x256xf32>
    %11 = vector.broadcast %10 : vector<1x256xf32> to vector<8x256xf32>
    %c1 = arith.constant 1 : index
    %c0_6 = arith.constant 0 : index
    %12 = vector.load %arg6[%c1, %c0_6] : memref<6x256xf32, #tpu.memory_space<vmem>>, vector<1x256xf32>
    %13 = vector.shape_cast %12 : vector<1x256xf32> to vector<1x256xf32>
    %14 = vector.broadcast %13 : vector<1x256xf32> to vector<8x256xf32>
    %c3 = arith.constant 3 : index
    %c0_7 = arith.constant 0 : index
    %15 = vector.load %arg6[%c3, %c0_7] : memref<6x256xf32, #tpu.memory_space<vmem>>, vector<1x256xf32>
    %16 = vector.shape_cast %15 : vector<1x256xf32> to vector<1x256xf32>
    %17 = vector.broadcast %16 : vector<1x256xf32> to vector<8x256xf32>
    %c5 = arith.constant 5 : index
    %c0_8 = arith.constant 0 : index
    %18 = vector.load %arg6[%c5, %c0_8] : memref<6x256xf32, #tpu.memory_space<vmem>>, vector<1x256xf32>
    %19 = vector.shape_cast %18 : vector<1x256xf32> to vector<1x256xf32>
    %20 = vector.broadcast %19 : vector<1x256xf32> to vector<8x256xf32>
    %c0_9 = arith.constant 0 : index
    %c0_10 = arith.constant 0 : index
    %c0_11 = arith.constant 0 : index
    %21 = vector.load %arg1[%c0_9, %c0_10, %c0_11] : memref<1x8x256xf32, #tpu.memory_space<vmem>>, vector<1x8x256xf32>
    %22 = vector.shape_cast %21 : vector<1x8x256xf32> to vector<8x256xf32>
    %c0_12 = arith.constant 0 : index
    %c128 = arith.constant 128 : index
    %23 = vector.load %arg8[%c0_12, %c128] : memref<8x512xf32, #tpu.memory_space<vmem>>, vector<8x256xf32>
    tpu.vector_store %arg8[%c0_12, %c128], %22 {strides = array<i32>} : memref<8x512xf32, #tpu.memory_space<vmem>>, vector<8x256xf32>,
    %c0_13 = arith.constant 0 : index
    %c94 = arith.constant 94 : index
    %24 = vector.load %arg8[%c0_13, %c94] : memref<8x512xf32, #tpu.memory_space<vmem>>, vector<8x256xf32>
    %25 = arith.mulf %24, %5 : vector<8x256xf32>
    %c0_14 = arith.constant 0 : index
    %c0_15 = arith.constant 0 : index
    %26 = vector.load %arg9[%c0_14, %c0_15] : memref<216x256xf32, #tpu.memory_space<vmem>>, vector<8x256xf32>
    tpu.vector_store %arg9[%c0_14, %c0_15], %25 {strides = array<i32>} : memref<216x256xf32, #tpu.memory_space<vmem>>, vector<8x256xf32>,
    %c0_16 = arith.constant 0 : index
    %c96 = arith.constant 96 : index
    %27 = vector.load %arg8[%c0_16, %c96] : memref<8x512xf32, #tpu.memory_space<vmem>>, vector<8x256xf32>
    %c8 = arith.constant 8 : index
    %c0_17 = arith.constant 0 : index
    %28 = vector.load %arg9[%c8, %c0_17] : memref<216x256xf32, #tpu.memory_space<vmem>>, vector<8x256xf32>
    tpu.vector_store %arg9[%c8, %c0_17], %27 {strides = array<i32>} : memref<216x256xf32, #tpu.memory_space<vmem>>, vector<8x256xf32>,
    %c0_18 = arith.constant 0 : index
    %c98 = arith.constant 98 : index
    %29 = vector.load %arg8[%c0_18, %c98] : memref<8x512xf32, #tpu.memory_space<vmem>>, vector<8x256xf32>
    %30 = arith.mulf %29, %14 : vector<8x256xf32>
    %c16 = arith.constant 16 : index
    %c0_19 = arith.constant 0 : index
    %31 = vector.load %arg9[%c16, %c0_19] : memref<216x256xf32, #tpu.memory_space<vmem>>, vector<8x256xf32>
    tpu.vector_store %arg9[%c16, %c0_19], %30 {strides = array<i32>} : memref<216x256xf32, #tpu.memory_space<vmem>>, vector<8x256xf32>,
    %c0_20 = arith.constant 0 : index
    %c126 = arith.constant 126 : index
    %32 = vector.load %arg8[%c0_20, %c126] : memref<8x512xf32, #tpu.memory_space<vmem>>, vector<8x256xf32>
    %33 = arith.mulf %32, %5 : vector<8x256xf32>
    %c24 = arith.constant 24 : index
    %c0_21 = arith.constant 0 : index
    %34 = vector.load %arg9[%c24, %c0_21] : memref<216x256xf32, #tpu.memory_space<vmem>>, vector<8x256xf32>
    tpu.vector_store %arg9[%c24, %c0_21], %33 {strides = array<i32>} : memref<216x256xf32, #tpu.memory_space<vmem>>, vector<8x256xf32>,
    %c0_22 = arith.constant 0 : index
    %c128_23 = arith.constant 128 : index
    %35 = vector.load %arg8[%c0_22, %c128_23] : memref<8x512xf32, #tpu.memory_space<vmem>>, vector<8x256xf32>
    %c32 = arith.constant 32 : index
    %c0_24 = arith.constant 0 : index
    %36 = vector.load %arg9[%c32, %c0_24] : memref<216x256xf32, #tpu.memory_space<vmem>>, vector<8x256xf32>
    tpu.vector_store %arg9[%c32, %c0_24], %35 {strides = array<i32>} : memref<216x256xf32, #tpu.memory_space<vmem>>, vector<8x256xf32>,
    %c0_25 = arith.constant 0 : index
    %c130 = arith.constant 130 : index
    %37 = vector.load %arg8[%c0_25, %c130] : memref<8x512xf32, #tpu.memory_space<vmem>>, vector<8x256xf32>
    %38 = arith.mulf %37, %14 : vector<8x256xf32>
    %c40 = arith.constant 40 : index
    %c0_26 = arith.constant 0 : index
    %39 = vector.load %arg9[%c40, %c0_26] : memref<216x256xf32, #tpu.memory_space<vmem>>, vector<8x256xf32>
    tpu.vector_store %arg9[%c40, %c0_26], %38 {strides = array<i32>} : memref<216x256xf32, #tpu.memory_space<vmem>>, vector<8x256xf32>,
    %c0_27 = arith.constant 0 : index
    %c158 = arith.constant 158 : index
    %40 = vector.load %arg8[%c0_27, %c158] : memref<8x512xf32, #tpu.memory_space<vmem>>, vector<8x256xf32>
    %41 = arith.mulf %40, %5 : vector<8x256xf32>
    %c48 = arith.constant 48 : index
    %c0_28 = arith.constant 0 : index
    %42 = vector.load %arg9[%c48, %c0_28] : memref<216x256xf32, #tpu.memory_space<vmem>>, vector<8x256xf32>
    tpu.vector_store %arg9[%c48, %c0_28], %41 {strides = array<i32>} : memref<216x256xf32, #tpu.memory_space<vmem>>, vector<8x256xf32>,
    %c0_29 = arith.constant 0 : index
    %c160 = arith.constant 160 : index
    %43 = vector.load %arg8[%c0_29, %c160] : memref<8x512xf32, #tpu.memory_space<vmem>>, vector<8x256xf32>
    %c56 = arith.constant 56 : index
    %c0_30 = arith.constant 0 : index
    %44 = vector.load %arg9[%c56, %c0_30] : memref<216x256xf32, #tpu.memory_space<vmem>>, vector<8x256xf32>
    tpu.vector_store %arg9[%c56, %c0_30], %43 {strides = array<i32>} : memref<216x256xf32, #tpu.memory_space<vmem>>, vector<8x256xf32>,
    %c0_31 = arith.constant 0 : index
    %c162 = arith.constant 162 : index
    %45 = vector.load %arg8[%c0_31, %c162] : memref<8x512xf32, #tpu.memory_space<vmem>>, vector<8x256xf32>
    %46 = arith.mulf %45, %14 : vector<8x256xf32>
    %c64 = arith.constant 64 : index
    %c0_32 = arith.constant 0 : index
    %47 = vector.load %arg9[%c64, %c0_32] : memref<216x256xf32, #tpu.memory_space<vmem>>, vector<8x256xf32>
    tpu.vector_store %arg9[%c64, %c0_32], %46 {strides = array<i32>} : memref<216x256xf32, #tpu.memory_space<vmem>>, vector<8x256xf32>,
    %c0_33 = arith.constant 0 : index
    %c60 = arith.constant 60 : index
    %48 = vector.load %arg8[%c0_33, %c60] : memref<8x512xf32, #tpu.memory_space<vmem>>, vector<8x256xf32>
    %49 = arith.mulf %48, %8 : vector<8x256xf32>
    %c72 = arith.constant 72 : index
    %c0_34 = arith.constant 0 : index
    %50 = vector.load %arg9[%c72, %c0_34] : memref<216x256xf32, #tpu.memory_space<vmem>>, vector<8x256xf32>
    tpu.vector_store %arg9[%c72, %c0_34], %49 {strides = array<i32>} : memref<216x256xf32, #tpu.memory_space<vmem>>, vector<8x256xf32>,
    %c0_35 = arith.constant 0 : index
    %c64_36 = arith.constant 64 : index
    %51 = vector.load %arg8[%c0_35, %c64_36] : memref<8x512xf32, #tpu.memory_space<vmem>>, vector<8x256xf32>
    %c80 = arith.constant 80 : index
    %c0_37 = arith.constant 0 : index
    %52 = vector.load %arg9[%c80, %c0_37] : memref<216x256xf32, #tpu.memory_space<vmem>>, vector<8x256xf32>
    tpu.vector_store %arg9[%c80, %c0_37], %51 {strides = array<i32>} : memref<216x256xf32, #tpu.memory_space<vmem>>, vector<8x256xf32>,
    %c0_38 = arith.constant 0 : index
    %c68 = arith.constant 68 : index
    %53 = vector.load %arg8[%c0_38, %c68] : memref<8x512xf32, #tpu.memory_space<vmem>>, vector<8x256xf32>
    %54 = arith.mulf %53, %17 : vector<8x256xf32>
    %c88 = arith.constant 88 : index
    %c0_39 = arith.constant 0 : index
    %55 = vector.load %arg9[%c88, %c0_39] : memref<216x256xf32, #tpu.memory_space<vmem>>, vector<8x256xf32>
    tpu.vector_store %arg9[%c88, %c0_39], %54 {strides = array<i32>} : memref<216x256xf32, #tpu.memory_space<vmem>>, vector<8x256xf32>,
    %c0_40 = arith.constant 0 : index
    %c124 = arith.constant 124 : index
    %56 = vector.load %arg8[%c0_40, %c124] : memref<8x512xf32, #tpu.memory_space<vmem>>, vector<8x256xf32>
    %57 = arith.mulf %56, %8 : vector<8x256xf32>
    %c96_41 = arith.constant 96 : index
    %c0_42 = arith.constant 0 : index
    %58 = vector.load %arg9[%c96_41, %c0_42] : memref<216x256xf32, #tpu.memory_space<vmem>>, vector<8x256xf32>
    tpu.vector_store %arg9[%c96_41, %c0_42], %57 {strides = array<i32>} : memref<216x256xf32, #tpu.memory_space<vmem>>, vector<8x256xf32>,
    %c0_43 = arith.constant 0 : index
    %c128_44 = arith.constant 128 : index
    %59 = vector.load %arg8[%c0_43, %c128_44] : memref<8x512xf32, #tpu.memory_space<vmem>>, vector<8x256xf32>
    %c104 = arith.constant 104 : index
    %c0_45 = arith.constant 0 : index
    %60 = vector.load %arg9[%c104, %c0_45] : memref<216x256xf32, #tpu.memory_space<vmem>>, vector<8x256xf32>
    tpu.vector_store %arg9[%c104, %c0_45], %59 {strides = array<i32>} : memref<216x256xf32, #tpu.memory_space<vmem>>, vector<8x256xf32>,
    %c0_46 = arith.constant 0 : index
    %c132 = arith.constant 132 : index
    %61 = vector.load %arg8[%c0_46, %c132] : memref<8x512xf32, #tpu.memory_space<vmem>>, vector<8x256xf32>
    %62 = arith.mulf %61, %17 : vector<8x256xf32>
    %c112 = arith.constant 112 : index
    %c0_47 = arith.constant 0 : index
    %63 = vector.load %arg9[%c112, %c0_47] : memref<216x256xf32, #tpu.memory_space<vmem>>, vector<8x256xf32>
    tpu.vector_store %arg9[%c112, %c0_47], %62 {strides = array<i32>} : memref<216x256xf32, #tpu.memory_space<vmem>>, vector<8x256xf32>,
    %c0_48 = arith.constant 0 : index
    %c188 = arith.constant 188 : index
    %64 = vector.load %arg8[%c0_48, %c188] : memref<8x512xf32, #tpu.memory_space<vmem>>, vector<8x256xf32>
    %65 = arith.mulf %64, %8 : vector<8x256xf32>
    %c120 = arith.constant 120 : index
    %c0_49 = arith.constant 0 : index
    %66 = vector.load %arg9[%c120, %c0_49] : memref<216x256xf32, #tpu.memory_space<vmem>>, vector<8x256xf32>
    tpu.vector_store %arg9[%c120, %c0_49], %65 {strides = array<i32>} : memref<216x256xf32, #tpu.memory_space<vmem>>, vector<8x256xf32>,
    %c0_50 = arith.constant 0 : index
    %c192 = arith.constant 192 : index
    %67 = vector.load %arg8[%c0_50, %c192] : memref<8x512xf32, #tpu.memory_space<vmem>>, vector<8x256xf32>
    %c128_51 = arith.constant 128 : index
    %c0_52 = arith.constant 0 : index
    %68 = vector.load %arg9[%c128_51, %c0_52] : memref<216x256xf32, #tpu.memory_space<vmem>>, vector<8x256xf32>
    tpu.vector_store %arg9[%c128_51, %c0_52], %67 {strides = array<i32>} : memref<216x256xf32, #tpu.memory_space<vmem>>, vector<8x256xf32>,
    %c0_53 = arith.constant 0 : index
    %c196 = arith.constant 196 : index
    %69 = vector.load %arg8[%c0_53, %c196] : memref<8x512xf32, #tpu.memory_space<vmem>>, vector<8x256xf32>
    %70 = arith.mulf %69, %17 : vector<8x256xf32>
    %c136 = arith.constant 136 : index
    %c0_54 = arith.constant 0 : index
    %71 = vector.load %arg9[%c136, %c0_54] : memref<216x256xf32, #tpu.memory_space<vmem>>, vector<8x256xf32>
    tpu.vector_store %arg9[%c136, %c0_54], %70 {strides = array<i32>} : memref<216x256xf32, #tpu.memory_space<vmem>>, vector<8x256xf32>,
    %c0_55 = arith.constant 0 : index
    %c111 = arith.constant 111 : index
    %72 = vector.load %arg8[%c0_55, %c111] : memref<8x512xf32, #tpu.memory_space<vmem>>, vector<8x256xf32>
    %73 = arith.mulf %72, %11 : vector<8x256xf32>
    %c144 = arith.constant 144 : index
    %c0_56 = arith.constant 0 : index
    %74 = vector.load %arg9[%c144, %c0_56] : memref<216x256xf32, #tpu.memory_space<vmem>>, vector<8x256xf32>
    tpu.vector_store %arg9[%c144, %c0_56], %73 {strides = array<i32>} : memref<216x256xf32, #tpu.memory_space<vmem>>, vector<8x256xf32>,
    %c0_57 = arith.constant 0 : index
    %c112_58 = arith.constant 112 : index
    %75 = vector.load %arg8[%c0_57, %c112_58] : memref<8x512xf32, #tpu.memory_space<vmem>>, vector<8x256xf32>
    %c152 = arith.constant 152 : index
    %c0_59 = arith.constant 0 : index
    %76 = vector.load %arg9[%c152, %c0_59] : memref<216x256xf32, #tpu.memory_space<vmem>>, vector<8x256xf32>
    tpu.vector_store %arg9[%c152, %c0_59], %75 {strides = array<i32>} : memref<216x256xf32, #tpu.memory_space<vmem>>, vector<8x256xf32>,
    %c0_60 = arith.constant 0 : index
    %c113 = arith.constant 113 : index
    %77 = vector.load %arg8[%c0_60, %c113] : memref<8x512xf32, #tpu.memory_space<vmem>>, vector<8x256xf32>
    %78 = arith.mulf %77, %20 : vector<8x256xf32>
    %c160_61 = arith.constant 160 : index
    %c0_62 = arith.constant 0 : index
    %79 = vector.load %arg9[%c160_61, %c0_62] : memref<216x256xf32, #tpu.memory_space<vmem>>, vector<8x256xf32>
    tpu.vector_store %arg9[%c160_61, %c0_62], %78 {strides = array<i32>} : memref<216x256xf32, #tpu.memory_space<vmem>>, vector<8x256xf32>,
    %c0_63 = arith.constant 0 : index
    %c127 = arith.constant 127 : index
    %80 = vector.load %arg8[%c0_63, %c127] : memref<8x512xf32, #tpu.memory_space<vmem>>, vector<8x256xf32>
    %81 = arith.mulf %80, %11 : vector<8x256xf32>
    %c168 = arith.constant 168 : index
    %c0_64 = arith.constant 0 : index
    %82 = vector.load %arg9[%c168, %c0_64] : memref<216x256xf32, #tpu.memory_space<vmem>>, vector<8x256xf32>
    tpu.vector_store %arg9[%c168, %c0_64], %81 {strides = array<i32>} : memref<216x256xf32, #tpu.memory_space<vmem>>, vector<8x256xf32>,
    %c0_65 = arith.constant 0 : index
    %c128_66 = arith.constant 128 : index
    %83 = vector.load %arg8[%c0_65, %c128_66] : memref<8x512xf32, #tpu.memory_space<vmem>>, vector<8x256xf32>
    %c176 = arith.constant 176 : index
    %c0_67 = arith.constant 0 : index
    %84 = vector.load %arg9[%c176, %c0_67] : memref<216x256xf32, #tpu.memory_space<vmem>>, vector<8x256xf32>
    tpu.vector_store %arg9[%c176, %c0_67], %83 {strides = array<i32>} : memref<216x256xf32, #tpu.memory_space<vmem>>, vector<8x256xf32>,
    %c0_68 = arith.constant 0 : index
    %c129 = arith.constant 129 : index
    %85 = vector.load %arg8[%c0_68, %c129] : memref<8x512xf32, #tpu.memory_space<vmem>>, vector<8x256xf32>
    %86 = arith.mulf %85, %20 : vector<8x256xf32>
    %c184 = arith.constant 184 : index
    %c0_69 = arith.constant 0 : index
    %87 = vector.load %arg9[%c184, %c0_69] : memref<216x256xf32, #tpu.memory_space<vmem>>, vector<8x256xf32>
    tpu.vector_store %arg9[%c184, %c0_69], %86 {strides = array<i32>} : memref<216x256xf32, #tpu.memory_space<vmem>>, vector<8x256xf32>,
    %c0_70 = arith.constant 0 : index
    %c143 = arith.constant 143 : index
    %88 = vector.load %arg8[%c0_70, %c143] : memref<8x512xf32, #tpu.memory_space<vmem>>, vector<8x256xf32>
    %89 = arith.mulf %88, %11 : vector<8x256xf32>
    %c192_71 = arith.constant 192 : index
    %c0_72 = arith.constant 0 : index
    %90 = vector.load %arg9[%c192_71, %c0_72] : memref<216x256xf32, #tpu.memory_space<vmem>>, vector<8x256xf32>
    tpu.vector_store %arg9[%c192_71, %c0_72], %89 {strides = array<i32>} : memref<216x256xf32, #tpu.memory_space<vmem>>, vector<8x256xf32>,
    %c0_73 = arith.constant 0 : index
    %c144_74 = arith.constant 144 : index
    %91 = vector.load %arg8[%c0_73, %c144_74] : memref<8x512xf32, #tpu.memory_space<vmem>>, vector<8x256xf32>
    %c200 = arith.constant 200 : index
    %c0_75 = arith.constant 0 : index
    %92 = vector.load %arg9[%c200, %c0_75] : memref<216x256xf32, #tpu.memory_space<vmem>>, vector<8x256xf32>
    tpu.vector_store %arg9[%c200, %c0_75], %91 {strides = array<i32>} : memref<216x256xf32, #tpu.memory_space<vmem>>, vector<8x256xf32>,
    %c0_76 = arith.constant 0 : index
    %c145 = arith.constant 145 : index
    %93 = vector.load %arg8[%c0_76, %c145] : memref<8x512xf32, #tpu.memory_space<vmem>>, vector<8x256xf32>
    %94 = arith.mulf %93, %20 : vector<8x256xf32>
    %c208 = arith.constant 208 : index
    %c0_77 = arith.constant 0 : index
    %95 = vector.load %arg9[%c208, %c0_77] : memref<216x256xf32, #tpu.memory_space<vmem>>, vector<8x256xf32>
    tpu.vector_store %arg9[%c208, %c0_77], %94 {strides = array<i32>} : memref<216x256xf32, #tpu.memory_space<vmem>>, vector<8x256xf32>,
    %c0_78 = arith.constant 0 : index
    %c0_79 = arith.constant 0 : index
    %c0_80 = arith.constant 0 : index
    %96 = vector.load %arg2[%c0_78, %c0_79, %c0_80] : memref<4x8x216xf32, #tpu.memory_space<vmem>>, vector<1x8x216xf32>
    %97 = vector.shape_cast %96 : vector<1x8x216xf32> to vector<8x216xf32>
    %c0_81 = arith.constant 0 : index
    %c0_82 = arith.constant 0 : index
    %98 = vector.load %arg9[%c0_81, %c0_82] : memref<216x256xf32, #tpu.memory_space<vmem>>, vector<216x256xf32>
    %cst_83 = arith.constant dense<0.000000e+00> : vector<8x256xf32>
    %99 = tpu.matmul %97, %98, %cst_83 {dimension_numbers = #tpu.dot_dimension_numbers<[1], [0], [0], [1], [0, 0, 1, 1], [], []>} : vector<8x216xf32>, vector<216x256xf32>, vector<8x256xf32> -> vector<8x256xf32>
    %c0_84 = arith.constant 0 : index
    %c0_85 = arith.constant 0 : index
    %100 = vector.load %arg3[%c0_84, %c0_85] : memref<8x8xf32, #tpu.memory_space<vmem>>, vector<8x1xf32>
    %c0_86 = arith.constant 0 : index
    %c1_87 = arith.constant 1 : index
    %101 = vector.load %arg3[%c0_86, %c1_87] : memref<8x8xf32, #tpu.memory_space<vmem>>, vector<8x1xf32>
    %cst_88 = arith.constant dense<0.000000e+00> : vector<8xf32>
    %102 = vector.multi_reduction <add>, %99, %cst_88 [1] : vector<8x256xf32> to vector<8xf32>
    %103 = vector.shape_cast %102 : vector<8xf32> to vector<8x1xf32>
    %cst_89 = arith.constant 2.560000e+02 : f32
    %104 = vector.broadcast %cst_89 : f32 to vector<8x1xf32>
    %105 = arith.divf %103, %104 : vector<8x1xf32>
    %106 = arith.mulf %99, %99 : vector<8x256xf32>
    %cst_90 = arith.constant dense<0.000000e+00> : vector<8xf32>
    %107 = vector.multi_reduction <add>, %106, %cst_90 [1] : vector<8x256xf32> to vector<8xf32>
    %108 = vector.shape_cast %107 : vector<8xf32> to vector<8x1xf32>
    %cst_91 = arith.constant 2.560000e+02 : f32
    %109 = vector.broadcast %cst_91 : f32 to vector<8x1xf32>
    %110 = arith.divf %108, %109 : vector<8x1xf32>
    %111 = arith.mulf %105, %105 : vector<8x1xf32>
    %112 = arith.subf %110, %111 : vector<8x1xf32>
    %113 = vector.broadcast %105 : vector<8x1xf32> to vector<8x256xf32>
    %114 = arith.subf %99, %113 : vector<8x256xf32>
    %cst_92 = arith.constant 9.99999974E-6 : f32
    %115 = vector.broadcast %cst_92 : f32 to vector<8x1xf32>
    %116 = arith.addf %112, %115 : vector<8x1xf32>
    %117 = math.rsqrt %116 : vector<8x1xf32>
    %118 = vector.broadcast %117 : vector<8x1xf32> to vector<8x256xf32>
    %119 = arith.mulf %114, %118 : vector<8x256xf32>
    %120 = vector.broadcast %100 : vector<8x1xf32> to vector<8x256xf32>
    %121 = arith.mulf %119, %120 : vector<8x256xf32>
    %122 = vector.broadcast %101 : vector<8x1xf32> to vector<8x256xf32>
    %123 = arith.addf %121, %122 : vector<8x256xf32>
    %cst_93 = arith.constant 0.000000e+00 : f32
    %124 = vector.broadcast %cst_93 : f32 to vector<8x256xf32>
    %125 = arith.maximumf %123, %124 : vector<8x256xf32>
    %126 = arith.addf %125, %22 : vector<8x256xf32>
    %c0_94 = arith.constant 0 : index
    %c128_95 = arith.constant 128 : index
    %127 = vector.load %arg8[%c0_94, %c128_95] : memref<8x512xf32, #tpu.memory_space<vmem>>, vector<8x256xf32>
    tpu.vector_store %arg8[%c0_94, %c128_95], %126 {strides = array<i32>} : memref<8x512xf32, #tpu.memory_space<vmem>>, vector<8x256xf32>,
    %c0_96 = arith.constant 0 : index
    %c94_97 = arith.constant 94 : index
    %128 = vector.load %arg8[%c0_96, %c94_97] : memref<8x512xf32, #tpu.memory_space<vmem>>, vector<8x256xf32>
    %129 = arith.mulf %128, %5 : vector<8x256xf32>
    %c0_98 = arith.constant 0 : index
    %c0_99 = arith.constant 0 : index
    %130 = vector.load %arg9[%c0_98, %c0_99] : memref<216x256xf32, #tpu.memory_space<vmem>>, vector<8x256xf32>
    tpu.vector_store %arg9[%c0_98, %c0_99], %129 {strides = array<i32>} : memref<216x256xf32, #tpu.memory_space<vmem>>, vector<8x256xf32>,
    %c0_100 = arith.constant 0 : index
    %c96_101 = arith.constant 96 : index
    %131 = vector.load %arg8[%c0_100, %c96_101] : memref<8x512xf32, #tpu.memory_space<vmem>>, vector<8x256xf32>
    %c8_102 = arith.constant 8 : index
    %c0_103 = arith.constant 0 : index
    %132 = vector.load %arg9[%c8_102, %c0_103] : memref<216x256xf32, #tpu.memory_space<vmem>>, vector<8x256xf32>
    tpu.vector_store %arg9[%c8_102, %c0_103], %131 {strides = array<i32>} : memref<216x256xf32, #tpu.memory_space<vmem>>, vector<8x256xf32>,
    %c0_104 = arith.constant 0 : index
    %c98_105 = arith.constant 98 : index
    %133 = vector.load %arg8[%c0_104, %c98_105] : memref<8x512xf32, #tpu.memory_space<vmem>>, vector<8x256xf32>
    %134 = arith.mulf %133, %14 : vector<8x256xf32>
    %c16_106 = arith.constant 16 : index
    %c0_107 = arith.constant 0 : index
    %135 = vector.load %arg9[%c16_106, %c0_107] : memref<216x256xf32, #tpu.memory_space<vmem>>, vector<8x256xf32>
    tpu.vector_store %arg9[%c16_106, %c0_107], %134 {strides = array<i32>} : memref<216x256xf32, #tpu.memory_space<vmem>>, vector<8x256xf32>,
    %c0_108 = arith.constant 0 : index
    %c126_109 = arith.constant 126 : index
    %136 = vector.load %arg8[%c0_108, %c126_109] : memref<8x512xf32, #tpu.memory_space<vmem>>, vector<8x256xf32>
    %137 = arith.mulf %136, %5 : vector<8x256xf32>
    %c24_110 = arith.constant 24 : index
    %c0_111 = arith.constant 0 : index
    %138 = vector.load %arg9[%c24_110, %c0_111] : memref<216x256xf32, #tpu.memory_space<vmem>>, vector<8x256xf32>
    tpu.vector_store %arg9[%c24_110, %c0_111], %137 {strides = array<i32>} : memref<216x256xf32, #tpu.memory_space<vmem>>, vector<8x256xf32>,
    %c0_112 = arith.constant 0 : index
    %c128_113 = arith.constant 128 : index
    %139 = vector.load %arg8[%c0_112, %c128_113] : memref<8x512xf32, #tpu.memory_space<vmem>>, vector<8x256xf32>
    %c32_114 = arith.constant 32 : index
    %c0_115 = arith.constant 0 : index
    %140 = vector.load %arg9[%c32_114, %c0_115] : memref<216x256xf32, #tpu.memory_space<vmem>>, vector<8x256xf32>
    tpu.vector_store %arg9[%c32_114, %c0_115], %139 {strides = array<i32>} : memref<216x256xf32, #tpu.memory_space<vmem>>, vector<8x256xf32>,
    %c0_116 = arith.constant 0 : index
    %c130_117 = arith.constant 130 : index
    %141 = vector.load %arg8[%c0_116, %c130_117] : memref<8x512xf32, #tpu.memory_space<vmem>>, vector<8x256xf32>
    %142 = arith.mulf %141, %14 : vector<8x256xf32>
    %c40_118 = arith.constant 40 : index
    %c0_119 = arith.constant 0 : index
    %143 = vector.load %arg9[%c40_118, %c0_119] : memref<216x256xf32, #tpu.memory_space<vmem>>, vector<8x256xf32>
    tpu.vector_store %arg9[%c40_118, %c0_119], %142 {strides = array<i32>} : memref<216x256xf32, #tpu.memory_space<vmem>>, vector<8x256xf32>,
    %c0_120 = arith.constant 0 : index
    %c158_121 = arith.constant 158 : index
    %144 = vector.load %arg8[%c0_120, %c158_121] : memref<8x512xf32, #tpu.memory_space<vmem>>, vector<8x256xf32>
    %145 = arith.mulf %144, %5 : vector<8x256xf32>
    %c48_122 = arith.constant 48 : index
    %c0_123 = arith.constant 0 : index
    %146 = vector.load %arg9[%c48_122, %c0_123] : memref<216x256xf32, #tpu.memory_space<vmem>>, vector<8x256xf32>
    tpu.vector_store %arg9[%c48_122, %c0_123], %145 {strides = array<i32>} : memref<216x256xf32, #tpu.memory_space<vmem>>, vector<8x256xf32>,
    %c0_124 = arith.constant 0 : index
    %c160_125 = arith.constant 160 : index
    %147 = vector.load %arg8[%c0_124, %c160_125] : memref<8x512xf32, #tpu.memory_space<vmem>>, vector<8x256xf32>
    %c56_126 = arith.constant 56 : index
    %c0_127 = arith.constant 0 : index
    %148 = vector.load %arg9[%c56_126, %c0_127] : memref<216x256xf32, #tpu.memory_space<vmem>>, vector<8x256xf32>
    tpu.vector_store %arg9[%c56_126, %c0_127], %147 {strides = array<i32>} : memref<216x256xf32, #tpu.memory_space<vmem>>, vector<8x256xf32>,
    %c0_128 = arith.constant 0 : index
    %c162_129 = arith.constant 162 : index
    %149 = vector.load %arg8[%c0_128, %c162_129] : memref<8x512xf32, #tpu.memory_space<vmem>>, vector<8x256xf32>
    %150 = arith.mulf %149, %14 : vector<8x256xf32>
    %c64_130 = arith.constant 64 : index
    %c0_131 = arith.constant 0 : index
    %151 = vector.load %arg9[%c64_130, %c0_131] : memref<216x256xf32, #tpu.memory_space<vmem>>, vector<8x256xf32>
    tpu.vector_store %arg9[%c64_130, %c0_131], %150 {strides = array<i32>} : memref<216x256xf32, #tpu.memory_space<vmem>>, vector<8x256xf32>,
    %c0_132 = arith.constant 0 : index
    %c60_133 = arith.constant 60 : index
    %152 = vector.load %arg8[%c0_132, %c60_133] : memref<8x512xf32, #tpu.memory_space<vmem>>, vector<8x256xf32>
    %153 = arith.mulf %152, %8 : vector<8x256xf32>
    %c72_134 = arith.constant 72 : index
    %c0_135 = arith.constant 0 : index
    %154 = vector.load %arg9[%c72_134, %c0_135] : memref<216x256xf32, #tpu.memory_space<vmem>>, vector<8x256xf32>
    tpu.vector_store %arg9[%c72_134, %c0_135], %153 {strides = array<i32>} : memref<216x256xf32, #tpu.memory_space<vmem>>, vector<8x256xf32>,
    %c0_136 = arith.constant 0 : index
    %c64_137 = arith.constant 64 : index
    %155 = vector.load %arg8[%c0_136, %c64_137] : memref<8x512xf32, #tpu.memory_space<vmem>>, vector<8x256xf32>
    %c80_138 = arith.constant 80 : index
    %c0_139 = arith.constant 0 : index
    %156 = vector.load %arg9[%c80_138, %c0_139] : memref<216x256xf32, #tpu.memory_space<vmem>>, vector<8x256xf32>
    tpu.vector_store %arg9[%c80_138, %c0_139], %155 {strides = array<i32>} : memref<216x256xf32, #tpu.memory_space<vmem>>, vector<8x256xf32>,
    %c0_140 = arith.constant 0 : index
    %c68_141 = arith.constant 68 : index
    %157 = vector.load %arg8[%c0_140, %c68_141] : memref<8x512xf32, #tpu.memory_space<vmem>>, vector<8x256xf32>
    %158 = arith.mulf %157, %17 : vector<8x256xf32>
    %c88_142 = arith.constant 88 : index
    %c0_143 = arith.constant 0 : index
    %159 = vector.load %arg9[%c88_142, %c0_143] : memref<216x256xf32, #tpu.memory_space<vmem>>, vector<8x256xf32>
    tpu.vector_store %arg9[%c88_142, %c0_143], %158 {strides = array<i32>} : memref<216x256xf32, #tpu.memory_space<vmem>>, vector<8x256xf32>,
    %c0_144 = arith.constant 0 : index
    %c124_145 = arith.constant 124 : index
    %160 = vector.load %arg8[%c0_144, %c124_145] : memref<8x512xf32, #tpu.memory_space<vmem>>, vector<8x256xf32>
    %161 = arith.mulf %160, %8 : vector<8x256xf32>
    %c96_146 = arith.constant 96 : index
    %c0_147 = arith.constant 0 : index
    %162 = vector.load %arg9[%c96_146, %c0_147] : memref<216x256xf32, #tpu.memory_space<vmem>>, vector<8x256xf32>
    tpu.vector_store %arg9[%c96_146, %c0_147], %161 {strides = array<i32>} : memref<216x256xf32, #tpu.memory_space<vmem>>, vector<8x256xf32>,
    %c0_148 = arith.constant 0 : index
    %c128_149 = arith.constant 128 : index
    %163 = vector.load %arg8[%c0_148, %c128_149] : memref<8x512xf32, #tpu.memory_space<vmem>>, vector<8x256xf32>
    %c104_150 = arith.constant 104 : index
    %c0_151 = arith.constant 0 : index
    %164 = vector.load %arg9[%c104_150, %c0_151] : memref<216x256xf32, #tpu.memory_space<vmem>>, vector<8x256xf32>
    tpu.vector_store %arg9[%c104_150, %c0_151], %163 {strides = array<i32>} : memref<216x256xf32, #tpu.memory_space<vmem>>, vector<8x256xf32>,
    %c0_152 = arith.constant 0 : index
    %c132_153 = arith.constant 132 : index
    %165 = vector.load %arg8[%c0_152, %c132_153] : memref<8x512xf32, #tpu.memory_space<vmem>>, vector<8x256xf32>
    %166 = arith.mulf %165, %17 : vector<8x256xf32>
    %c112_154 = arith.constant 112 : index
    %c0_155 = arith.constant 0 : index
    %167 = vector.load %arg9[%c112_154, %c0_155] : memref<216x256xf32, #tpu.memory_space<vmem>>, vector<8x256xf32>
    tpu.vector_store %arg9[%c112_154, %c0_155], %166 {strides = array<i32>} : memref<216x256xf32, #tpu.memory_space<vmem>>, vector<8x256xf32>,
    %c0_156 = arith.constant 0 : index
    %c188_157 = arith.constant 188 : index
    %168 = vector.load %arg8[%c0_156, %c188_157] : memref<8x512xf32, #tpu.memory_space<vmem>>, vector<8x256xf32>
    %169 = arith.mulf %168, %8 : vector<8x256xf32>
    %c120_158 = arith.constant 120 : index
    %c0_159 = arith.constant 0 : index
    %170 = vector.load %arg9[%c120_158, %c0_159] : memref<216x256xf32, #tpu.memory_space<vmem>>, vector<8x256xf32>
    tpu.vector_store %arg9[%c120_158, %c0_159], %169 {strides = array<i32>} : memref<216x256xf32, #tpu.memory_space<vmem>>, vector<8x256xf32>,
    %c0_160 = arith.constant 0 : index
    %c192_161 = arith.constant 192 : index
    %171 = vector.load %arg8[%c0_160, %c192_161] : memref<8x512xf32, #tpu.memory_space<vmem>>, vector<8x256xf32>
    %c128_162 = arith.constant 128 : index
    %c0_163 = arith.constant 0 : index
    %172 = vector.load %arg9[%c128_162, %c0_163] : memref<216x256xf32, #tpu.memory_space<vmem>>, vector<8x256xf32>
    tpu.vector_store %arg9[%c128_162, %c0_163], %171 {strides = array<i32>} : memref<216x256xf32, #tpu.memory_space<vmem>>, vector<8x256xf32>,
    %c0_164 = arith.constant 0 : index
    %c196_165 = arith.constant 196 : index
    %173 = vector.load %arg8[%c0_164, %c196_165] : memref<8x512xf32, #tpu.memory_space<vmem>>, vector<8x256xf32>
    %174 = arith.mulf %173, %17 : vector<8x256xf32>
    %c136_166 = arith.constant 136 : index
    %c0_167 = arith.constant 0 : index
    %175 = vector.load %arg9[%c136_166, %c0_167] : memref<216x256xf32, #tpu.memory_space<vmem>>, vector<8x256xf32>
    tpu.vector_store %arg9[%c136_166, %c0_167], %174 {strides = array<i32>} : memref<216x256xf32, #tpu.memory_space<vmem>>, vector<8x256xf32>,
    %c0_168 = arith.constant 0 : index
    %c111_169 = arith.constant 111 : index
    %176 = vector.load %arg8[%c0_168, %c111_169] : memref<8x512xf32, #tpu.memory_space<vmem>>, vector<8x256xf32>
    %177 = arith.mulf %176, %11 : vector<8x256xf32>
    %c144_170 = arith.constant 144 : index
    %c0_171 = arith.constant 0 : index
    %178 = vector.load %arg9[%c144_170, %c0_171] : memref<216x256xf32, #tpu.memory_space<vmem>>, vector<8x256xf32>
    tpu.vector_store %arg9[%c144_170, %c0_171], %177 {strides = array<i32>} : memref<216x256xf32, #tpu.memory_space<vmem>>, vector<8x256xf32>,
    %c0_172 = arith.constant 0 : index
    %c112_173 = arith.constant 112 : index
    %179 = vector.load %arg8[%c0_172, %c112_173] : memref<8x512xf32, #tpu.memory_space<vmem>>, vector<8x256xf32>
    %c152_174 = arith.constant 152 : index
    %c0_175 = arith.constant 0 : index
    %180 = vector.load %arg9[%c152_174, %c0_175] : memref<216x256xf32, #tpu.memory_space<vmem>>, vector<8x256xf32>
    tpu.vector_store %arg9[%c152_174, %c0_175], %179 {strides = array<i32>} : memref<216x256xf32, #tpu.memory_space<vmem>>, vector<8x256xf32>,
    %c0_176 = arith.constant 0 : index
    %c113_177 = arith.constant 113 : index
    %181 = vector.load %arg8[%c0_176, %c113_177] : memref<8x512xf32, #tpu.memory_space<vmem>>, vector<8x256xf32>
    %182 = arith.mulf %181, %20 : vector<8x256xf32>
    %c160_178 = arith.constant 160 : index
    %c0_179 = arith.constant 0 : index
    %183 = vector.load %arg9[%c160_178, %c0_179] : memref<216x256xf32, #tpu.memory_space<vmem>>, vector<8x256xf32>
    tpu.vector_store %arg9[%c160_178, %c0_179], %182 {strides = array<i32>} : memref<216x256xf32, #tpu.memory_space<vmem>>, vector<8x256xf32>,
    %c0_180 = arith.constant 0 : index
    %c127_181 = arith.constant 127 : index
    %184 = vector.load %arg8[%c0_180, %c127_181] : memref<8x512xf32, #tpu.memory_space<vmem>>, vector<8x256xf32>
    %185 = arith.mulf %184, %11 : vector<8x256xf32>
    %c168_182 = arith.constant 168 : index
    %c0_183 = arith.constant 0 : index
    %186 = vector.load %arg9[%c168_182, %c0_183] : memref<216x256xf32, #tpu.memory_space<vmem>>, vector<8x256xf32>
    tpu.vector_store %arg9[%c168_182, %c0_183], %185 {strides = array<i32>} : memref<216x256xf32, #tpu.memory_space<vmem>>, vector<8x256xf32>,
    %c0_184 = arith.constant 0 : index
    %c128_185 = arith.constant 128 : index
    %187 = vector.load %arg8[%c0_184, %c128_185] : memref<8x512xf32, #tpu.memory_space<vmem>>, vector<8x256xf32>
    %c176_186 = arith.constant 176 : index
    %c0_187 = arith.constant 0 : index
    %188 = vector.load %arg9[%c176_186, %c0_187] : memref<216x256xf32, #tpu.memory_space<vmem>>, vector<8x256xf32>
    tpu.vector_store %arg9[%c176_186, %c0_187], %187 {strides = array<i32>} : memref<216x256xf32, #tpu.memory_space<vmem>>, vector<8x256xf32>,
    %c0_188 = arith.constant 0 : index
    %c129_189 = arith.constant 129 : index
    %189 = vector.load %arg8[%c0_188, %c129_189] : memref<8x512xf32, #tpu.memory_space<vmem>>, vector<8x256xf32>
    %190 = arith.mulf %189, %20 : vector<8x256xf32>
    %c184_190 = arith.constant 184 : index
    %c0_191 = arith.constant 0 : index
    %191 = vector.load %arg9[%c184_190, %c0_191] : memref<216x256xf32, #tpu.memory_space<vmem>>, vector<8x256xf32>
    tpu.vector_store %arg9[%c184_190, %c0_191], %190 {strides = array<i32>} : memref<216x256xf32, #tpu.memory_space<vmem>>, vector<8x256xf32>,
    %c0_192 = arith.constant 0 : index
    %c143_193 = arith.constant 143 : index
    %192 = vector.load %arg8[%c0_192, %c143_193] : memref<8x512xf32, #tpu.memory_space<vmem>>, vector<8x256xf32>
    %193 = arith.mulf %192, %11 : vector<8x256xf32>
    %c192_194 = arith.constant 192 : index
    %c0_195 = arith.constant 0 : index
    %194 = vector.load %arg9[%c192_194, %c0_195] : memref<216x256xf32, #tpu.memory_space<vmem>>, vector<8x256xf32>
    tpu.vector_store %arg9[%c192_194, %c0_195], %193 {strides = array<i32>} : memref<216x256xf32, #tpu.memory_space<vmem>>, vector<8x256xf32>,
    %c0_196 = arith.constant 0 : index
    %c144_197 = arith.constant 144 : index
    %195 = vector.load %arg8[%c0_196, %c144_197] : memref<8x512xf32, #tpu.memory_space<vmem>>, vector<8x256xf32>
    %c200_198 = arith.constant 200 : index
    %c0_199 = arith.constant 0 : index
    %196 = vector.load %arg9[%c200_198, %c0_199] : memref<216x256xf32, #tpu.memory_space<vmem>>, vector<8x256xf32>
    tpu.vector_store %arg9[%c200_198, %c0_199], %195 {strides = array<i32>} : memref<216x256xf32, #tpu.memory_space<vmem>>, vector<8x256xf32>,
    %c0_200 = arith.constant 0 : index
    %c145_201 = arith.constant 145 : index
    %197 = vector.load %arg8[%c0_200, %c145_201] : memref<8x512xf32, #tpu.memory_space<vmem>>, vector<8x256xf32>
    %198 = arith.mulf %197, %20 : vector<8x256xf32>
    %c208_202 = arith.constant 208 : index
    %c0_203 = arith.constant 0 : index
    %199 = vector.load %arg9[%c208_202, %c0_203] : memref<216x256xf32, #tpu.memory_space<vmem>>, vector<8x256xf32>
    tpu.vector_store %arg9[%c208_202, %c0_203], %198 {strides = array<i32>} : memref<216x256xf32, #tpu.memory_space<vmem>>, vector<8x256xf32>,
    %c1_204 = arith.constant 1 : index
    %c0_205 = arith.constant 0 : index
    %c0_206 = arith.constant 0 : index
    %200 = vector.load %arg2[%c1_204, %c0_205, %c0_206] : memref<4x8x216xf32, #tpu.memory_space<vmem>>, vector<1x8x216xf32>
    %201 = vector.shape_cast %200 : vector<1x8x216xf32> to vector<8x216xf32>
    %c0_207 = arith.constant 0 : index
    %c0_208 = arith.constant 0 : index
    %202 = vector.load %arg9[%c0_207, %c0_208] : memref<216x256xf32, #tpu.memory_space<vmem>>, vector<216x256xf32>
    %cst_209 = arith.constant dense<0.000000e+00> : vector<8x256xf32>
    %203 = tpu.matmul %201, %202, %cst_209 {dimension_numbers = #tpu.dot_dimension_numbers<[1], [0], [0], [1], [0, 0, 1, 1], [], []>} : vector<8x216xf32>, vector<216x256xf32>, vector<8x256xf32> -> vector<8x256xf32>
    %c0_210 = arith.constant 0 : index
    %c2_211 = arith.constant 2 : index
    %204 = vector.load %arg3[%c0_210, %c2_211] : memref<8x8xf32, #tpu.memory_space<vmem>>, vector<8x1xf32>
    %c0_212 = arith.constant 0 : index
    %c3_213 = arith.constant 3 : index
    %205 = vector.load %arg3[%c0_212, %c3_213] : memref<8x8xf32, #tpu.memory_space<vmem>>, vector<8x1xf32>
    %cst_214 = arith.constant dense<0.000000e+00> : vector<8xf32>
    %206 = vector.multi_reduction <add>, %203, %cst_214 [1] : vector<8x256xf32> to vector<8xf32>
    %207 = vector.shape_cast %206 : vector<8xf32> to vector<8x1xf32>
    %cst_215 = arith.constant 2.560000e+02 : f32
    %208 = vector.broadcast %cst_215 : f32 to vector<8x1xf32>
    %209 = arith.divf %207, %208 : vector<8x1xf32>
    %210 = arith.mulf %203, %203 : vector<8x256xf32>
    %cst_216 = arith.constant dense<0.000000e+00> : vector<8xf32>
    %211 = vector.multi_reduction <add>, %210, %cst_216 [1] : vector<8x256xf32> to vector<8xf32>
    %212 = vector.shape_cast %211 : vector<8xf32> to vector<8x1xf32>
    %cst_217 = arith.constant 2.560000e+02 : f32
    %213 = vector.broadcast %cst_217 : f32 to vector<8x1xf32>
    %214 = arith.divf %212, %213 : vector<8x1xf32>
    %215 = arith.mulf %209, %209 : vector<8x1xf32>
    %216 = arith.subf %214, %215 : vector<8x1xf32>
    %217 = vector.broadcast %209 : vector<8x1xf32> to vector<8x256xf32>
    %218 = arith.subf %203, %217 : vector<8x256xf32>
    %cst_218 = arith.constant 9.99999974E-6 : f32
    %219 = vector.broadcast %cst_218 : f32 to vector<8x1xf32>
    %220 = arith.addf %216, %219 : vector<8x1xf32>
    %221 = math.rsqrt %220 : vector<8x1xf32>
    %222 = vector.broadcast %221 : vector<8x1xf32> to vector<8x256xf32>
    %223 = arith.mulf %218, %222 : vector<8x256xf32>
    %224 = vector.broadcast %204 : vector<8x1xf32> to vector<8x256xf32>
    %225 = arith.mulf %223, %224 : vector<8x256xf32>
    %226 = vector.broadcast %205 : vector<8x1xf32> to vector<8x256xf32>
    %227 = arith.addf %225, %226 : vector<8x256xf32>
    %228 = arith.addf %22, %227 : vector<8x256xf32>
    %cst_219 = arith.constant 0.000000e+00 : f32
    %229 = vector.broadcast %cst_219 : f32 to vector<8x256xf32>
    %230 = arith.maximumf %228, %229 : vector<8x256xf32>
    %c0_220 = arith.constant 0 : index
    %c128_221 = arith.constant 128 : index
    %231 = vector.load %arg8[%c0_220, %c128_221] : memref<8x512xf32, #tpu.memory_space<vmem>>, vector<8x256xf32>
    tpu.vector_store %arg8[%c0_220, %c128_221], %230 {strides = array<i32>} : memref<8x512xf32, #tpu.memory_space<vmem>>, vector<8x256xf32>,
    %c0_222 = arith.constant 0 : index
    %c94_223 = arith.constant 94 : index
    %232 = vector.load %arg8[%c0_222, %c94_223] : memref<8x512xf32, #tpu.memory_space<vmem>>, vector<8x256xf32>
    %233 = arith.mulf %232, %5 : vector<8x256xf32>
    %c0_224 = arith.constant 0 : index
    %c0_225 = arith.constant 0 : index
    %234 = vector.load %arg9[%c0_224, %c0_225] : memref<216x256xf32, #tpu.memory_space<vmem>>, vector<8x256xf32>
    tpu.vector_store %arg9[%c0_224, %c0_225], %233 {strides = array<i32>} : memref<216x256xf32, #tpu.memory_space<vmem>>, vector<8x256xf32>,
    %c0_226 = arith.constant 0 : index
    %c96_227 = arith.constant 96 : index
    %235 = vector.load %arg8[%c0_226, %c96_227] : memref<8x512xf32, #tpu.memory_space<vmem>>, vector<8x256xf32>
    %c8_228 = arith.constant 8 : index
    %c0_229 = arith.constant 0 : index
    %236 = vector.load %arg9[%c8_228, %c0_229] : memref<216x256xf32, #tpu.memory_space<vmem>>, vector<8x256xf32>
    tpu.vector_store %arg9[%c8_228, %c0_229], %235 {strides = array<i32>} : memref<216x256xf32, #tpu.memory_space<vmem>>, vector<8x256xf32>,
    %c0_230 = arith.constant 0 : index
    %c98_231 = arith.constant 98 : index
    %237 = vector.load %arg8[%c0_230, %c98_231] : memref<8x512xf32, #tpu.memory_space<vmem>>, vector<8x256xf32>
    %238 = arith.mulf %237, %14 : vector<8x256xf32>
    %c16_232 = arith.constant 16 : index
    %c0_233 = arith.constant 0 : index
    %239 = vector.load %arg9[%c16_232, %c0_233] : memref<216x256xf32, #tpu.memory_space<vmem>>, vector<8x256xf32>
    tpu.vector_store %arg9[%c16_232, %c0_233], %238 {strides = array<i32>} : memref<216x256xf32, #tpu.memory_space<vmem>>, vector<8x256xf32>,
    %c0_234 = arith.constant 0 : index
    %c126_235 = arith.constant 126 : index
    %240 = vector.load %arg8[%c0_234, %c126_235] : memref<8x512xf32, #tpu.memory_space<vmem>>, vector<8x256xf32>
    %241 = arith.mulf %240, %5 : vector<8x256xf32>
    %c24_236 = arith.constant 24 : index
    %c0_237 = arith.constant 0 : index
    %242 = vector.load %arg9[%c24_236, %c0_237] : memref<216x256xf32, #tpu.memory_space<vmem>>, vector<8x256xf32>
    tpu.vector_store %arg9[%c24_236, %c0_237], %241 {strides = array<i32>} : memref<216x256xf32, #tpu.memory_space<vmem>>, vector<8x256xf32>,
    %c0_238 = arith.constant 0 : index
    %c128_239 = arith.constant 128 : index
    %243 = vector.load %arg8[%c0_238, %c128_239] : memref<8x512xf32, #tpu.memory_space<vmem>>, vector<8x256xf32>
    %c32_240 = arith.constant 32 : index
    %c0_241 = arith.constant 0 : index
    %244 = vector.load %arg9[%c32_240, %c0_241] : memref<216x256xf32, #tpu.memory_space<vmem>>, vector<8x256xf32>
    tpu.vector_store %arg9[%c32_240, %c0_241], %243 {strides = array<i32>} : memref<216x256xf32, #tpu.memory_space<vmem>>, vector<8x256xf32>,
    %c0_242 = arith.constant 0 : index
    %c130_243 = arith.constant 130 : index
    %245 = vector.load %arg8[%c0_242, %c130_243] : memref<8x512xf32, #tpu.memory_space<vmem>>, vector<8x256xf32>
    %246 = arith.mulf %245, %14 : vector<8x256xf32>
    %c40_244 = arith.constant 40 : index
    %c0_245 = arith.constant 0 : index
    %247 = vector.load %arg9[%c40_244, %c0_245] : memref<216x256xf32, #tpu.memory_space<vmem>>, vector<8x256xf32>
    tpu.vector_store %arg9[%c40_244, %c0_245], %246 {strides = array<i32>} : memref<216x256xf32, #tpu.memory_space<vmem>>, vector<8x256xf32>,
    %c0_246 = arith.constant 0 : index
    %c158_247 = arith.constant 158 : index
    %248 = vector.load %arg8[%c0_246, %c158_247] : memref<8x512xf32, #tpu.memory_space<vmem>>, vector<8x256xf32>
    %249 = arith.mulf %248, %5 : vector<8x256xf32>
    %c48_248 = arith.constant 48 : index
    %c0_249 = arith.constant 0 : index
    %250 = vector.load %arg9[%c48_248, %c0_249] : memref<216x256xf32, #tpu.memory_space<vmem>>, vector<8x256xf32>
    tpu.vector_store %arg9[%c48_248, %c0_249], %249 {strides = array<i32>} : memref<216x256xf32, #tpu.memory_space<vmem>>, vector<8x256xf32>,
    %c0_250 = arith.constant 0 : index
    %c160_251 = arith.constant 160 : index
    %251 = vector.load %arg8[%c0_250, %c160_251] : memref<8x512xf32, #tpu.memory_space<vmem>>, vector<8x256xf32>
    %c56_252 = arith.constant 56 : index
    %c0_253 = arith.constant 0 : index
    %252 = vector.load %arg9[%c56_252, %c0_253] : memref<216x256xf32, #tpu.memory_space<vmem>>, vector<8x256xf32>
    tpu.vector_store %arg9[%c56_252, %c0_253], %251 {strides = array<i32>} : memref<216x256xf32, #tpu.memory_space<vmem>>, vector<8x256xf32>,
    %c0_254 = arith.constant 0 : index
    %c162_255 = arith.constant 162 : index
    %253 = vector.load %arg8[%c0_254, %c162_255] : memref<8x512xf32, #tpu.memory_space<vmem>>, vector<8x256xf32>
    %254 = arith.mulf %253, %14 : vector<8x256xf32>
    %c64_256 = arith.constant 64 : index
    %c0_257 = arith.constant 0 : index
    %255 = vector.load %arg9[%c64_256, %c0_257] : memref<216x256xf32, #tpu.memory_space<vmem>>, vector<8x256xf32>
    tpu.vector_store %arg9[%c64_256, %c0_257], %254 {strides = array<i32>} : memref<216x256xf32, #tpu.memory_space<vmem>>, vector<8x256xf32>,
    %c0_258 = arith.constant 0 : index
    %c60_259 = arith.constant 60 : index
    %256 = vector.load %arg8[%c0_258, %c60_259] : memref<8x512xf32, #tpu.memory_space<vmem>>, vector<8x256xf32>
    %257 = arith.mulf %256, %8 : vector<8x256xf32>
    %c72_260 = arith.constant 72 : index
    %c0_261 = arith.constant 0 : index
    %258 = vector.load %arg9[%c72_260, %c0_261] : memref<216x256xf32, #tpu.memory_space<vmem>>, vector<8x256xf32>
    tpu.vector_store %arg9[%c72_260, %c0_261], %257 {strides = array<i32>} : memref<216x256xf32, #tpu.memory_space<vmem>>, vector<8x256xf32>,
    %c0_262 = arith.constant 0 : index
    %c64_263 = arith.constant 64 : index
    %259 = vector.load %arg8[%c0_262, %c64_263] : memref<8x512xf32, #tpu.memory_space<vmem>>, vector<8x256xf32>
    %c80_264 = arith.constant 80 : index
    %c0_265 = arith.constant 0 : index
    %260 = vector.load %arg9[%c80_264, %c0_265] : memref<216x256xf32, #tpu.memory_space<vmem>>, vector<8x256xf32>
    tpu.vector_store %arg9[%c80_264, %c0_265], %259 {strides = array<i32>} : memref<216x256xf32, #tpu.memory_space<vmem>>, vector<8x256xf32>,
    %c0_266 = arith.constant 0 : index
    %c68_267 = arith.constant 68 : index
    %261 = vector.load %arg8[%c0_266, %c68_267] : memref<8x512xf32, #tpu.memory_space<vmem>>, vector<8x256xf32>
    %262 = arith.mulf %261, %17 : vector<8x256xf32>
    %c88_268 = arith.constant 88 : index
    %c0_269 = arith.constant 0 : index
    %263 = vector.load %arg9[%c88_268, %c0_269] : memref<216x256xf32, #tpu.memory_space<vmem>>, vector<8x256xf32>
    tpu.vector_store %arg9[%c88_268, %c0_269], %262 {strides = array<i32>} : memref<216x256xf32, #tpu.memory_space<vmem>>, vector<8x256xf32>,
    %c0_270 = arith.constant 0 : index
    %c124_271 = arith.constant 124 : index
    %264 = vector.load %arg8[%c0_270, %c124_271] : memref<8x512xf32, #tpu.memory_space<vmem>>, vector<8x256xf32>
    %265 = arith.mulf %264, %8 : vector<8x256xf32>
    %c96_272 = arith.constant 96 : index
    %c0_273 = arith.constant 0 : index
    %266 = vector.load %arg9[%c96_272, %c0_273] : memref<216x256xf32, #tpu.memory_space<vmem>>, vector<8x256xf32>
    tpu.vector_store %arg9[%c96_272, %c0_273], %265 {strides = array<i32>} : memref<216x256xf32, #tpu.memory_space<vmem>>, vector<8x256xf32>,
    %c0_274 = arith.constant 0 : index
    %c128_275 = arith.constant 128 : index
    %267 = vector.load %arg8[%c0_274, %c128_275] : memref<8x512xf32, #tpu.memory_space<vmem>>, vector<8x256xf32>
    %c104_276 = arith.constant 104 : index
    %c0_277 = arith.constant 0 : index
    %268 = vector.load %arg9[%c104_276, %c0_277] : memref<216x256xf32, #tpu.memory_space<vmem>>, vector<8x256xf32>
    tpu.vector_store %arg9[%c104_276, %c0_277], %267 {strides = array<i32>} : memref<216x256xf32, #tpu.memory_space<vmem>>, vector<8x256xf32>,
    %c0_278 = arith.constant 0 : index
    %c132_279 = arith.constant 132 : index
    %269 = vector.load %arg8[%c0_278, %c132_279] : memref<8x512xf32, #tpu.memory_space<vmem>>, vector<8x256xf32>
    %270 = arith.mulf %269, %17 : vector<8x256xf32>
    %c112_280 = arith.constant 112 : index
    %c0_281 = arith.constant 0 : index
    %271 = vector.load %arg9[%c112_280, %c0_281] : memref<216x256xf32, #tpu.memory_space<vmem>>, vector<8x256xf32>
    tpu.vector_store %arg9[%c112_280, %c0_281], %270 {strides = array<i32>} : memref<216x256xf32, #tpu.memory_space<vmem>>, vector<8x256xf32>,
    %c0_282 = arith.constant 0 : index
    %c188_283 = arith.constant 188 : index
    %272 = vector.load %arg8[%c0_282, %c188_283] : memref<8x512xf32, #tpu.memory_space<vmem>>, vector<8x256xf32>
    %273 = arith.mulf %272, %8 : vector<8x256xf32>
    %c120_284 = arith.constant 120 : index
    %c0_285 = arith.constant 0 : index
    %274 = vector.load %arg9[%c120_284, %c0_285] : memref<216x256xf32, #tpu.memory_space<vmem>>, vector<8x256xf32>
    tpu.vector_store %arg9[%c120_284, %c0_285], %273 {strides = array<i32>} : memref<216x256xf32, #tpu.memory_space<vmem>>, vector<8x256xf32>,
    %c0_286 = arith.constant 0 : index
    %c192_287 = arith.constant 192 : index
    %275 = vector.load %arg8[%c0_286, %c192_287] : memref<8x512xf32, #tpu.memory_space<vmem>>, vector<8x256xf32>
    %c128_288 = arith.constant 128 : index
    %c0_289 = arith.constant 0 : index
    %276 = vector.load %arg9[%c128_288, %c0_289] : memref<216x256xf32, #tpu.memory_space<vmem>>, vector<8x256xf32>
    tpu.vector_store %arg9[%c128_288, %c0_289], %275 {strides = array<i32>} : memref<216x256xf32, #tpu.memory_space<vmem>>, vector<8x256xf32>,
    %c0_290 = arith.constant 0 : index
    %c196_291 = arith.constant 196 : index
    %277 = vector.load %arg8[%c0_290, %c196_291] : memref<8x512xf32, #tpu.memory_space<vmem>>, vector<8x256xf32>
    %278 = arith.mulf %277, %17 : vector<8x256xf32>
    %c136_292 = arith.constant 136 : index
    %c0_293 = arith.constant 0 : index
    %279 = vector.load %arg9[%c136_292, %c0_293] : memref<216x256xf32, #tpu.memory_space<vmem>>, vector<8x256xf32>
    tpu.vector_store %arg9[%c136_292, %c0_293], %278 {strides = array<i32>} : memref<216x256xf32, #tpu.memory_space<vmem>>, vector<8x256xf32>,
    %c0_294 = arith.constant 0 : index
    %c111_295 = arith.constant 111 : index
    %280 = vector.load %arg8[%c0_294, %c111_295] : memref<8x512xf32, #tpu.memory_space<vmem>>, vector<8x256xf32>
    %281 = arith.mulf %280, %11 : vector<8x256xf32>
    %c144_296 = arith.constant 144 : index
    %c0_297 = arith.constant 0 : index
    %282 = vector.load %arg9[%c144_296, %c0_297] : memref<216x256xf32, #tpu.memory_space<vmem>>, vector<8x256xf32>
    tpu.vector_store %arg9[%c144_296, %c0_297], %281 {strides = array<i32>} : memref<216x256xf32, #tpu.memory_space<vmem>>, vector<8x256xf32>,
    %c0_298 = arith.constant 0 : index
    %c112_299 = arith.constant 112 : index
    %283 = vector.load %arg8[%c0_298, %c112_299] : memref<8x512xf32, #tpu.memory_space<vmem>>, vector<8x256xf32>
    %c152_300 = arith.constant 152 : index
    %c0_301 = arith.constant 0 : index
    %284 = vector.load %arg9[%c152_300, %c0_301] : memref<216x256xf32, #tpu.memory_space<vmem>>, vector<8x256xf32>
    tpu.vector_store %arg9[%c152_300, %c0_301], %283 {strides = array<i32>} : memref<216x256xf32, #tpu.memory_space<vmem>>, vector<8x256xf32>,
    %c0_302 = arith.constant 0 : index
    %c113_303 = arith.constant 113 : index
    %285 = vector.load %arg8[%c0_302, %c113_303] : memref<8x512xf32, #tpu.memory_space<vmem>>, vector<8x256xf32>
    %286 = arith.mulf %285, %20 : vector<8x256xf32>
    %c160_304 = arith.constant 160 : index
    %c0_305 = arith.constant 0 : index
    %287 = vector.load %arg9[%c160_304, %c0_305] : memref<216x256xf32, #tpu.memory_space<vmem>>, vector<8x256xf32>
    tpu.vector_store %arg9[%c160_304, %c0_305], %286 {strides = array<i32>} : memref<216x256xf32, #tpu.memory_space<vmem>>, vector<8x256xf32>,
    %c0_306 = arith.constant 0 : index
    %c127_307 = arith.constant 127 : index
    %288 = vector.load %arg8[%c0_306, %c127_307] : memref<8x512xf32, #tpu.memory_space<vmem>>, vector<8x256xf32>
    %289 = arith.mulf %288, %11 : vector<8x256xf32>
    %c168_308 = arith.constant 168 : index
    %c0_309 = arith.constant 0 : index
    %290 = vector.load %arg9[%c168_308, %c0_309] : memref<216x256xf32, #tpu.memory_space<vmem>>, vector<8x256xf32>
    tpu.vector_store %arg9[%c168_308, %c0_309], %289 {strides = array<i32>} : memref<216x256xf32, #tpu.memory_space<vmem>>, vector<8x256xf32>,
    %c0_310 = arith.constant 0 : index
    %c128_311 = arith.constant 128 : index
    %291 = vector.load %arg8[%c0_310, %c128_311] : memref<8x512xf32, #tpu.memory_space<vmem>>, vector<8x256xf32>
    %c176_312 = arith.constant 176 : index
    %c0_313 = arith.constant 0 : index
    %292 = vector.load %arg9[%c176_312, %c0_313] : memref<216x256xf32, #tpu.memory_space<vmem>>, vector<8x256xf32>
    tpu.vector_store %arg9[%c176_312, %c0_313], %291 {strides = array<i32>} : memref<216x256xf32, #tpu.memory_space<vmem>>, vector<8x256xf32>,
    %c0_314 = arith.constant 0 : index
    %c129_315 = arith.constant 129 : index
    %293 = vector.load %arg8[%c0_314, %c129_315] : memref<8x512xf32, #tpu.memory_space<vmem>>, vector<8x256xf32>
    %294 = arith.mulf %293, %20 : vector<8x256xf32>
    %c184_316 = arith.constant 184 : index
    %c0_317 = arith.constant 0 : index
    %295 = vector.load %arg9[%c184_316, %c0_317] : memref<216x256xf32, #tpu.memory_space<vmem>>, vector<8x256xf32>
    tpu.vector_store %arg9[%c184_316, %c0_317], %294 {strides = array<i32>} : memref<216x256xf32, #tpu.memory_space<vmem>>, vector<8x256xf32>,
    %c0_318 = arith.constant 0 : index
    %c143_319 = arith.constant 143 : index
    %296 = vector.load %arg8[%c0_318, %c143_319] : memref<8x512xf32, #tpu.memory_space<vmem>>, vector<8x256xf32>
    %297 = arith.mulf %296, %11 : vector<8x256xf32>
    %c192_320 = arith.constant 192 : index
    %c0_321 = arith.constant 0 : index
    %298 = vector.load %arg9[%c192_320, %c0_321] : memref<216x256xf32, #tpu.memory_space<vmem>>, vector<8x256xf32>
    tpu.vector_store %arg9[%c192_320, %c0_321], %297 {strides = array<i32>} : memref<216x256xf32, #tpu.memory_space<vmem>>, vector<8x256xf32>,
    %c0_322 = arith.constant 0 : index
    %c144_323 = arith.constant 144 : index
    %299 = vector.load %arg8[%c0_322, %c144_323] : memref<8x512xf32, #tpu.memory_space<vmem>>, vector<8x256xf32>
    %c200_324 = arith.constant 200 : index
    %c0_325 = arith.constant 0 : index
    %300 = vector.load %arg9[%c200_324, %c0_325] : memref<216x256xf32, #tpu.memory_space<vmem>>, vector<8x256xf32>
    tpu.vector_store %arg9[%c200_324, %c0_325], %299 {strides = array<i32>} : memref<216x256xf32, #tpu.memory_space<vmem>>, vector<8x256xf32>,
    %c0_326 = arith.constant 0 : index
    %c145_327 = arith.constant 145 : index
    %301 = vector.load %arg8[%c0_326, %c145_327] : memref<8x512xf32, #tpu.memory_space<vmem>>, vector<8x256xf32>
    %302 = arith.mulf %301, %20 : vector<8x256xf32>
    %c208_328 = arith.constant 208 : index
    %c0_329 = arith.constant 0 : index
    %303 = vector.load %arg9[%c208_328, %c0_329] : memref<216x256xf32, #tpu.memory_space<vmem>>, vector<8x256xf32>
    tpu.vector_store %arg9[%c208_328, %c0_329], %302 {strides = array<i32>} : memref<216x256xf32, #tpu.memory_space<vmem>>, vector<8x256xf32>,
    %c2_330 = arith.constant 2 : index
    %c0_331 = arith.constant 0 : index
    %c0_332 = arith.constant 0 : index
    %304 = vector.load %arg2[%c2_330, %c0_331, %c0_332] : memref<4x8x216xf32, #tpu.memory_space<vmem>>, vector<1x8x216xf32>
    %305 = vector.shape_cast %304 : vector<1x8x216xf32> to vector<8x216xf32>
    %c0_333 = arith.constant 0 : index
    %c0_334 = arith.constant 0 : index
    %306 = vector.load %arg9[%c0_333, %c0_334] : memref<216x256xf32, #tpu.memory_space<vmem>>, vector<216x256xf32>
    %cst_335 = arith.constant dense<0.000000e+00> : vector<8x256xf32>
    %307 = tpu.matmul %305, %306, %cst_335 {dimension_numbers = #tpu.dot_dimension_numbers<[1], [0], [0], [1], [0, 0, 1, 1], [], []>} : vector<8x216xf32>, vector<216x256xf32>, vector<8x256xf32> -> vector<8x256xf32>
    %c0_336 = arith.constant 0 : index
    %c4_337 = arith.constant 4 : index
    %308 = vector.load %arg3[%c0_336, %c4_337] : memref<8x8xf32, #tpu.memory_space<vmem>>, vector<8x1xf32>
    %c0_338 = arith.constant 0 : index
    %c5_339 = arith.constant 5 : index
    %309 = vector.load %arg3[%c0_338, %c5_339] : memref<8x8xf32, #tpu.memory_space<vmem>>, vector<8x1xf32>
    %cst_340 = arith.constant dense<0.000000e+00> : vector<8xf32>
    %310 = vector.multi_reduction <add>, %307, %cst_340 [1] : vector<8x256xf32> to vector<8xf32>
    %311 = vector.shape_cast %310 : vector<8xf32> to vector<8x1xf32>
    %cst_341 = arith.constant 2.560000e+02 : f32
    %312 = vector.broadcast %cst_341 : f32 to vector<8x1xf32>
    %313 = arith.divf %311, %312 : vector<8x1xf32>
    %314 = arith.mulf %307, %307 : vector<8x256xf32>
    %cst_342 = arith.constant dense<0.000000e+00> : vector<8xf32>
    %315 = vector.multi_reduction <add>, %314, %cst_342 [1] : vector<8x256xf32> to vector<8xf32>
    %316 = vector.shape_cast %315 : vector<8xf32> to vector<8x1xf32>
    %cst_343 = arith.constant 2.560000e+02 : f32
    %317 = vector.broadcast %cst_343 : f32 to vector<8x1xf32>
    %318 = arith.divf %316, %317 : vector<8x1xf32>
    %319 = arith.mulf %313, %313 : vector<8x1xf32>
    %320 = arith.subf %318, %319 : vector<8x1xf32>
    %321 = vector.broadcast %313 : vector<8x1xf32> to vector<8x256xf32>
    %322 = arith.subf %307, %321 : vector<8x256xf32>
    %cst_344 = arith.constant 9.99999974E-6 : f32
    %323 = vector.broadcast %cst_344 : f32 to vector<8x1xf32>
    %324 = arith.addf %320, %323 : vector<8x1xf32>
    %325 = math.rsqrt %324 : vector<8x1xf32>
    %326 = vector.broadcast %325 : vector<8x1xf32> to vector<8x256xf32>
    %327 = arith.mulf %322, %326 : vector<8x256xf32>
    %328 = vector.broadcast %308 : vector<8x1xf32> to vector<8x256xf32>
    %329 = arith.mulf %327, %328 : vector<8x256xf32>
    %330 = vector.broadcast %309 : vector<8x1xf32> to vector<8x256xf32>
    %331 = arith.addf %329, %330 : vector<8x256xf32>
    %cst_345 = arith.constant 0.000000e+00 : f32
    %332 = vector.broadcast %cst_345 : f32 to vector<8x256xf32>
    %333 = arith.maximumf %331, %332 : vector<8x256xf32>
    %334 = arith.addf %333, %230 : vector<8x256xf32>
    %c0_346 = arith.constant 0 : index
    %c128_347 = arith.constant 128 : index
    %335 = vector.load %arg8[%c0_346, %c128_347] : memref<8x512xf32, #tpu.memory_space<vmem>>, vector<8x256xf32>
    tpu.vector_store %arg8[%c0_346, %c128_347], %334 {strides = array<i32>} : memref<8x512xf32, #tpu.memory_space<vmem>>, vector<8x256xf32>,
    %c0_348 = arith.constant 0 : index
    %c94_349 = arith.constant 94 : index
    %336 = vector.load %arg8[%c0_348, %c94_349] : memref<8x512xf32, #tpu.memory_space<vmem>>, vector<8x256xf32>
    %337 = arith.mulf %336, %5 : vector<8x256xf32>
    %c0_350 = arith.constant 0 : index
    %c0_351 = arith.constant 0 : index
    %338 = vector.load %arg9[%c0_350, %c0_351] : memref<216x256xf32, #tpu.memory_space<vmem>>, vector<8x256xf32>
    tpu.vector_store %arg9[%c0_350, %c0_351], %337 {strides = array<i32>} : memref<216x256xf32, #tpu.memory_space<vmem>>, vector<8x256xf32>,
    %c0_352 = arith.constant 0 : index
    %c96_353 = arith.constant 96 : index
    %339 = vector.load %arg8[%c0_352, %c96_353] : memref<8x512xf32, #tpu.memory_space<vmem>>, vector<8x256xf32>
    %c8_354 = arith.constant 8 : index
    %c0_355 = arith.constant 0 : index
    %340 = vector.load %arg9[%c8_354, %c0_355] : memref<216x256xf32, #tpu.memory_space<vmem>>, vector<8x256xf32>
    tpu.vector_store %arg9[%c8_354, %c0_355], %339 {strides = array<i32>} : memref<216x256xf32, #tpu.memory_space<vmem>>, vector<8x256xf32>,
    %c0_356 = arith.constant 0 : index
    %c98_357 = arith.constant 98 : index
    %341 = vector.load %arg8[%c0_356, %c98_357] : memref<8x512xf32, #tpu.memory_space<vmem>>, vector<8x256xf32>
    %342 = arith.mulf %341, %14 : vector<8x256xf32>
    %c16_358 = arith.constant 16 : index
    %c0_359 = arith.constant 0 : index
    %343 = vector.load %arg9[%c16_358, %c0_359] : memref<216x256xf32, #tpu.memory_space<vmem>>, vector<8x256xf32>
    tpu.vector_store %arg9[%c16_358, %c0_359], %342 {strides = array<i32>} : memref<216x256xf32, #tpu.memory_space<vmem>>, vector<8x256xf32>,
    %c0_360 = arith.constant 0 : index
    %c126_361 = arith.constant 126 : index
    %344 = vector.load %arg8[%c0_360, %c126_361] : memref<8x512xf32, #tpu.memory_space<vmem>>, vector<8x256xf32>
    %345 = arith.mulf %344, %5 : vector<8x256xf32>
    %c24_362 = arith.constant 24 : index
    %c0_363 = arith.constant 0 : index
    %346 = vector.load %arg9[%c24_362, %c0_363] : memref<216x256xf32, #tpu.memory_space<vmem>>, vector<8x256xf32>
    tpu.vector_store %arg9[%c24_362, %c0_363], %345 {strides = array<i32>} : memref<216x256xf32, #tpu.memory_space<vmem>>, vector<8x256xf32>,
    %c0_364 = arith.constant 0 : index
    %c128_365 = arith.constant 128 : index
    %347 = vector.load %arg8[%c0_364, %c128_365] : memref<8x512xf32, #tpu.memory_space<vmem>>, vector<8x256xf32>
    %c32_366 = arith.constant 32 : index
    %c0_367 = arith.constant 0 : index
    %348 = vector.load %arg9[%c32_366, %c0_367] : memref<216x256xf32, #tpu.memory_space<vmem>>, vector<8x256xf32>
    tpu.vector_store %arg9[%c32_366, %c0_367], %347 {strides = array<i32>} : memref<216x256xf32, #tpu.memory_space<vmem>>, vector<8x256xf32>,
    %c0_368 = arith.constant 0 : index
    %c130_369 = arith.constant 130 : index
    %349 = vector.load %arg8[%c0_368, %c130_369] : memref<8x512xf32, #tpu.memory_space<vmem>>, vector<8x256xf32>
    %350 = arith.mulf %349, %14 : vector<8x256xf32>
    %c40_370 = arith.constant 40 : index
    %c0_371 = arith.constant 0 : index
    %351 = vector.load %arg9[%c40_370, %c0_371] : memref<216x256xf32, #tpu.memory_space<vmem>>, vector<8x256xf32>
    tpu.vector_store %arg9[%c40_370, %c0_371], %350 {strides = array<i32>} : memref<216x256xf32, #tpu.memory_space<vmem>>, vector<8x256xf32>,
    %c0_372 = arith.constant 0 : index
    %c158_373 = arith.constant 158 : index
    %352 = vector.load %arg8[%c0_372, %c158_373] : memref<8x512xf32, #tpu.memory_space<vmem>>, vector<8x256xf32>
    %353 = arith.mulf %352, %5 : vector<8x256xf32>
    %c48_374 = arith.constant 48 : index
    %c0_375 = arith.constant 0 : index
    %354 = vector.load %arg9[%c48_374, %c0_375] : memref<216x256xf32, #tpu.memory_space<vmem>>, vector<8x256xf32>
    tpu.vector_store %arg9[%c48_374, %c0_375], %353 {strides = array<i32>} : memref<216x256xf32, #tpu.memory_space<vmem>>, vector<8x256xf32>,
    %c0_376 = arith.constant 0 : index
    %c160_377 = arith.constant 160 : index
    %355 = vector.load %arg8[%c0_376, %c160_377] : memref<8x512xf32, #tpu.memory_space<vmem>>, vector<8x256xf32>
    %c56_378 = arith.constant 56 : index
    %c0_379 = arith.constant 0 : index
    %356 = vector.load %arg9[%c56_378, %c0_379] : memref<216x256xf32, #tpu.memory_space<vmem>>, vector<8x256xf32>
    tpu.vector_store %arg9[%c56_378, %c0_379], %355 {strides = array<i32>} : memref<216x256xf32, #tpu.memory_space<vmem>>, vector<8x256xf32>,
    %c0_380 = arith.constant 0 : index
    %c162_381 = arith.constant 162 : index
    %357 = vector.load %arg8[%c0_380, %c162_381] : memref<8x512xf32, #tpu.memory_space<vmem>>, vector<8x256xf32>
    %358 = arith.mulf %357, %14 : vector<8x256xf32>
    %c64_382 = arith.constant 64 : index
    %c0_383 = arith.constant 0 : index
    %359 = vector.load %arg9[%c64_382, %c0_383] : memref<216x256xf32, #tpu.memory_space<vmem>>, vector<8x256xf32>
    tpu.vector_store %arg9[%c64_382, %c0_383], %358 {strides = array<i32>} : memref<216x256xf32, #tpu.memory_space<vmem>>, vector<8x256xf32>,
    %c0_384 = arith.constant 0 : index
    %c60_385 = arith.constant 60 : index
    %360 = vector.load %arg8[%c0_384, %c60_385] : memref<8x512xf32, #tpu.memory_space<vmem>>, vector<8x256xf32>
    %361 = arith.mulf %360, %8 : vector<8x256xf32>
    %c72_386 = arith.constant 72 : index
    %c0_387 = arith.constant 0 : index
    %362 = vector.load %arg9[%c72_386, %c0_387] : memref<216x256xf32, #tpu.memory_space<vmem>>, vector<8x256xf32>
    tpu.vector_store %arg9[%c72_386, %c0_387], %361 {strides = array<i32>} : memref<216x256xf32, #tpu.memory_space<vmem>>, vector<8x256xf32>,
    %c0_388 = arith.constant 0 : index
    %c64_389 = arith.constant 64 : index
    %363 = vector.load %arg8[%c0_388, %c64_389] : memref<8x512xf32, #tpu.memory_space<vmem>>, vector<8x256xf32>
    %c80_390 = arith.constant 80 : index
    %c0_391 = arith.constant 0 : index
    %364 = vector.load %arg9[%c80_390, %c0_391] : memref<216x256xf32, #tpu.memory_space<vmem>>, vector<8x256xf32>
    tpu.vector_store %arg9[%c80_390, %c0_391], %363 {strides = array<i32>} : memref<216x256xf32, #tpu.memory_space<vmem>>, vector<8x256xf32>,
    %c0_392 = arith.constant 0 : index
    %c68_393 = arith.constant 68 : index
    %365 = vector.load %arg8[%c0_392, %c68_393] : memref<8x512xf32, #tpu.memory_space<vmem>>, vector<8x256xf32>
    %366 = arith.mulf %365, %17 : vector<8x256xf32>
    %c88_394 = arith.constant 88 : index
    %c0_395 = arith.constant 0 : index
    %367 = vector.load %arg9[%c88_394, %c0_395] : memref<216x256xf32, #tpu.memory_space<vmem>>, vector<8x256xf32>
    tpu.vector_store %arg9[%c88_394, %c0_395], %366 {strides = array<i32>} : memref<216x256xf32, #tpu.memory_space<vmem>>, vector<8x256xf32>,
    %c0_396 = arith.constant 0 : index
    %c124_397 = arith.constant 124 : index
    %368 = vector.load %arg8[%c0_396, %c124_397] : memref<8x512xf32, #tpu.memory_space<vmem>>, vector<8x256xf32>
    %369 = arith.mulf %368, %8 : vector<8x256xf32>
    %c96_398 = arith.constant 96 : index
    %c0_399 = arith.constant 0 : index
    %370 = vector.load %arg9[%c96_398, %c0_399] : memref<216x256xf32, #tpu.memory_space<vmem>>, vector<8x256xf32>
    tpu.vector_store %arg9[%c96_398, %c0_399], %369 {strides = array<i32>} : memref<216x256xf32, #tpu.memory_space<vmem>>, vector<8x256xf32>,
    %c0_400 = arith.constant 0 : index
    %c128_401 = arith.constant 128 : index
    %371 = vector.load %arg8[%c0_400, %c128_401] : memref<8x512xf32, #tpu.memory_space<vmem>>, vector<8x256xf32>
    %c104_402 = arith.constant 104 : index
    %c0_403 = arith.constant 0 : index
    %372 = vector.load %arg9[%c104_402, %c0_403] : memref<216x256xf32, #tpu.memory_space<vmem>>, vector<8x256xf32>
    tpu.vector_store %arg9[%c104_402, %c0_403], %371 {strides = array<i32>} : memref<216x256xf32, #tpu.memory_space<vmem>>, vector<8x256xf32>,
    %c0_404 = arith.constant 0 : index
    %c132_405 = arith.constant 132 : index
    %373 = vector.load %arg8[%c0_404, %c132_405] : memref<8x512xf32, #tpu.memory_space<vmem>>, vector<8x256xf32>
    %374 = arith.mulf %373, %17 : vector<8x256xf32>
    %c112_406 = arith.constant 112 : index
    %c0_407 = arith.constant 0 : index
    %375 = vector.load %arg9[%c112_406, %c0_407] : memref<216x256xf32, #tpu.memory_space<vmem>>, vector<8x256xf32>
    tpu.vector_store %arg9[%c112_406, %c0_407], %374 {strides = array<i32>} : memref<216x256xf32, #tpu.memory_space<vmem>>, vector<8x256xf32>,
    %c0_408 = arith.constant 0 : index
    %c188_409 = arith.constant 188 : index
    %376 = vector.load %arg8[%c0_408, %c188_409] : memref<8x512xf32, #tpu.memory_space<vmem>>, vector<8x256xf32>
    %377 = arith.mulf %376, %8 : vector<8x256xf32>
    %c120_410 = arith.constant 120 : index
    %c0_411 = arith.constant 0 : index
    %378 = vector.load %arg9[%c120_410, %c0_411] : memref<216x256xf32, #tpu.memory_space<vmem>>, vector<8x256xf32>
    tpu.vector_store %arg9[%c120_410, %c0_411], %377 {strides = array<i32>} : memref<216x256xf32, #tpu.memory_space<vmem>>, vector<8x256xf32>,
    %c0_412 = arith.constant 0 : index
    %c192_413 = arith.constant 192 : index
    %379 = vector.load %arg8[%c0_412, %c192_413] : memref<8x512xf32, #tpu.memory_space<vmem>>, vector<8x256xf32>
    %c128_414 = arith.constant 128 : index
    %c0_415 = arith.constant 0 : index
    %380 = vector.load %arg9[%c128_414, %c0_415] : memref<216x256xf32, #tpu.memory_space<vmem>>, vector<8x256xf32>
    tpu.vector_store %arg9[%c128_414, %c0_415], %379 {strides = array<i32>} : memref<216x256xf32, #tpu.memory_space<vmem>>, vector<8x256xf32>,
    %c0_416 = arith.constant 0 : index
    %c196_417 = arith.constant 196 : index
    %381 = vector.load %arg8[%c0_416, %c196_417] : memref<8x512xf32, #tpu.memory_space<vmem>>, vector<8x256xf32>
    %382 = arith.mulf %381, %17 : vector<8x256xf32>
    %c136_418 = arith.constant 136 : index
    %c0_419 = arith.constant 0 : index
    %383 = vector.load %arg9[%c136_418, %c0_419] : memref<216x256xf32, #tpu.memory_space<vmem>>, vector<8x256xf32>
    tpu.vector_store %arg9[%c136_418, %c0_419], %382 {strides = array<i32>} : memref<216x256xf32, #tpu.memory_space<vmem>>, vector<8x256xf32>,
    %c0_420 = arith.constant 0 : index
    %c111_421 = arith.constant 111 : index
    %384 = vector.load %arg8[%c0_420, %c111_421] : memref<8x512xf32, #tpu.memory_space<vmem>>, vector<8x256xf32>
    %385 = arith.mulf %384, %11 : vector<8x256xf32>
    %c144_422 = arith.constant 144 : index
    %c0_423 = arith.constant 0 : index
    %386 = vector.load %arg9[%c144_422, %c0_423] : memref<216x256xf32, #tpu.memory_space<vmem>>, vector<8x256xf32>
    tpu.vector_store %arg9[%c144_422, %c0_423], %385 {strides = array<i32>} : memref<216x256xf32, #tpu.memory_space<vmem>>, vector<8x256xf32>,
    %c0_424 = arith.constant 0 : index
    %c112_425 = arith.constant 112 : index
    %387 = vector.load %arg8[%c0_424, %c112_425] : memref<8x512xf32, #tpu.memory_space<vmem>>, vector<8x256xf32>
    %c152_426 = arith.constant 152 : index
    %c0_427 = arith.constant 0 : index
    %388 = vector.load %arg9[%c152_426, %c0_427] : memref<216x256xf32, #tpu.memory_space<vmem>>, vector<8x256xf32>
    tpu.vector_store %arg9[%c152_426, %c0_427], %387 {strides = array<i32>} : memref<216x256xf32, #tpu.memory_space<vmem>>, vector<8x256xf32>,
    %c0_428 = arith.constant 0 : index
    %c113_429 = arith.constant 113 : index
    %389 = vector.load %arg8[%c0_428, %c113_429] : memref<8x512xf32, #tpu.memory_space<vmem>>, vector<8x256xf32>
    %390 = arith.mulf %389, %20 : vector<8x256xf32>
    %c160_430 = arith.constant 160 : index
    %c0_431 = arith.constant 0 : index
    %391 = vector.load %arg9[%c160_430, %c0_431] : memref<216x256xf32, #tpu.memory_space<vmem>>, vector<8x256xf32>
    tpu.vector_store %arg9[%c160_430, %c0_431], %390 {strides = array<i32>} : memref<216x256xf32, #tpu.memory_space<vmem>>, vector<8x256xf32>,
    %c0_432 = arith.constant 0 : index
    %c127_433 = arith.constant 127 : index
    %392 = vector.load %arg8[%c0_432, %c127_433] : memref<8x512xf32, #tpu.memory_space<vmem>>, vector<8x256xf32>
    %393 = arith.mulf %392, %11 : vector<8x256xf32>
    %c168_434 = arith.constant 168 : index
    %c0_435 = arith.constant 0 : index
    %394 = vector.load %arg9[%c168_434, %c0_435] : memref<216x256xf32, #tpu.memory_space<vmem>>, vector<8x256xf32>
    tpu.vector_store %arg9[%c168_434, %c0_435], %393 {strides = array<i32>} : memref<216x256xf32, #tpu.memory_space<vmem>>, vector<8x256xf32>,
    %c0_436 = arith.constant 0 : index
    %c128_437 = arith.constant 128 : index
    %395 = vector.load %arg8[%c0_436, %c128_437] : memref<8x512xf32, #tpu.memory_space<vmem>>, vector<8x256xf32>
    %c176_438 = arith.constant 176 : index
    %c0_439 = arith.constant 0 : index
    %396 = vector.load %arg9[%c176_438, %c0_439] : memref<216x256xf32, #tpu.memory_space<vmem>>, vector<8x256xf32>
    tpu.vector_store %arg9[%c176_438, %c0_439], %395 {strides = array<i32>} : memref<216x256xf32, #tpu.memory_space<vmem>>, vector<8x256xf32>,
    %c0_440 = arith.constant 0 : index
    %c129_441 = arith.constant 129 : index
    %397 = vector.load %arg8[%c0_440, %c129_441] : memref<8x512xf32, #tpu.memory_space<vmem>>, vector<8x256xf32>
    %398 = arith.mulf %397, %20 : vector<8x256xf32>
    %c184_442 = arith.constant 184 : index
    %c0_443 = arith.constant 0 : index
    %399 = vector.load %arg9[%c184_442, %c0_443] : memref<216x256xf32, #tpu.memory_space<vmem>>, vector<8x256xf32>
    tpu.vector_store %arg9[%c184_442, %c0_443], %398 {strides = array<i32>} : memref<216x256xf32, #tpu.memory_space<vmem>>, vector<8x256xf32>,
    %c0_444 = arith.constant 0 : index
    %c143_445 = arith.constant 143 : index
    %400 = vector.load %arg8[%c0_444, %c143_445] : memref<8x512xf32, #tpu.memory_space<vmem>>, vector<8x256xf32>
    %401 = arith.mulf %400, %11 : vector<8x256xf32>
    %c192_446 = arith.constant 192 : index
    %c0_447 = arith.constant 0 : index
    %402 = vector.load %arg9[%c192_446, %c0_447] : memref<216x256xf32, #tpu.memory_space<vmem>>, vector<8x256xf32>
    tpu.vector_store %arg9[%c192_446, %c0_447], %401 {strides = array<i32>} : memref<216x256xf32, #tpu.memory_space<vmem>>, vector<8x256xf32>,
    %c0_448 = arith.constant 0 : index
    %c144_449 = arith.constant 144 : index
    %403 = vector.load %arg8[%c0_448, %c144_449] : memref<8x512xf32, #tpu.memory_space<vmem>>, vector<8x256xf32>
    %c200_450 = arith.constant 200 : index
    %c0_451 = arith.constant 0 : index
    %404 = vector.load %arg9[%c200_450, %c0_451] : memref<216x256xf32, #tpu.memory_space<vmem>>, vector<8x256xf32>
    tpu.vector_store %arg9[%c200_450, %c0_451], %403 {strides = array<i32>} : memref<216x256xf32, #tpu.memory_space<vmem>>, vector<8x256xf32>,
    %c0_452 = arith.constant 0 : index
    %c145_453 = arith.constant 145 : index
    %405 = vector.load %arg8[%c0_452, %c145_453] : memref<8x512xf32, #tpu.memory_space<vmem>>, vector<8x256xf32>
    %406 = arith.mulf %405, %20 : vector<8x256xf32>
    %c208_454 = arith.constant 208 : index
    %c0_455 = arith.constant 0 : index
    %407 = vector.load %arg9[%c208_454, %c0_455] : memref<216x256xf32, #tpu.memory_space<vmem>>, vector<8x256xf32>
    tpu.vector_store %arg9[%c208_454, %c0_455], %406 {strides = array<i32>} : memref<216x256xf32, #tpu.memory_space<vmem>>, vector<8x256xf32>,
    %c3_456 = arith.constant 3 : index
    %c0_457 = arith.constant 0 : index
    %c0_458 = arith.constant 0 : index
    %408 = vector.load %arg2[%c3_456, %c0_457, %c0_458] : memref<4x8x216xf32, #tpu.memory_space<vmem>>, vector<1x8x216xf32>
    %409 = vector.shape_cast %408 : vector<1x8x216xf32> to vector<8x216xf32>
    %c0_459 = arith.constant 0 : index
    %c0_460 = arith.constant 0 : index
    %410 = vector.load %arg9[%c0_459, %c0_460] : memref<216x256xf32, #tpu.memory_space<vmem>>, vector<216x256xf32>
    %cst_461 = arith.constant dense<0.000000e+00> : vector<8x256xf32>
    %411 = tpu.matmul %409, %410, %cst_461 {dimension_numbers = #tpu.dot_dimension_numbers<[1], [0], [0], [1], [0, 0, 1, 1], [], []>} : vector<8x216xf32>, vector<216x256xf32>, vector<8x256xf32> -> vector<8x256xf32>
    %c0_462 = arith.constant 0 : index
    %c6 = arith.constant 6 : index
    %412 = vector.load %arg3[%c0_462, %c6] : memref<8x8xf32, #tpu.memory_space<vmem>>, vector<8x1xf32>
    %c0_463 = arith.constant 0 : index
    %c7 = arith.constant 7 : index
    %413 = vector.load %arg3[%c0_463, %c7] : memref<8x8xf32, #tpu.memory_space<vmem>>, vector<8x1xf32>
    %cst_464 = arith.constant dense<0.000000e+00> : vector<8xf32>
    %414 = vector.multi_reduction <add>, %411, %cst_464 [1] : vector<8x256xf32> to vector<8xf32>
    %415 = vector.shape_cast %414 : vector<8xf32> to vector<8x1xf32>
    %cst_465 = arith.constant 2.560000e+02 : f32
    %416 = vector.broadcast %cst_465 : f32 to vector<8x1xf32>
    %417 = arith.divf %415, %416 : vector<8x1xf32>
    %418 = arith.mulf %411, %411 : vector<8x256xf32>
    %cst_466 = arith.constant dense<0.000000e+00> : vector<8xf32>
    %419 = vector.multi_reduction <add>, %418, %cst_466 [1] : vector<8x256xf32> to vector<8xf32>
    %420 = vector.shape_cast %419 : vector<8xf32> to vector<8x1xf32>
    %cst_467 = arith.constant 2.560000e+02 : f32
    %421 = vector.broadcast %cst_467 : f32 to vector<8x1xf32>
    %422 = arith.divf %420, %421 : vector<8x1xf32>
    %423 = arith.mulf %417, %417 : vector<8x1xf32>
    %424 = arith.subf %422, %423 : vector<8x1xf32>
    %425 = vector.broadcast %417 : vector<8x1xf32> to vector<8x256xf32>
    %426 = arith.subf %411, %425 : vector<8x256xf32>
    %cst_468 = arith.constant 9.99999974E-6 : f32
    %427 = vector.broadcast %cst_468 : f32 to vector<8x1xf32>
    %428 = arith.addf %424, %427 : vector<8x1xf32>
    %429 = math.rsqrt %428 : vector<8x1xf32>
    %430 = vector.broadcast %429 : vector<8x1xf32> to vector<8x256xf32>
    %431 = arith.mulf %426, %430 : vector<8x256xf32>
    %432 = vector.broadcast %412 : vector<8x1xf32> to vector<8x256xf32>
    %433 = arith.mulf %431, %432 : vector<8x256xf32>
    %434 = vector.broadcast %413 : vector<8x1xf32> to vector<8x256xf32>
    %435 = arith.addf %433, %434 : vector<8x256xf32>
    %436 = arith.addf %230, %435 : vector<8x256xf32>
    %cst_469 = arith.constant 0.000000e+00 : f32
    %437 = vector.broadcast %cst_469 : f32 to vector<8x256xf32>
    %438 = arith.maximumf %436, %437 : vector<8x256xf32>
    %c0_470 = arith.constant 0 : index
    %c0_471 = arith.constant 0 : index
    %439 = vector.load %arg4[%c0_470, %c0_471] : memref<1x8xf32, #tpu.memory_space<vmem>>, vector<1x8xf32>
    %cst_472 = arith.constant dense<0.000000e+00> : vector<1x256xf32>
    %440 = tpu.matmul %439, %438, %cst_472 {dimension_numbers = #tpu.dot_dimension_numbers<[1], [0], [0], [1], [0, 0, 1, 1], [], []>} : vector<1x8xf32>, vector<8x256xf32>, vector<1x256xf32> -> vector<1x256xf32>
    %c0_473 = arith.constant 0 : index
    %441 = memref.load %arg5[%c0_473] : memref<1xf32, #tpu.memory_space<smem>>
    %442 = vector.broadcast %441 : f32 to vector<1x256xf32>
    %443 = arith.addf %440, %442 : vector<1x256xf32>
    %cst_474 = arith.constant 0.000000e+00 : f32
    %444 = vector.broadcast %cst_474 : f32 to vector<1x256xf32>
    %445 = arith.subf %444, %443 : vector<1x256xf32>
    %446 = math.exp %445 : vector<1x256xf32>
    %cst_475 = arith.constant 1.000000e+00 : f32
    %447 = vector.broadcast %cst_475 : f32 to vector<1x256xf32>
    %448 = arith.addf %447, %446 : vector<1x256xf32>
    %449 = tpu.reciprocal %448 {approx = true} : vector<1x256xf32> -> vector<1x256xf32>
    %450 = vector.broadcast %449 : vector<1x256xf32> to vector<8x256xf32>
    %451 = arith.mulf %438, %450 : vector<8x256xf32>
    %452 = arith.addf %22, %451 : vector<8x256xf32>
    %c0_476 = arith.constant 0 : index
    %c0_477 = arith.constant 0 : index
    %c0_478 = arith.constant 0 : index
    %453 = vector.load %arg7[%c0_476, %c0_477, %c0_478] : memref<1x8x256xf32, #tpu.memory_space<vmem>>, vector<1x8x256xf32>
    %454 = vector.shape_cast %453 : vector<1x8x256xf32> to vector<8x256xf32>
    %455 = vector.shape_cast %452 : vector<8x256xf32> to vector<1x8x256xf32>
    tpu.vector_store %arg7[%c0_476, %c0_477, %c0_478], %455 {strides = array<i32>} : memref<1x8x256xf32, #tpu.memory_space<vmem>>, vector<1x8x256xf32>,
    return
  }
  func.func @transform_0(%arg0: i32) -> (i32, i32, i32) {
    %c0_i32 = arith.constant 0 : i32
    %c0_i32_0 = arith.constant 0 : i32
    %c0_i32_1 = arith.constant 0 : i32
    return %arg0, %c0_i32, %c0_i32_0 : i32, i32, i32
  }
  func.func @transform_1(%arg0: i32) -> (i32, i32, i32) {
    %c0_i32 = arith.constant 0 : i32
    %c0_i32_0 = arith.constant 0 : i32
    %c0_i32_1 = arith.constant 0 : i32
    %c0_i32_2 = arith.constant 0 : i32
    return %c0_i32, %c0_i32_0, %c0_i32_1 : i32, i32, i32
  }
  func.func @transform_2(%arg0: i32) -> (i32, i32) {
    %c0_i32 = arith.constant 0 : i32
    %c0_i32_0 = arith.constant 0 : i32
    %c0_i32_1 = arith.constant 0 : i32
    return %c0_i32, %c0_i32_0 : i32, i32
  }
  func.func @transform_3(%arg0: i32) -> (i32, i32) {
    %c0_i32 = arith.constant 0 : i32
    %c0_i32_0 = arith.constant 0 : i32
    %c0_i32_1 = arith.constant 0 : i32
    return %c0_i32, %c0_i32_0 : i32, i32
  }
  func.func @transform_4(%arg0: i32) -> i32 {
    %c0_i32 = arith.constant 0 : i32
    %c0_i32_0 = arith.constant 0 : i32
    return %c0_i32 : i32
  }
  func.func @transform_5(%arg0: i32) -> (i32, i32) {
    %c0_i32 = arith.constant 0 : i32
    %c0_i32_0 = arith.constant 0 : i32
    %c0_i32_1 = arith.constant 0 : i32
    return %c0_i32, %c0_i32_0 : i32, i32
  }
  func.func @transform_6(%arg0: i32) -> (i32, i32, i32) {
    %c0_i32 = arith.constant 0 : i32
    %c0_i32_0 = arith.constant 0 : i32
    %c0_i32_1 = arith.constant 0 : i32
    return %arg0, %c0_i32, %c0_i32_0 : i32, i32, i32
  }
}

</mosaic_0001>

<llo_original>
// kernel: group_forward.1
$region0: #{group_forward.1}
  #allocation0 [shape = 'u32[]', space=smem, size = 0x4, offset = 0x4, fixed_abs, tag = 'smem constant byte address 0x4 - core index']
  #allocation1 [shape = 'u32[144,128]{1,0:T(1,128)}', space=vmem, size = 0x12000, scoped, tag = 'internal scratch']
  #allocation2 [shape = 'f32[8,512]{1,0:T(8,128)}', space=vmem, size = 0x4000, scoped, tag = 'scratch operand']
  #allocation3 [shape = 'f32[216,256]{1,0:T(8,128)}', space=vmem, size = 0x36000, scoped, tag = 'scratch operand']
  #allocation4 [shape = 'f32[1]{0:T(128)S(6)}', space=smem, size = 0x200, scoped, tag = 'scoped memory for group_forward.1']
  %s0 = inlined_call_operand.vmem [shape: f32[2,8,256], index: 0, kind: input, shape index: {}]
  %s1 = inlined_call_operand.vmem [shape: f32[4,8,216], index: 1, kind: input, shape index: {}]
  %s2 = inlined_call_operand.vmem [shape: f32[8,8], index: 2, kind: input, shape index: {}]
  %s3 = inlined_call_operand.vmem [shape: f32[1,8], index: 3, kind: input, shape index: {}]
  %s4 = inlined_call_operand.<no memory space> [shape: f32[1], index: 4, kind: input, shape index: {}]
  %s5 = inlined_call_operand.vmem [shape: f32[6,256], index: 5, kind: input, shape index: {}]
  %s6 = inlined_call_operand.vmem [shape: f32[2,8,256], index: 6, kind: output, shape index: {}]
  %s7 = sld [smem:[#allocation0]]
  $region57: #{group_forward.1} parent=0
    _
  %s9 = ssub.s32 1, %s7
  %s10 = scalar_select 0, %s9, %s7
  %11 = sst [smem:[#allocation4]] %s4
  loop: start=0, step=1, limit=4
  $region2: #{group_forward.1} parent=0 // loop_pre_header
    _
  $region3: #{group_forward.1} parent=0 // loop_header
    %s13 = sphi 0, %s17
    %p14 = scmp.ge.s32.totalorder %s13, 4
    %s23 = sphi 0, %s25
    %s26 = sphi 0, %s23
    %s27 = sphi 0, %s26
    %s43 = sphi 0, %s27
    %s47 = sphi 0, %s47
    %s49 = sphi 0, %s47
    %s50 = sphi 0, %s49
    %s64 = sphi 0, %s50
    %s68 = sphi 0, %s68
    %s70 = sphi 0, %s68
    %s71 = sphi 0, %s70
    %s85 = sphi 0, %s71
    %s89 = sphi 0, %s89
    %s91 = sphi 0, %s89
    %s92 = sphi 0, %s91
    %s106 = sphi 0, %s92
    %s110 = sphi 0, %s110
    %s112 = sphi 0, %s110
    %s113 = sphi 0, %s112
    %s127 = sphi 0, %s113
    %s131 = sphi 0, %s131
    %s133 = sphi 0, %s131
    %s134 = sphi 0, %s133
    %s148 = sphi 0, %s134
    %s154 = sphi 0, %s156
    %s157 = sphi 0, %s154
    %s158 = sphi 0, %s157
    %s174 = sphi 0, %s158
  $region4: #{group_forward.1} parent=0 // loop_header_branch
    %16 = sbr.rel (%p14) target = $region8
  $region5: #{group_forward.1} parent=0 // loop_body
    %s18 = ssub.s32 %s13, 1
    %s19 = ssub.s32 %s13, 2
    %s20 = sadd.s32 %s13, 1
    %s21 = ssub.s32 %s13, %s20
    %p22 = scmp.eq.s32.totalorder %s21, 0
    %s24 = sadd.s32 %s23, 1
    %s25 = scalar_select %p22, %s23, %s24
    %p28 = pneg %p22
    %p29 = scmp.eq.s32.totalorder %s13, 1
    %p30 = por %p28, %p29
    %p31 = scmp.ne.s32.totalorder %s23, %s26
    %p32 = scmp.eq.s32.totalorder %s13, 0
    %p33 = por %p31, %p32
    %p34 = scmp.ne.s32.totalorder %s23, %s26
    %p35 = scmp.eq.s32.totalorder %s18, 1
    %p36 = por %p34, %p35
    %p37 = scmp.ne.s32.totalorder %s26, %s27
    %p38 = scmp.eq.s32.totalorder %s18, 0
    %p39 = por %p37, %p38
    %p40 = scmp.ne.s32.totalorder %s26, %s27
    %p41 = scmp.eq.s32.totalorder %s19, 1
    %p42 = por %p40, %p41
    %p44 = scmp.ne.s32.totalorder %s27, %s43
    %p45 = scmp.eq.s32.totalorder %s19, 0
    %p46 = por %p44, %p45
    %s48 = sadd.s32 %s47, 1
    %p51 = scmp.eq.s32.totalorder %s13, 1
    %p52 = scmp.ne.s32.totalorder %s47, %s49
    %p53 = scmp.eq.s32.totalorder %s13, 0
    %p54 = por %p52, %p53
    %p55 = scmp.ne.s32.totalorder %s47, %s49
    %p56 = scmp.eq.s32.totalorder %s18, 1
    %p57 = por %p55, %p56
    %p58 = scmp.ne.s32.totalorder %s49, %s50
    %p59 = scmp.eq.s32.totalorder %s18, 0
    %p60 = por %p58, %p59
    %p61 = scmp.ne.s32.totalorder %s49, %s50
    %p62 = scmp.eq.s32.totalorder %s19, 1
    %p63 = por %p61, %p62
    %p65 = scmp.ne.s32.totalorder %s50, %s64
    %p66 = scmp.eq.s32.totalorder %s19, 0
    %p67 = por %p65, %p66
    %s69 = sadd.s32 %s68, 1
    %p72 = scmp.eq.s32.totalorder %s13, 1
    %p73 = scmp.ne.s32.totalorder %s68, %s70
    %p74 = scmp.eq.s32.totalorder %s13, 0
    %p75 = por %p73, %p74
    %p76 = scmp.ne.s32.totalorder %s68, %s70
    %p77 = scmp.eq.s32.totalorder %s18, 1
    %p78 = por %p76, %p77
    %p79 = scmp.ne.s32.totalorder %s70, %s71
    %p80 = scmp.eq.s32.totalorder %s18, 0
    %p81 = por %p79, %p80
    %p82 = scmp.ne.s32.totalorder %s70, %s71
    %p83 = scmp.eq.s32.totalorder %s19, 1
    %p84 = por %p82, %p83
    %p86 = scmp.ne.s32.totalorder %s71, %s85
    %p87 = scmp.eq.s32.totalorder %s19, 0
    %p88 = por %p86, %p87
    %s90 = sadd.s32 %s89, 1
    %p93 = scmp.eq.s32.totalorder %s13, 1
    %p94 = scmp.ne.s32.totalorder %s89, %s91
    %p95 = scmp.eq.s32.totalorder %s13, 0
    %p96 = por %p94, %p95
    %p97 = scmp.ne.s32.totalorder %s89, %s91
    %p98 = scmp.eq.s32.totalorder %s18, 1
    %p99 = por %p97, %p98
    %p100 = scmp.ne.s32.totalorder %s91, %s92
    %p101 = scmp.eq.s32.totalorder %s18, 0
    %p102 = por %p100, %p101
    %p103 = scmp.ne.s32.totalorder %s91, %s92
    %p104 = scmp.eq.s32.totalorder %s19, 1
    %p105 = por %p103, %p104
    %p107 = scmp.ne.s32.totalorder %s92, %s106
    %p108 = scmp.eq.s32.totalorder %s19, 0
    %p109 = por %p107, %p108
    %s111 = sadd.s32 %s110, 1
    %p114 = scmp.eq.s32.totalorder %s13, 1
    %p115 = scmp.ne.s32.totalorder %s110, %s112
    %p116 = scmp.eq.s32.totalorder %s13, 0
    %p117 = por %p115, %p116
    %p118 = scmp.ne.s32.totalorder %s110, %s112
    %p119 = scmp.eq.s32.totalorder %s18, 1
    %p120 = por %p118, %p119
    %p121 = scmp.ne.s32.totalorder %s112, %s113
    %p122 = scmp.eq.s32.totalorder %s18, 0
    %p123 = por %p121, %p122
    %p124 = scmp.ne.s32.totalorder %s112, %s113
    %p125 = scmp.eq.s32.totalorder %s19, 1
    %p126 = por %p124, %p125
    %p128 = scmp.ne.s32.totalorder %s113, %s127
    %p129 = scmp.eq.s32.totalorder %s19, 0
    %p130 = por %p128, %p129
    %s132 = sadd.s32 %s131, 1
    %p135 = scmp.eq.s32.totalorder %s13, 1
    %p136 = scmp.ne.s32.totalorder %s131, %s133
    %p137 = scmp.eq.s32.totalorder %s13, 0
    %p138 = por %p136, %p137
    %p139 = scmp.ne.s32.totalorder %s131, %s133
    %p140 = scmp.eq.s32.totalorder %s18, 1
    %p141 = por %p139, %p140
    %p142 = scmp.ne.s32.totalorder %s133, %s134
    %p143 = scmp.eq.s32.totalorder %s18, 0
    %p144 = por %p142, %p143
    %p145 = scmp.ne.s32.totalorder %s133, %s134
    %p146 = scmp.eq.s32.totalorder %s19, 1
    %p147 = por %p145, %p146
    %p149 = scmp.ne.s32.totalorder %s134, %s148
    %p150 = scmp.eq.s32.totalorder %s19, 0
    %p151 = por %p149, %p150
    %s152 = ssub.s32 %s13, %s20
    %p153 = scmp.eq.s32.totalorder %s152, 0
    %s155 = sadd.s32 %s154, 1
    %s156 = scalar_select %p153, %s154, %s155
    %p159 = pneg %p153
    %p160 = scmp.eq.s32.totalorder %s13, 1
    %p161 = por %p159, %p160
    %p162 = scmp.ne.s32.totalorder %s154, %s157
    %p163 = scmp.eq.s32.totalorder %s13, 0
    %p164 = por %p162, %p163
    %p165 = scmp.ne.s32.totalorder %s154, %s157
    %p166 = scmp.eq.s32.totalorder %s18, 1
    %p167 = por %p165, %p166
    %p168 = scmp.ne.s32.totalorder %s157, %s158
    %p169 = scmp.eq.s32.totalorder %s18, 0
    %p170 = por %p168, %p169
    %p171 = scmp.ne.s32.totalorder %s157, %s158
    %p172 = scmp.eq.s32.totalorder %s19, 1
    %p173 = por %p171, %p172
    %p175 = scmp.ne.s32.totalorder %s158, %s174
    %p176 = scmp.eq.s32.totalorder %s19, 0
    %p177 = por %p175, %p176
    %p178 = scmp.le.s32.totalorder 1, %s13
    %p179 = scmp.lt.s32.totalorder %s13, 3
    %p180 = pnand %p178, %p179
    %p181 = pneg %p180
    // Predicated region
    $region9: #{group_forward.1} parent=5 // pred_check
      _
    $region10: #{group_forward.1} parent=5 // pred_check_branch
      %183 = sbr.rel (%p180) target = $region12
    $region11: #{group_forward.1} parent=5 // pred_region
      %s184 = ssub.s32 %s13, 1
      // Predicated region
      $region13: #{group_forward.1} parent=11 // pred_check
        %p185 = pneg %p60
      $region14: #{group_forward.1} parent=11 // pred_check_branch
        %187 = sbr.rel (%p185) target = $region16
      $region15: #{group_forward.1} parent=11 // pred_region
        _
      $region16: #{group_forward.1} parent=11 // pred_fallthru
        _
      // Predicated region
      $region17: #{group_forward.1} parent=11 // pred_check
        %p188 = pneg %p81
      $region18: #{group_forward.1} parent=11 // pred_check_branch
        %190 = sbr.rel (%p188) target = $region20
      $region19: #{group_forward.1} parent=11 // pred_region
        _
      $region20: #{group_forward.1} parent=11 // pred_fallthru
        _
      // Predicated region
      $region21: #{group_forward.1} parent=11 // pred_check
        %p191 = pneg %p102
      $region22: #{group_forward.1} parent=11 // pred_check_branch
        %193 = sbr.rel (%p191) target = $region24
      $region23: #{group_forward.1} parent=11 // pred_region
        _
      $region24: #{group_forward.1} parent=11 // pred_fallthru
        _
      // Predicated region
      $region25: #{group_forward.1} parent=11 // pred_check
        %p194 = pneg %p123
      $region26: #{group_forward.1} parent=11 // pred_check_branch
        %196 = sbr.rel (%p194) target = $region28
      $region27: #{group_forward.1} parent=11 // pred_region
        _
      $region28: #{group_forward.1} parent=11 // pred_fallthru
        _
      // Predicated region
      $region29: #{group_forward.1} parent=11 // pred_check
        %p197 = pneg %p144
      $region30: #{group_forward.1} parent=11 // pred_check_branch
        %199 = sbr.rel (%p197) target = $region32
      $region31: #{group_forward.1} parent=11 // pred_region
        _
      $region32: #{group_forward.1} parent=11 // pred_fallthru
        _
    $region12: #{group_forward.1} parent=5 // pred_fallthru
      _
    %p200 = scmp.lt.s32.totalorder %s13, 2
    // Predicated region
    $region33: #{group_forward.1} parent=5 // pred_check
      %p201 = pneg %p200
    $region34: #{group_forward.1} parent=5 // pred_check_branch
      %203 = sbr.rel (%p201) target = $region36
    $region35: #{group_forward.1} parent=5 // pred_region
      // Predicated region
      $region37: #{group_forward.1} parent=35 // pred_check
        %p204 = pneg %p33
      $region38: #{group_forward.1} parent=35 // pred_check_branch
        %206 = sbr.rel (%p204) target = $region40
      $region39: #{group_forward.1} parent=35 // pred_region
        %p207 = scmp.lt.s32.totalorder %s13, 1
        %s208 = scalar_select %p207, %s13, 1
        %s209 = smul.addr %s208, 2
        %s210 = smul.addr %s209, 8
        %s211 = scalar_lea.vmem %s0, %s210
      $region40: #{group_forward.1} parent=35 // pred_fallthru
        _
    $region36: #{group_forward.1} parent=5 // pred_fallthru
      _
    %p212 = scmp.le.s32.totalorder 1, %s13
    %p213 = scmp.lt.s32.totalorder %s13, 3
    %p214 = pnand %p212, %p213
    %p215 = pneg %p214
    // Predicated region
    $region41: #{group_forward.1} parent=5 // pred_check
      _
    $region42: #{group_forward.1} parent=5 // pred_check_branch
      %217 = sbr.rel (%p214) target = $region44
    $region43: #{group_forward.1} parent=5 // pred_region
      %s218 = ssub.s32 %s13, 1
      %p219 = scmp.lt.s32.totalorder %s18, 1
      %s220 = scalar_select %p219, %s18, 1
      %s221 = smul.addr %s220, 2
      %s222 = smul.addr %s221, 8
      %s223 = scalar_lea.vmem %s0, %s222
      %p224 = pneg %p39
      %p225 = pneg %p36
      %p226 = pneg %p60
      %p227 = pneg %p57
      %p228 = pneg %p81
      %p229 = pneg %p78
      %p230 = pneg %p102
      %p231 = pneg %p99
      %p232 = pneg %p123
      %p233 = pneg %p120
      %p234 = pneg %p144
      %p235 = pneg %p141
      %p236 = pneg %p170
      %p237 = pneg %p167
      %p238 = scmp.lt.s32.totalorder %s18, 1
      %s239 = scalar_select %p238, %s18, 1
      %s240 = smul.addr %s239, 2
      %s241 = smul.addr %s240, 8
      %s242 = scalar_lea.vmem %s6, %s241
      %p243 = scmp.lt.s32.totalorder %s18, 1
      %s244 = scalar_select %p243, %s18, 1
      %s245 = smul.addr %s244, 2
      %s246 = smul.addr %s245, 8
      %s247 = scalar_lea.vmem %s0, %s246
      %p248 = scmp.lt.s32.totalorder %s18, 1
      %s249 = scalar_select %p248, %s18, 1
      %s250 = smul.addr %s249, 2
      %s251 = smul.addr %s250, 8
      %s252 = scalar_lea.vmem %s6, %s251
      %253 = vst [vmem:[#allocation2] sm:$0xff] 0.0
      %254 = vst [vmem:[#allocation2 + $0x18] sm:$0xff] 0.0
      %v255 = vld [vmem:[%s5] ss:$8 sm:$0x3]
      %v257 = vlaneseq
      %v258 = vshrl.u32 %v257, 7
      %v259 = vsub.s32 0, %v258
      %v260 = vrot.slane %v255, %v259
      %v261 = vlaneseq
      %v262 = vshrl.u32 %v261, 7
      %v263 = vsub.s32 1, %v262
      %v264 = vrot.slane %v255, %v263
      %s265 = scalar_lea.vmem %s5, 2
      %v266 = vld [vmem:[%s265] ss:$8 sm:$0x3]
      %v268 = vlaneseq
      %v269 = vshrl.u32 %v268, 7
      %v270 = vsub.s32 0, %v269
      %v271 = vrot.slane %v266, %v270
      %v272 = vlaneseq
      %v273 = vshrl.u32 %v272, 7
      %v274 = vsub.s32 1, %v273
      %v275 = vrot.slane %v266, %v274
      %s276 = scalar_lea.vmem %s5, 4
      %v277 = vld [vmem:[%s276] ss:$8 sm:$0x3]
      %v279 = vlaneseq
      %v280 = vshrl.u32 %v279, 7
      %v281 = vsub.s32 0, %v280
      %v282 = vrot.slane %v277, %v281
      %v283 = vlaneseq
      %v284 = vshrl.u32 %v283, 7
      %v285 = vsub.s32 1, %v284
      %v286 = vrot.slane %v277, %v285
      %s287 = scalar_lea.vmem %s5, 1
      %v288 = vld [vmem:[%s287] ss:$8 sm:$0x3]
      %v290 = vlaneseq
      %v291 = vshrl.u32 %v290, 7
      %v292 = vsub.s32 0, %v291
      %v293 = vrot.slane %v288, %v292
      %v294 = vlaneseq
      %v295 = vshrl.u32 %v294, 7
      %v296 = vsub.s32 1, %v295
      %v297 = vrot.slane %v288, %v296
      %s298 = scalar_lea.vmem %s5, 3
      %v299 = vld [vmem:[%s298] ss:$8 sm:$0x3]
      %v301 = vlaneseq
      %v302 = vshrl.u32 %v301, 7
      %v303 = vsub.s32 0, %v302
      %v304 = vrot.slane %v299, %v303
      %v305 = vlaneseq
      %v306 = vshrl.u32 %v305, 7
      %v307 = vsub.s32 1, %v306
      %v308 = vrot.slane %v299, %v307
      %s309 = scalar_lea.vmem %s5, 5
      %v310 = vld [vmem:[%s309] ss:$8 sm:$0x3]
      %v312 = vlaneseq
      %v313 = vshrl.u32 %v312, 7
      %v314 = vsub.s32 0, %v313
      %v315 = vrot.slane %v310, %v314
      %v316 = vlaneseq
      %v317 = vshrl.u32 %v316, 7
      %v318 = vsub.s32 1, %v317
      %v319 = vrot.slane %v310, %v318
      %v320 = vld [vmem:[%s247] sm:$0xff]
      %v321 = vld [vmem:[%s247 + $0x8] sm:$0xff]
      %322 = vst [vmem:[#allocation2 + $0x8] sm:$0xff] %v320
      %323 = vst [vmem:[#allocation2 + $0x10] sm:$0xff] %v321
      %v324 = vld [vmem:[#allocation2] sm:$0xff]
      %v325 = vld [vmem:[#allocation2 + $0x8] sm:$0xff]
      %v326 = vld [vmem:[#allocation2 + $0x10] sm:$0xff]
      %327 = vrot.lane.b32.xlu0 %v260, 94
      %v328 = vpop.permute.xlu0 %327
      %329 = vrot.lane.b32.xlu0 %v264, 94
      %v330 = vpop.permute.xlu0 %329
      %vm331 = vcmask 769024
      %v332 = vsel %vm331, %v328, %v330
      %v336 = vmul.f32 %v324, %v328
      %v337 = vmul.f32 %v325, %v332
      %v338 = vmul.f32 %v326, %v330
      %342 = vrot.lane.b32.xlu0 %v336, 34
      %v343 = vpop.permute.xlu0 %342
      %344 = vrot.lane.b32.xlu0 %v337, 34
      %v345 = vpop.permute.xlu0 %344
      %346 = vrot.lane.b32.xlu0 %v338, 34
      %v347 = vpop.permute.xlu0 %346
      %vm348 = vcmask 277504
      %v349 = vsel %vm348, %v343, %v345
      %v350 = vsel %vm348, %v345, %v347
      %353 = vst [vmem:[#allocation3] sm:$0xff] %v349
      %354 = vst [vmem:[#allocation3 + $0x8] sm:$0xff] %v350
      %v355 = vld [vmem:[#allocation2] sm:$0xff]
      %v356 = vld [vmem:[#allocation2 + $0x8] sm:$0xff]
      %v357 = vld [vmem:[#allocation2 + $0x10] sm:$0xff]
      %361 = vrot.lane.b32.xlu0 %v355, 32
      %v362 = vpop.permute.xlu0 %361
      %363 = vrot.lane.b32.xlu0 %v356, 32
      %v364 = vpop.permute.xlu0 %363
      %365 = vrot.lane.b32.xlu0 %v357, 32
      %v366 = vpop.permute.xlu0 %365
      %vm367 = vcmask 261120
      %v368 = vsel %vm367, %v362, %v364
      %v369 = vsel %vm367, %v364, %v366
      %372 = vst [vmem:[#allocation3 + $0x10] sm:$0xff] %v368
      %373 = vst [vmem:[#allocation3 + $0x18] sm:$0xff] %v369
      %v374 = vld [vmem:[#allocation2] sm:$0xff]
      %v375 = vld [vmem:[#allocation2 + $0x8] sm:$0xff]
      %v376 = vld [vmem:[#allocation2 + $0x10] sm:$0xff]
      %377 = vrot.lane.b32.xlu0 %v293, 98
      %v378 = vpop.permute.xlu0 %377
      %379 = vrot.lane.b32.xlu0 %v297, 98
      %v380 = vpop.permute.xlu0 %379
      %vm381 = vcmask 801792
      %v382 = vsel %vm381, %v378, %v380
      %v386 = vmul.f32 %v374, %v378
      %v387 = vmul.f32 %v375, %v382
      %v388 = vmul.f32 %v376, %v380
      %392 = vrot.lane.b32.xlu0 %v386, 30
      %v393 = vpop.permute.xlu0 %392
      %394 = vrot.lane.b32.xlu0 %v387, 30
      %v395 = vpop.permute.xlu0 %394
      %396 = vrot.lane.b32.xlu0 %v388, 30
      %v397 = vpop.permute.xlu0 %396
      %vm398 = vcmask 244736
      %v399 = vsel %vm398, %v393, %v395
      %v400 = vsel %vm398, %v395, %v397
      %403 = vst [vmem:[#allocation3 + $0x20] sm:$0xff] %v399
      %404 = vst [vmem:[#allocation3 + $0x28] sm:$0xff] %v400
      %v405 = vld [vmem:[#allocation2] sm:$0xff]
      %v406 = vld [vmem:[#allocation2 + $0x8] sm:$0xff]
      %v407 = vld [vmem:[#allocation2 + $0x10] sm:$0xff]
      %408 = vrot.lane.b32.xlu0 %v260, 126
      %v409 = vpop.permute.xlu0 %408
      %410 = vrot.lane.b32.xlu0 %v264, 126
      %v411 = vpop.permute.xlu0 %410
      %vm412 = vcmask 1031168
      %v413 = vsel %vm412, %v409, %v411
      %v417 = vmul.f32 %v405, %v409
      %v418 = vmul.f32 %v406, %v413
      %v419 = vmul.f32 %v407, %v411
      %423 = vrot.lane.b32.xlu0 %v417, 2
      %v424 = vpop.permute.xlu0 %423
      %425 = vrot.lane.b32.xlu0 %v418, 2
      %v426 = vpop.permute.xlu0 %425
      %427 = vrot.lane.b32.xlu0 %v419, 2
      %v428 = vpop.permute.xlu0 %427
      %vm429 = vcmask 15360
      %v430 = vsel %vm429, %v424, %v426
      %v431 = vsel %vm429, %v426, %v428
      %434 = vst [vmem:[#allocation3 + $0x30] sm:$0xff] %v430
      %435 = vst [vmem:[#allocation3 + $0x38] sm:$0xff] %v431
      %v436 = vld [vmem:[#allocation2 + $0x8] sm:$0xff]
      %v437 = vld [vmem:[#allocation2 + $0x10] sm:$0xff]
      %438 = vst [vmem:[#allocation3 + $0x40] sm:$0xff] %v436
      %439 = vst [vmem:[#allocation3 + $0x48] sm:$0xff] %v437
      %v440 = vld [vmem:[#allocation2 + $0x8] sm:$0xff]
      %v441 = vld [vmem:[#allocation2 + $0x10] sm:$0xff]
      %v442 = vld [vmem:[#allocation2 + $0x18] sm:$0xff]
      %443 = vrot.lane.b32.xlu0 %v293, 2
      %v444 = vpop.permute.xlu0 %443
      %445 = vrot.lane.b32.xlu0 %v297, 2
      %v446 = vpop.permute.xlu0 %445
      %v447 = vsel %vm429, %v444, %v446
      %v451 = vmul.f32 %v440, %v444
      %v452 = vmul.f32 %v441, %v447
      %v453 = vmul.f32 %v442, %v446
      %457 = vrot.lane.b32.xlu0 %v451, 126
      %v458 = vpop.permute.xlu0 %457
      %459 = vrot.lane.b32.xlu0 %v452, 126
      %v460 = vpop.permute.xlu0 %459
      %461 = vrot.lane.b32.xlu0 %v453, 126
      %v462 = vpop.permute.xlu0 %461
      %v463 = vsel %vm412, %v458, %v460
      %v464 = vsel %vm412, %v460, %v462
      %467 = vst [vmem:[#allocation3 + $0x50] sm:$0xff] %v463
      %468 = vst [vmem:[#allocation3 + $0x58] sm:$0xff] %v464
      %v469 = vld [vmem:[#allocation2 + $0x8] sm:$0xff]
      %v470 = vld [vmem:[#allocation2 + $0x10] sm:$0xff]
      %v471 = vld [vmem:[#allocation2 + $0x18] sm:$0xff]
      %472 = vrot.lane.b32.xlu0 %v260, 30
      %v473 = vpop.permute.xlu0 %472
      %474 = vrot.lane.b32.xlu0 %v264, 30
      %v475 = vpop.permute.xlu0 %474
      %v476 = vsel %vm398, %v473, %v475
      %v480 = vmul.f32 %v469, %v473
      %v481 = vmul.f32 %v470, %v476
      %v482 = vmul.f32 %v471, %v475
      %486 = vrot.lane.b32.xlu0 %v480, 98
      %v487 = vpop.permute.xlu0 %486
      %488 = vrot.lane.b32.xlu0 %v481, 98
      %v489 = vpop.permute.xlu0 %488
      %490 = vrot.lane.b32.xlu0 %v482, 98
      %v491 = vpop.permute.xlu0 %490
      %v492 = vsel %vm381, %v487, %v489
      %v493 = vsel %vm381, %v489, %v491
      %496 = vst [vmem:[#allocation3 + $0x60] sm:$0xff] %v492
      %497 = vst [vmem:[#allocation3 + $0x68] sm:$0xff] %v493
      %v498 = vld [vmem:[#allocation2 + $0x8] sm:$0xff]
      %v499 = vld [vmem:[#allocation2 + $0x10] sm:$0xff]
      %v500 = vld [vmem:[#allocation2 + $0x18] sm:$0xff]
      %504 = vrot.lane.b32.xlu0 %v498, 96
      %v505 = vpop.permute.xlu0 %504
      %506 = vrot.lane.b32.xlu0 %v499, 96
      %v507 = vpop.permute.xlu0 %506
      %508 = vrot.lane.b32.xlu0 %v500, 96
      %v509 = vpop.permute.xlu0 %508
      %vm510 = vcmask 785408
      %v511 = vsel %vm510, %v505, %v507
      %v512 = vsel %vm510, %v507, %v509
      %515 = vst [vmem:[#allocation3 + $0x70] sm:$0xff] %v511
      %516 = vst [vmem:[#allocation3 + $0x78] sm:$0xff] %v512
      %v517 = vld [vmem:[#allocation2 + $0x8] sm:$0xff]
      %v518 = vld [vmem:[#allocation2 + $0x10] sm:$0xff]
      %v519 = vld [vmem:[#allocation2 + $0x18] sm:$0xff]
      %520 = vrot.lane.b32.xlu0 %v293, 34
      %v521 = vpop.permute.xlu0 %520
      %522 = vrot.lane.b32.xlu0 %v297, 34
      %v523 = vpop.permute.xlu0 %522
      %v524 = vsel %vm348, %v521, %v523
      %v528 = vmul.f32 %v517, %v521
      %v529 = vmul.f32 %v518, %v524
      %v530 = vmul.f32 %v519, %v523
      %534 = vrot.lane.b32.xlu0 %v528, 94
      %v535 = vpop.permute.xlu0 %534
      %536 = vrot.lane.b32.xlu0 %v529, 94
      %v537 = vpop.permute.xlu0 %536
      %538 = vrot.lane.b32.xlu0 %v530, 94
      %v539 = vpop.permute.xlu0 %538
      %v540 = vsel %vm331, %v535, %v537
      %v541 = vsel %vm331, %v537, %v539
      %544 = vst [vmem:[#allocation3 + $0x80] sm:$0xff] %v540
      %545 = vst [vmem:[#allocation3 + $0x88] sm:$0xff] %v541
      %v546 = vld [vmem:[#allocation2] sm:$0xff]
      %v547 = vld [vmem:[#allocation2 + $0x8] sm:$0xff]
      %v548 = vld [vmem:[#allocation2 + $0x10] sm:$0xff]
      %549 = vrot.lane.b32.xlu0 %v271, 60
      %v550 = vpop.permute.xlu0 %549
      %551 = vrot.lane.b32.xlu0 %v275, 60
      %v552 = vpop.permute.xlu0 %551
      %vm553 = vcmask 490496
      %v554 = vsel %vm553, %v550, %v552
      %v558 = vmul.f32 %v546, %v550
      %v559 = vmul.f32 %v547, %v554
      %v560 = vmul.f32 %v548, %v552
      %564 = vrot.lane.b32.xlu0 %v558, 68
      %v565 = vpop.permute.xlu0 %564
      %566 = vrot.lane.b32.xlu0 %v559, 68
      %v567 = vpop.permute.xlu0 %566
      %568 = vrot.lane.b32.xlu0 %v560, 68
      %v569 = vpop.permute.xlu0 %568
      %vm570 = vcmask 556032
      %v571 = vsel %vm570, %v565, %v567
      %v572 = vsel %vm570, %v567, %v569
      %575 = vst [vmem:[#allocation3 + $0x90] sm:$0xff] %v571
      %576 = vst [vmem:[#allocation3 + $0x98] sm:$0xff] %v572
      %v577 = vld [vmem:[#allocation2] sm:$0xff]
      %v578 = vld [vmem:[#allocation2 + $0x8] sm:$0xff]
      %v579 = vld [vmem:[#allocation2 + $0x10] sm:$0xff]
      %583 = vrot.lane.b32.xlu0 %v577, 64
      %v584 = vpop.permute.xlu0 %583
      %585 = vrot.lane.b32.xlu0 %v578, 64
      %v586 = vpop.permute.xlu0 %585
      %587 = vrot.lane.b32.xlu0 %v579, 64
      %v588 = vpop.permute.xlu0 %587
      %vm589 = vcmask 523264
      %v590 = vsel %vm589, %v584, %v586
      %v591 = vsel %vm589, %v586, %v588
      %594 = vst [vmem:[#allocation3 + $0xa0] sm:$0xff] %v590
      %595 = vst [vmem:[#allocation3 + $0xa8] sm:$0xff] %v591
      %v596 = vld [vmem:[#allocation2] sm:$0xff]
      %v597 = vld [vmem:[#allocation2 + $0x8] sm:$0xff]
      %v598 = vld [vmem:[#allocation2 + $0x10] sm:$0xff]
      %599 = vrot.lane.b32.xlu0 %v304, 68
      %v600 = vpop.permute.xlu0 %599
      %601 = vrot.lane.b32.xlu0 %v308, 68
      %v602 = vpop.permute.xlu0 %601
      %v603 = vsel %vm570, %v600, %v602
      %v607 = vmul.f32 %v596, %v600
      %v608 = vmul.f32 %v597, %v603
      %v609 = vmul.f32 %v598, %v602
      %613 = vrot.lane.b32.xlu0 %v607, 60
      %v614 = vpop.permute.xlu0 %613
      %615 = vrot.lane.b32.xlu0 %v608, 60
      %v616 = vpop.permute.xlu0 %615
      %617 = vrot.lane.b32.xlu0 %v609, 60
      %v618 = vpop.permute.xlu0 %617
      %v619 = vsel %vm553, %v614, %v616
      %v620 = vsel %vm553, %v616, %v618
      %623 = vst [vmem:[#allocation3 + $0xb0] sm:$0xff] %v619
      %624 = vst [vmem:[#allocation3 + $0xb8] sm:$0xff] %v620
      %v625 = vld [vmem:[#allocation2] sm:$0xff]
      %v626 = vld [vmem:[#allocation2 + $0x8] sm:$0xff]
      %v627 = vld [vmem:[#allocation2 + $0x10] sm:$0xff]
      %628 = vrot.lane.b32.xlu0 %v271, 124
      %v629 = vpop.permute.xlu0 %628
      %630 = vrot.lane.b32.xlu0 %v275, 124
      %v631 = vpop.permute.xlu0 %630
      %vm632 = vcmask 1014784
      %v633 = vsel %vm632, %v629, %v631
      %v637 = vmul.f32 %v625, %v629
      %v638 = vmul.f32 %v626, %v633
      %v639 = vmul.f32 %v627, %v631
      %643 = vrot.lane.b32.xlu0 %v637, 4
      %v644 = vpop.permute.xlu0 %643
      %645 = vrot.lane.b32.xlu0 %v638, 4
      %v646 = vpop.permute.xlu0 %645
      %647 = vrot.lane.b32.xlu0 %v639, 4
      %v648 = vpop.permute.xlu0 %647
      %vm649 = vcmask 31744
      %v650 = vsel %vm649, %v644, %v646
      %v651 = vsel %vm649, %v646, %v648
      %654 = vst [vmem:[#allocation3 + $0xc0] sm:$0xff] %v650
      %655 = vst [vmem:[#allocation3 + $0xc8] sm:$0xff] %v651
      %v656 = vld [vmem:[#allocation2 + $0x8] sm:$0xff]
      %v657 = vld [vmem:[#allocation2 + $0x10] sm:$0xff]
      %658 = vst [vmem:[#allocation3 + $0xd0] sm:$0xff] %v656
      %659 = vst [vmem:[#allocation3 + $0xd8] sm:$0xff] %v657
      %v660 = vld [vmem:[#allocation2 + $0x8] sm:$0xff]
      %v661 = vld [vmem:[#allocation2 + $0x10] sm:$0xff]
      %v662 = vld [vmem:[#allocation2 + $0x18] sm:$0xff]
      %663 = vrot.lane.b32.xlu0 %v304, 4
      %v664 = vpop.permute.xlu0 %663
      %665 = vrot.lane.b32.xlu0 %v308, 4
      %v666 = vpop.permute.xlu0 %665
      %v667 = vsel %vm649, %v664, %v666
      %v671 = vmul.f32 %v660, %v664
      %v672 = vmul.f32 %v661, %v667
      %v673 = vmul.f32 %v662, %v666
      %677 = vrot.lane.b32.xlu0 %v671, 124
      %v678 = vpop.permute.xlu0 %677
      %679 = vrot.lane.b32.xlu0 %v672, 124
      %v680 = vpop.permute.xlu0 %679
      %681 = vrot.lane.b32.xlu0 %v673, 124
      %v682 = vpop.permute.xlu0 %681
      %v683 = vsel %vm632, %v678, %v680
      %v684 = vsel %vm632, %v680, %v682
      %687 = vst [vmem:[#allocation3 + $0xe0] sm:$0xff] %v683
      %688 = vst [vmem:[#allocation3 + $0xe8] sm:$0xff] %v684
      %v689 = vld [vmem:[#allocation2 + $0x8] sm:$0xff]
      %v690 = vld [vmem:[#allocation2 + $0x10] sm:$0xff]
      %v691 = vld [vmem:[#allocation2 + $0x18] sm:$0xff]
      %v692 = vmul.f32 %v689, %v550
      %v693 = vmul.f32 %v690, %v554
      %v694 = vmul.f32 %v691, %v552
      %698 = vrot.lane.b32.xlu0 %v692, 68
      %v699 = vpop.permute.xlu0 %698
      %700 = vrot.lane.b32.xlu0 %v693, 68
      %v701 = vpop.permute.xlu0 %700
      %702 = vrot.lane.b32.xlu0 %v694, 68
      %v703 = vpop.permute.xlu0 %702
      %v704 = vsel %vm570, %v699, %v701
      %v705 = vsel %vm570, %v701, %v703
      %708 = vst [vmem:[#allocation3 + $0xf0] sm:$0xff] %v704
      %709 = vst [vmem:[#allocation3 + $0xf8] sm:$0xff] %v705
      %v710 = vld [vmem:[#allocation2 + $0x8] sm:$0xff]
      %v711 = vld [vmem:[#allocation2 + $0x10] sm:$0xff]
      %v712 = vld [vmem:[#allocation2 + $0x18] sm:$0xff]
      %716 = vrot.lane.b32.xlu0 %v710, 64
      %v717 = vpop.permute.xlu0 %716
      %718 = vrot.lane.b32.xlu0 %v711, 64
      %v719 = vpop.permute.xlu0 %718
      %720 = vrot.lane.b32.xlu0 %v712, 64
      %v721 = vpop.permute.xlu0 %720
      %v722 = vsel %vm589, %v717, %v719
      %v723 = vsel %vm589, %v719, %v721
      %726 = vst [vmem:[#allocation3 + $0x100] sm:$0xff] %v722
      %727 = vst [vmem:[#allocation3 + $0x108] sm:$0xff] %v723
      %v728 = vld [vmem:[#allocation2 + $0x8] sm:$0xff]
      %v729 = vld [vmem:[#allocation2 + $0x10] sm:$0xff]
      %v730 = vld [vmem:[#allocation2 + $0x18] sm:$0xff]
      %v731 = vmul.f32 %v728, %v600
      %v732 = vmul.f32 %v729, %v603
      %v733 = vmul.f32 %v730, %v602
      %737 = vrot.lane.b32.xlu0 %v731, 60
      %v738 = vpop.permute.xlu0 %737
      %739 = vrot.lane.b32.xlu0 %v732, 60
      %v740 = vpop.permute.xlu0 %739
      %741 = vrot.lane.b32.xlu0 %v733, 60
      %v742 = vpop.permute.xlu0 %741
      %v743 = vsel %vm553, %v738, %v740
      %v744 = vsel %vm553, %v740, %v742
      %747 = vst [vmem:[#allocation3 + $0x110] sm:$0xff] %v743
      %748 = vst [vmem:[#allocation3 + $0x118] sm:$0xff] %v744
      %v749 = vld [vmem:[#allocation2] sm:$0xff]
      %v750 = vld [vmem:[#allocation2 + $0x8] sm:$0xff]
      %v751 = vld [vmem:[#allocation2 + $0x10] sm:$0xff]
      %752 = vrot.lane.b32.xlu0 %v282, 111
      %v753 = vpop.permute.xlu0 %752
      %754 = vrot.lane.b32.xlu0 %v286, 111
      %v755 = vpop.permute.xlu0 %754
      %vm756 = vcmask 908288
      %v757 = vsel %vm756, %v753, %v755
      %v761 = vmul.f32 %v749, %v753
      %v762 = vmul.f32 %v750, %v757
      %v763 = vmul.f32 %v751, %v755
      %767 = vrot.lane.b32.xlu0 %v761, 17
      %v768 = vpop.permute.xlu0 %767
      %769 = vrot.lane.b32.xlu0 %v762, 17
      %v770 = vpop.permute.xlu0 %769
      %771 = vrot.lane.b32.xlu0 %v763, 17
      %v772 = vpop.permute.xlu0 %771
      %vm773 = vcmask 138240
      %v774 = vsel %vm773, %v768, %v770
      %v775 = vsel %vm773, %v770, %v772
      %778 = vst [vmem:[#allocation3 + $0x120] sm:$0xff] %v774
      %779 = vst [vmem:[#allocation3 + $0x128] sm:$0xff] %v775
      %v780 = vld [vmem:[#allocation2] sm:$0xff]
      %v781 = vld [vmem:[#allocation2 + $0x8] sm:$0xff]
      %v782 = vld [vmem:[#allocation2 + $0x10] sm:$0xff]
      %786 = vrot.lane.b32.xlu0 %v780, 16
      %v787 = vpop.permute.xlu0 %786
      %788 = vrot.lane.b32.xlu0 %v781, 16
      %v789 = vpop.permute.xlu0 %788
      %790 = vrot.lane.b32.xlu0 %v782, 16
      %v791 = vpop.permute.xlu0 %790
      %vm792 = vcmask 130048
      %v793 = vsel %vm792, %v787, %v789
      %v794 = vsel %vm792, %v789, %v791
      %797 = vst [vmem:[#allocation3 + $0x130] sm:$0xff] %v793
      %798 = vst [vmem:[#allocation3 + $0x138] sm:$0xff] %v794
      %v799 = vld [vmem:[#allocation2] sm:$0xff]
      %v800 = vld [vmem:[#allocation2 + $0x8] sm:$0xff]
      %v801 = vld [vmem:[#allocation2 + $0x10] sm:$0xff]
      %802 = vrot.lane.b32.xlu0 %v315, 113
      %v803 = vpop.permute.xlu0 %802
      %804 = vrot.lane.b32.xlu0 %v319, 113
      %v805 = vpop.permute.xlu0 %804
      %vm806 = vcmask 924672
      %v807 = vsel %vm806, %v803, %v805
      %v811 = vmul.f32 %v799, %v803
      %v812 = vmul.f32 %v800, %v807
      %v813 = vmul.f32 %v801, %v805
      %817 = vrot.lane.b32.xlu0 %v811, 15
      %v818 = vpop.permute.xlu0 %817
      %819 = vrot.lane.b32.xlu0 %v812, 15
      %v820 = vpop.permute.xlu0 %819
      %821 = vrot.lane.b32.xlu0 %v813, 15
      %v822 = vpop.permute.xlu0 %821
      %vm823 = vcmask 121856
      %v824 = vsel %vm823, %v818, %v820
      %v825 = vsel %vm823, %v820, %v822
      %828 = vst [vmem:[#allocation3 + $0x140] sm:$0xff] %v824
      %829 = vst [vmem:[#allocation3 + $0x148] sm:$0xff] %v825
      %v830 = vld [vmem:[#allocation2] sm:$0xff]
      %v831 = vld [vmem:[#allocation2 + $0x8] sm:$0xff]
      %v832 = vld [vmem:[#allocation2 + $0x10] sm:$0xff]
      %833 = vrot.lane.b32.xlu0 %v282, 127
      %v834 = vpop.permute.xlu0 %833
      %835 = vrot.lane.b32.xlu0 %v286, 127
      %v836 = vpop.permute.xlu0 %835
      %vm837 = vcmask 1039360
      %v838 = vsel %vm837, %v834, %v836
      %v842 = vmul.f32 %v830, %v834
      %v843 = vmul.f32 %v831, %v838
      %v844 = vmul.f32 %v832, %v836
      %848 = vrot.lane.b32.xlu0 %v842, 1
      %v849 = vpop.permute.xlu0 %848
      %850 = vrot.lane.b32.xlu0 %v843, 1
      %v851 = vpop.permute.xlu0 %850
      %852 = vrot.lane.b32.xlu0 %v844, 1
      %v853 = vpop.permute.xlu0 %852
      %vm854 = vcmask 7168
      %v855 = vsel %vm854, %v849, %v851
      %v856 = vsel %vm854, %v851, %v853
      %859 = vst [vmem:[#allocation3 + $0x150] sm:$0xff] %v855
      %860 = vst [vmem:[#allocation3 + $0x158] sm:$0xff] %v856
      %v861 = vld [vmem:[#allocation2 + $0x8] sm:$0xff]
      %v862 = vld [vmem:[#allocation2 + $0x10] sm:$0xff]
      %863 = vst [vmem:[#allocation3 + $0x160] sm:$0xff] %v861
      %864 = vst [vmem:[#allocation3 + $0x168] sm:$0xff] %v862
      %v865 = vld [vmem:[#allocation2 + $0x8] sm:$0xff]
      %v866 = vld [vmem:[#allocation2 + $0x10] sm:$0xff]
      %v867 = vld [vmem:[#allocation2 + $0x18] sm:$0xff]
      %868 = vrot.lane.b32.xlu0 %v315, 1
      %v869 = vpop.permute.xlu0 %868
      %870 = vrot.lane.b32.xlu0 %v319, 1
      %v871 = vpop.permute.xlu0 %870
      %v872 = vsel %vm854, %v869, %v871
      %v876 = vmul.f32 %v865, %v869
      %v877 = vmul.f32 %v866, %v872
      %v878 = vmul.f32 %v867, %v871
      %882 = vrot.lane.b32.xlu0 %v876, 127
      %v883 = vpop.permute.xlu0 %882
      %884 = vrot.lane.b32.xlu0 %v877, 127
      %v885 = vpop.permute.xlu0 %884
      %886 = vrot.lane.b32.xlu0 %v878, 127
      %v887 = vpop.permute.xlu0 %886
      %v888 = vsel %vm837, %v883, %v885
      %v889 = vsel %vm837, %v885, %v887
      %892 = vst [vmem:[#allocation3 + $0x170] sm:$0xff] %v888
      %893 = vst [vmem:[#allocation3 + $0x178] sm:$0xff] %v889
      %v894 = vld [vmem:[#allocation2 + $0x8] sm:$0xff]
      %v895 = vld [vmem:[#allocation2 + $0x10] sm:$0xff]
      %v896 = vld [vmem:[#allocation2 + $0x18] sm:$0xff]
      %897 = vrot.lane.b32.xlu0 %v282, 15
      %v898 = vpop.permute.xlu0 %897
      %899 = vrot.lane.b32.xlu0 %v286, 15
      %v900 = vpop.permute.xlu0 %899
      %v901 = vsel %vm823, %v898, %v900
      %v905 = vmul.f32 %v894, %v898
      %v906 = vmul.f32 %v895, %v901
      %v907 = vmul.f32 %v896, %v900
      %911 = vrot.lane.b32.xlu0 %v905, 113
      %v912 = vpop.permute.xlu0 %911
      %913 = vrot.lane.b32.xlu0 %v906, 113
      %v914 = vpop.permute.xlu0 %913
      %915 = vrot.lane.b32.xlu0 %v907, 113
      %v916 = vpop.permute.xlu0 %915
      %v917 = vsel %vm806, %v912, %v914
      %v918 = vsel %vm806, %v914, %v916
      %921 = vst [vmem:[#allocation3 + $0x180] sm:$0xff] %v917
      %922 = vst [vmem:[#allocation3 + $0x188] sm:$0xff] %v918
      %v923 = vld [vmem:[#allocation2 + $0x8] sm:$0xff]
      %v924 = vld [vmem:[#allocation2 + $0x10] sm:$0xff]
      %v925 = vld [vmem:[#allocation2 + $0x18] sm:$0xff]
      %929 = vrot.lane.b32.xlu0 %v923, 112
      %v930 = vpop.permute.xlu0 %929
      %931 = vrot.lane.b32.xlu0 %v924, 112
      %v932 = vpop.permute.xlu0 %931
      %933 = vrot.lane.b32.xlu0 %v925, 112
      %v934 = vpop.permute.xlu0 %933
      %vm935 = vcmask 916480
      %v936 = vsel %vm935, %v930, %v932
      %v937 = vsel %vm935, %v932, %v934
      %940 = vst [vmem:[#allocation3 + $0x190] sm:$0xff] %v936
      %941 = vst [vmem:[#allocation3 + $0x198] sm:$0xff] %v937
      %v942 = vld [vmem:[#allocation2 + $0x8] sm:$0xff]
      %v943 = vld [vmem:[#allocation2 + $0x10] sm:$0xff]
      %v944 = vld [vmem:[#allocation2 + $0x18] sm:$0xff]
      %945 = vrot.lane.b32.xlu0 %v315, 17
      %v946 = vpop.permute.xlu0 %945
      %947 = vrot.lane.b32.xlu0 %v319, 17
      %v948 = vpop.permute.xlu0 %947
      %v949 = vsel %vm773, %v946, %v948
      %v953 = vmul.f32 %v942, %v946
      %v954 = vmul.f32 %v943, %v949
      %v955 = vmul.f32 %v944, %v948
      %959 = vrot.lane.b32.xlu0 %v953, 111
      %v960 = vpop.permute.xlu0 %959
      %961 = vrot.lane.b32.xlu0 %v954, 111
      %v962 = vpop.permute.xlu0 %961
      %963 = vrot.lane.b32.xlu0 %v955, 111
      %v964 = vpop.permute.xlu0 %963
      %v965 = vsel %vm756, %v960, %v962
      %v966 = vsel %vm756, %v962, %v964
      %969 = vst [vmem:[#allocation3 + $0x1a0] sm:$0xff] %v965
      %970 = vst [vmem:[#allocation3 + $0x1a8] sm:$0xff] %v966
      %v971 = vld [vmem:[%s1] sm:$0xff]
      %v972 = vld [vmem:[%s1 + $0x8] sm:$0xff]
      %v973 = vld [vmem:[#allocation3] sm:$0xff]
      %v974 = vld [vmem:[#allocation3 + $0x8] sm:$0xff]
      %v975 = vld [vmem:[#allocation3 + $0x10] sm:$0xff]
      %v976 = vld [vmem:[#allocation3 + $0x18] sm:$0xff]
      %v977 = vld [vmem:[#allocation3 + $0x20] sm:$0xff]
      %v978 = vld [vmem:[#allocation3 + $0x28] sm:$0xff]
      %v979 = vld [vmem:[#allocation3 + $0x30] sm:$0xff]
      %v980 = vld [vmem:[#allocation3 + $0x38] sm:$0xff]
      %v981 = vld [vmem:[#allocation3 + $0x40] sm:$0xff]
      %v982 = vld [vmem:[#allocation3 + $0x48] sm:$0xff]
      %v983 = vld [vmem:[#allocation3 + $0x50] sm:$0xff]
      %v984 = vld [vmem:[#allocation3 + $0x58] sm:$0xff]
      %v985 = vld [vmem:[#allocation3 + $0x60] sm:$0xff]
      %v986 = vld [vmem:[#allocation3 + $0x68] sm:$0xff]
      %v987 = vld [vmem:[#allocation3 + $0x70] sm:$0xff]
      %v988 = vld [vmem:[#allocation3 + $0x78] sm:$0xff]
      %v989 = vld [vmem:[#allocation3 + $0x80] sm:$0xff]
      %v990 = vld [vmem:[#allocation3 + $0x88] sm:$0xff]
      %v991 = vld [vmem:[#allocation3 + $0x90] sm:$0xff]
      %v992 = vld [vmem:[#allocation3 + $0x98] sm:$0xff]
      %v993 = vld [vmem:[#allocation3 + $0xa0] sm:$0xff]
      %v994 = vld [vmem:[#allocation3 + $0xa8] sm:$0xff]
      %v995 = vld [vmem:[#allocation3 + $0xb0] sm:$0xff]
      %v996 = vld [vmem:[#allocation3 + $0xb8] sm:$0xff]
      %v997 = vld [vmem:[#allocation3 + $0xc0] sm:$0xff]
      %v998 = vld [vmem:[#allocation3 + $0xc8] sm:$0xff]
      %v999 = vld [vmem:[#allocation3 + $0xd0] sm:$0xff]
      %v1000 = vld [vmem:[#allocation3 + $0xd8] sm:$0xff]
      %v1001 = vld [vmem:[#allocation3 + $0xe0] sm:$0xff]
      %v1002 = vld [vmem:[#allocation3 + $0xe8] sm:$0xff]
      %v1003 = vld [vmem:[#allocation3 + $0xf0] sm:$0xff]
      %v1004 = vld [vmem:[#allocation3 + $0xf8] sm:$0xff]
      %v1005 = vld [vmem:[#allocation3 + $0x100] sm:$0xff]
      %v1006 = vld [vmem:[#allocation3 + $0x108] sm:$0xff]
      %v1007 = vld [vmem:[#allocation3 + $0x110] sm:$0xff]
      %v1008 = vld [vmem:[#allocation3 + $0x118] sm:$0xff]
      %v1009 = vld [vmem:[#allocation3 + $0x120] sm:$0xff]
      %v1010 = vld [vmem:[#allocation3 + $0x128] sm:$0xff]
      %v1011 = vld [vmem:[#allocation3 + $0x130] sm:$0xff]
      %v1012 = vld [vmem:[#allocation3 + $0x138] sm:$0xff]
      %v1013 = vld [vmem:[#allocation3 + $0x140] sm:$0xff]
      %v1014 = vld [vmem:[#allocation3 + $0x148] sm:$0xff]
      %v1015 = vld [vmem:[#allocation3 + $0x150] sm:$0xff]
      %v1016 = vld [vmem:[#allocation3 + $0x158] sm:$0xff]
      %v1017 = vld [vmem:[#allocation3 + $0x160] sm:$0xff]
      %v1018 = vld [vmem:[#allocation3 + $0x168] sm:$0xff]
      %v1019 = vld [vmem:[#allocation3 + $0x170] sm:$0xff]
      %v1020 = vld [vmem:[#allocation3 + $0x178] sm:$0xff]
      %v1021 = vld [vmem:[#allocation3 + $0x180] sm:$0xff]
      %v1022 = vld [vmem:[#allocation3 + $0x188] sm:$0xff]
      %v1023 = vld [vmem:[#allocation3 + $0x190] sm:$0xff]
      %v1024 = vld [vmem:[#allocation3 + $0x198] sm:$0xff]
      %v1025 = vld [vmem:[#allocation3 + $0x1a0] sm:$0xff]
      %v1026 = vld [vmem:[#allocation3 + $0x1a8] sm:$0xff]
      %vm1027 = vcmask 719872
      %v1029 = vsel %vm1027, %v972, 0
      %1031 = vmatprep.subr.mxu0 %v974
      %1032 = vmatpush1.msra.mxu0 %v973
      %1033 = vmatprep.subr.mxu0 %v976
      %1034 = vmatpush1.msra.mxu0 %v975
      %1035 = vmatprep.subr.mxu0 %v978
      %1036 = vmatpush1.msra.mxu0 %v977
      %1037 = vmatprep.subr.mxu0 %v980
      %1038 = vmatpush1.msra.mxu0 %v979
      %1039 = vmatprep.subr.mxu0 %v982
      %1040 = vmatpush1.msra.mxu0 %v981
      %1041 = vmatprep.subr.mxu0 %v984
      %1042 = vmatpush1.msra.mxu0 %v983
      %1043 = vmatprep.subr.mxu0 %v986
      %1044 = vmatpush1.msra.mxu0 %v985
      %1045 = vmatprep.subr.mxu0 %v988
      %1046 = vmatpush1.msra.mxu0 %v987
      %1047 = vmatprep.subr.mxu0 %v990
      %1048 = vmatpush1.msra.mxu0 %v989
      %1049 = vmatprep.subr.mxu0 %v992
      %1050 = vmatpush1.msra.mxu0 %v991
      %1051 = vmatprep.subr.mxu0 %v994
      %1052 = vmatpush1.msra.mxu0 %v993
      %1053 = vmatprep.subr.mxu0 %v996
      %1054 = vmatpush1.msra.mxu0 %v995
      %1055 = vmatprep.subr.mxu0 %v998
      %1056 = vmatpush1.msra.mxu0 %v997
      %1057 = vmatprep.subr.mxu0 %v1000
      %1058 = vmatpush1.msra.mxu0 %v999
      %1059 = vmatprep.subr.mxu0 %v1002
      %1060 = vmatpush1.msra.mxu0 %v1001
      %1061 = vmatprep.subr.mxu0 %v1004
      %1062 = vmatpush1.msra.mxu0 %v1003
      %1063 = vmatprep.subr.mxu0 %v1006
      %1064 = vmatpush1.msra.mxu0 %v1005
      %1065 = vmatprep.subr.mxu0 %v1008
      %1066 = vmatpush1.msra.mxu0 %v1007
      %1067 = vmatprep.subr.mxu0 %v1010
      %1068 = vmatpush1.msra.mxu0 %v1009
      %1069 = vmatprep.subr.mxu0 %v1012
      %1070 = vmatpush1.msra.mxu0 %v1011
      %1071 = vmatprep.subr.mxu0 %v1014
      %1072 = vmatpush1.msra.mxu0 %v1013
      %1073 = vmatprep.subr.mxu0 %v1016
      %1074 = vmatpush1.msra.mxu0 %v1015
      %1075 = vmatprep.subr.mxu0 %v1018
      %1076 = vmatpush1.msra.mxu0 %v1017
      %1077 = vmatprep.subr.mxu0 %v1020
      %1078 = vmatpush1.msra.mxu0 %v1019
      %1079 = vmatprep.subr.mxu0 %v1022
      %1080 = vmatpush1.msra.mxu0 %v1021
      %1081 = vmatprep.subr.mxu0 %v1024
      %1082 = vmatpush1.msra.mxu0 %v1023
      %1083 = vmatprep.subr.mxu0 %v1026
      %1084 = vmatpush1.msra.mxu0 %v1025
      %1085 = vmatprep.subr.mxu0 0.0
      %1086 = vmatpush1.msra.mxu0 0.0
      %1087 = vmatprep.subr.mxu0 0.0
      %1088 = vmatpush1.msra.mxu0 0.0
      %1089 = vmatprep.subr.mxu0 0.0
      %1090 = vmatpush1.msra.mxu0 0.0
      %1091 = vmatprep.subr.mxu0 0.0
      %1092 = vmatpush1.msra.mxu0 0.0
      %1093 = vmatprep.subr.mxu0 0.0
      %1094 = vmatpush1.msra.mxu0 0.0
      %1095 = vmatprep.mubr.f32.mxu0 %v1029
      %1096 = vmatmul.mubr.f32.gmra.mrb[0].mxu0 %v971
      %v1097 = vpop.f32.mrb[0].mxu0
      %v1098 = vadd.f32 0.0, %v1097
      %v1099 = vpop.f32.mrb[0].mxu0
      %v1100 = vadd.f32 0.0, %v1099
      %1101 = vdwg.mxu0
      %v1102 = vld [vmem:[%s2] sm:$0xff]
      %v1103 = vadd.f32 %v1098, %v1100
      %1104 = vadd.xlane.f32.xlu0 %v1103
      %v1105 = vpop.xlane.xlu0 %1104
      %v1106 = vrcp.pop 256.0
      %v1107 = vmul.f32 %v1105, %v1106
      %v1108 = vmul.f32 %v1098, %v1098
      %v1109 = vmul.f32 %v1100, %v1100
      %v1110 = vadd.f32 %v1108, %v1109
      %1111 = vadd.xlane.f32.xlu0 %v1110
      %v1112 = vpop.xlane.xlu0 %1111
      %v1113 = vmul.f32 %v1112, %v1106
      %v1114 = vmul.f32 %v1107, %v1107
      %v1115 = vsub.f32 %v1113, %v1114
      %v1116 = vsub.f32 %v1098, %v1107
      %v1117 = vsub.f32 %v1100, %v1107
      %v1118 = vadd.f32 %v1115, 1e-05
      %v1119 = vrsqrt.pop %v1118
      %v1120 = vmul.f32 %v1116, %v1119
      %v1121 = vmul.f32 %v1117, %v1119
      %1123 = vset.pattern.permute.xlu0 0
      %1124 = vperm.xlu0 %1123, %v1102
      %v1125 = vpop.permute.xlu0 %1124
      %v1127 = vmul.f32 %v1120, %v1125
      %v1128 = vmul.f32 %v1121, %v1125
      %1129 = vset.pattern.permute.xlu0 1
      %1130 = vperm.xlu0 %1129, %v1102
      %v1131 = vpop.permute.xlu0 %1130
      %v1133 = vadd.f32 %v1127, %v1131
      %v1134 = vadd.f32 %v1128, %v1131
      %v1135 = vmax.f32 %v1133, 0.0
      %v1136 = vmax.f32 %v1134, 0.0
      %v1137 = vadd.f32 %v1135, %v320
      %v1138 = vadd.f32 %v1136, %v321
      %1139 = vst [vmem:[#allocation2 + $0x8] sm:$0xff] %v1137
      %1140 = vst [vmem:[#allocation2 + $0x10] sm:$0xff] %v1138
      %v1141 = vld [vmem:[#allocation2] sm:$0xff]
      %v1142 = vld [vmem:[#allocation2 + $0x8] sm:$0xff]
      %v1143 = vld [vmem:[#allocation2 + $0x10] sm:$0xff]
      %v1144 = vmul.f32 %v1141, %v328
      %v1145 = vmul.f32 %v1142, %v332
      %v1146 = vmul.f32 %v1143, %v330
      %1150 = vrot.lane.b32.xlu0 %v1144, 34
      %v1151 = vpop.permute.xlu0 %1150
      %1152 = vrot.lane.b32.xlu0 %v1145, 34
      %v1153 = vpop.permute.xlu0 %1152
      %1154 = vrot.lane.b32.xlu0 %v1146, 34
      %v1155 = vpop.permute.xlu0 %1154
      %v1156 = vsel %vm348, %v1151, %v1153
      %v1157 = vsel %vm348, %v1153, %v1155
      %1160 = vst [vmem:[#allocation3] sm:$0xff] %v1156
      %1161 = vst [vmem:[#allocation3 + $0x8] sm:$0xff] %v1157
      %v1162 = vld [vmem:[#allocation2] sm:$0xff]
      %v1163 = vld [vmem:[#allocation2 + $0x8] sm:$0xff]
      %v1164 = vld [vmem:[#allocation2 + $0x10] sm:$0xff]
      %1168 = vrot.lane.b32.xlu0 %v1162, 32
      %v1169 = vpop.permute.xlu0 %1168
      %1170 = vrot.lane.b32.xlu0 %v1163, 32
      %v1171 = vpop.permute.xlu0 %1170
      %1172 = vrot.lane.b32.xlu0 %v1164, 32
      %v1173 = vpop.permute.xlu0 %1172
      %v1174 = vsel %vm367, %v1169, %v1171
      %v1175 = vsel %vm367, %v1171, %v1173
      %1178 = vst [vmem:[#allocation3 + $0x10] sm:$0xff] %v1174
      %1179 = vst [vmem:[#allocation3 + $0x18] sm:$0xff] %v1175
      %v1180 = vld [vmem:[#allocation2] sm:$0xff]
      %v1181 = vld [vmem:[#allocation2 + $0x8] sm:$0xff]
      %v1182 = vld [vmem:[#allocation2 + $0x10] sm:$0xff]
      %v1183 = vmul.f32 %v1180, %v378
      %v1184 = vmul.f32 %v1181, %v382
      %v1185 = vmul.f32 %v1182, %v380
      %1189 = vrot.lane.b32.xlu0 %v1183, 30
      %v1190 = vpop.permute.xlu0 %1189
      %1191 = vrot.lane.b32.xlu0 %v1184, 30
      %v1192 = vpop.permute.xlu0 %1191
      %1193 = vrot.lane.b32.xlu0 %v1185, 30
      %v1194 = vpop.permute.xlu0 %1193
      %v1195 = vsel %vm398, %v1190, %v1192
      %v1196 = vsel %vm398, %v1192, %v1194
      %1199 = vst [vmem:[#allocation3 + $0x20] sm:$0xff] %v1195
      %1200 = vst [vmem:[#allocation3 + $0x28] sm:$0xff] %v1196
      %v1201 = vld [vmem:[#allocation2] sm:$0xff]
      %v1202 = vld [vmem:[#allocation2 + $0x8] sm:$0xff]
      %v1203 = vld [vmem:[#allocation2 + $0x10] sm:$0xff]
      %v1204 = vmul.f32 %v1201, %v409
      %v1205 = vmul.f32 %v1202, %v413
      %v1206 = vmul.f32 %v1203, %v411
      %1210 = vrot.lane.b32.xlu0 %v1204, 2
      %v1211 = vpop.permute.xlu0 %1210
      %1212 = vrot.lane.b32.xlu0 %v1205, 2
      %v1213 = vpop.permute.xlu0 %1212
      %1214 = vrot.lane.b32.xlu0 %v1206, 2
      %v1215 = vpop.permute.xlu0 %1214
      %v1216 = vsel %vm429, %v1211, %v1213
      %v1217 = vsel %vm429, %v1213, %v1215
      %1220 = vst [vmem:[#allocation3 + $0x30] sm:$0xff] %v1216
      %1221 = vst [vmem:[#allocation3 + $0x38] sm:$0xff] %v1217
      %v1222 = vld [vmem:[#allocation2 + $0x8] sm:$0xff]
      %v1223 = vld [vmem:[#allocation2 + $0x10] sm:$0xff]
      %1224 = vst [vmem:[#allocation3 + $0x40] sm:$0xff] %v1222
      %1225 = vst [vmem:[#allocation3 + $0x48] sm:$0xff] %v1223
      %v1226 = vld [vmem:[#allocation2 + $0x8] sm:$0xff]
      %v1227 = vld [vmem:[#allocation2 + $0x10] sm:$0xff]
      %v1228 = vld [vmem:[#allocation2 + $0x18] sm:$0xff]
      %v1229 = vmul.f32 %v1226, %v444
      %v1230 = vmul.f32 %v1227, %v447
      %v1231 = vmul.f32 %v1228, %v446
      %1235 = vrot.lane.b32.xlu0 %v1229, 126
      %v1236 = vpop.permute.xlu0 %1235
      %1237 = vrot.lane.b32.xlu0 %v1230, 126
      %v1238 = vpop.permute.xlu0 %1237
      %1239 = vrot.lane.b32.xlu0 %v1231, 126
      %v1240 = vpop.permute.xlu0 %1239
      %v1241 = vsel %vm412, %v1236, %v1238
      %v1242 = vsel %vm412, %v1238, %v1240
      %1245 = vst [vmem:[#allocation3 + $0x50] sm:$0xff] %v1241
      %1246 = vst [vmem:[#allocation3 + $0x58] sm:$0xff] %v1242
      %v1247 = vld [vmem:[#allocation2 + $0x8] sm:$0xff]
      %v1248 = vld [vmem:[#allocation2 + $0x10] sm:$0xff]
      %v1249 = vld [vmem:[#allocation2 + $0x18] sm:$0xff]
      %v1250 = vmul.f32 %v1247, %v473
      %v1251 = vmul.f32 %v1248, %v476
      %v1252 = vmul.f32 %v1249, %v475
      %1256 = vrot.lane.b32.xlu0 %v1250, 98
      %v1257 = vpop.permute.xlu0 %1256
      %1258 = vrot.lane.b32.xlu0 %v1251, 98
      %v1259 = vpop.permute.xlu0 %1258
      %1260 = vrot.lane.b32.xlu0 %v1252, 98
      %v1261 = vpop.permute.xlu0 %1260
      %v1262 = vsel %vm381, %v1257, %v1259
      %v1263 = vsel %vm381, %v1259, %v1261
      %1266 = vst [vmem:[#allocation3 + $0x60] sm:$0xff] %v1262
      %1267 = vst [vmem:[#allocation3 + $0x68] sm:$0xff] %v1263
      %v1268 = vld [vmem:[#allocation2 + $0x8] sm:$0xff]
      %v1269 = vld [vmem:[#allocation2 + $0x10] sm:$0xff]
      %v1270 = vld [vmem:[#allocation2 + $0x18] sm:$0xff]
      %1274 = vrot.lane.b32.xlu0 %v1268, 96
      %v1275 = vpop.permute.xlu0 %1274
      %1276 = vrot.lane.b32.xlu0 %v1269, 96
      %v1277 = vpop.permute.xlu0 %1276
      %1278 = vrot.lane.b32.xlu0 %v1270, 96
      %v1279 = vpop.permute.xlu0 %1278
      %v1280 = vsel %vm510, %v1275, %v1277
      %v1281 = vsel %vm510, %v1277, %v1279
      %1284 = vst [vmem:[#allocation3 + $0x70] sm:$0xff] %v1280
      %1285 = vst [vmem:[#allocation3 + $0x78] sm:$0xff] %v1281
      %v1286 = vld [vmem:[#allocation2 + $0x8] sm:$0xff]
      %v1287 = vld [vmem:[#allocation2 + $0x10] sm:$0xff]
      %v1288 = vld [vmem:[#allocation2 + $0x18] sm:$0xff]
      %v1289 = vmul.f32 %v1286, %v521
      %v1290 = vmul.f32 %v1287, %v524
      %v1291 = vmul.f32 %v1288, %v523
      %1295 = vrot.lane.b32.xlu0 %v1289, 94
      %v1296 = vpop.permute.xlu0 %1295
      %1297 = vrot.lane.b32.xlu0 %v1290, 94
      %v1298 = vpop.permute.xlu0 %1297
      %1299 = vrot.lane.b32.xlu0 %v1291, 94
      %v1300 = vpop.permute.xlu0 %1299
      %v1301 = vsel %vm331, %v1296, %v1298
      %v1302 = vsel %vm331, %v1298, %v1300
      %1305 = vst [vmem:[#allocation3 + $0x80] sm:$0xff] %v1301
      %1306 = vst [vmem:[#allocation3 + $0x88] sm:$0xff] %v1302
      %v1307 = vld [vmem:[#allocation2] sm:$0xff]
      %v1308 = vld [vmem:[#allocation2 + $0x8] sm:$0xff]
      %v1309 = vld [vmem:[#allocation2 + $0x10] sm:$0xff]
      %v1310 = vmul.f32 %v1307, %v550
      %v1311 = vmul.f32 %v1308, %v554
      %v1312 = vmul.f32 %v1309, %v552
      %1316 = vrot.lane.b32.xlu0 %v1310, 68
      %v1317 = vpop.permute.xlu0 %1316
      %1318 = vrot.lane.b32.xlu0 %v1311, 68
      %v1319 = vpop.permute.xlu0 %1318
      %1320 = vrot.lane.b32.xlu0 %v1312, 68
      %v1321 = vpop.permute.xlu0 %1320
      %v1322 = vsel %vm570, %v1317, %v1319
      %v1323 = vsel %vm570, %v1319, %v1321
      %1326 = vst [vmem:[#allocation3 + $0x90] sm:$0xff] %v1322
      %1327 = vst [vmem:[#allocation3 + $0x98] sm:$0xff] %v1323
      %v1328 = vld [vmem:[#allocation2] sm:$0xff]
      %v1329 = vld [vmem:[#allocation2 + $0x8] sm:$0xff]
      %v1330 = vld [vmem:[#allocation2 + $0x10] sm:$0xff]
      %1334 = vrot.lane.b32.xlu0 %v1328, 64
      %v1335 = vpop.permute.xlu0 %1334
      %1336 = vrot.lane.b32.xlu0 %v1329, 64
      %v1337 = vpop.permute.xlu0 %1336
      %1338 = vrot.lane.b32.xlu0 %v1330, 64
      %v1339 = vpop.permute.xlu0 %1338
      %v1340 = vsel %vm589, %v1335, %v1337
      %v1341 = vsel %vm589, %v1337, %v1339
      %1344 = vst [vmem:[#allocation3 + $0xa0] sm:$0xff] %v1340
      %1345 = vst [vmem:[#allocation3 + $0xa8] sm:$0xff] %v1341
      %v1346 = vld [vmem:[#allocation2] sm:$0xff]
      %v1347 = vld [vmem:[#allocation2 + $0x8] sm:$0xff]
      %v1348 = vld [vmem:[#allocation2 + $0x10] sm:$0xff]
      %v1349 = vmul.f32 %v1346, %v600
      %v1350 = vmul.f32 %v1347, %v603
      %v1351 = vmul.f32 %v1348, %v602
      %1355 = vrot.lane.b32.xlu0 %v1349, 60
      %v1356 = vpop.permute.xlu0 %1355
      %1357 = vrot.lane.b32.xlu0 %v1350, 60
      %v1358 = vpop.permute.xlu0 %1357
      %1359 = vrot.lane.b32.xlu0 %v1351, 60
      %v1360 = vpop.permute.xlu0 %1359
      %v1361 = vsel %vm553, %v1356, %v1358
      %v1362 = vsel %vm553, %v1358, %v1360
      %1365 = vst [vmem:[#allocation3 + $0xb0] sm:$0xff] %v1361
      %1366 = vst [vmem:[#allocation3 + $0xb8] sm:$0xff] %v1362
      %v1367 = vld [vmem:[#allocation2] sm:$0xff]
      %v1368 = vld [vmem:[#allocation2 + $0x8] sm:$0xff]
      %v1369 = vld [vmem:[#allocation2 + $0x10] sm:$0xff]
      %v1370 = vmul.f32 %v1367, %v629
      %v1371 = vmul.f32 %v1368, %v633
      %v1372 = vmul.f32 %v1369, %v631
      %1376 = vrot.lane.b32.xlu0 %v1370, 4
      %v1377 = vpop.permute.xlu0 %1376
      %1378 = vrot.lane.b32.xlu0 %v1371, 4
      %v1379 = vpop.permute.xlu0 %1378
      %1380 = vrot.lane.b32.xlu0 %v1372, 4
      %v1381 = vpop.permute.xlu0 %1380
      %v1382 = vsel %vm649, %v1377, %v1379
      %v1383 = vsel %vm649, %v1379, %v1381
      %1386 = vst [vmem:[#allocation3 + $0xc0] sm:$0xff] %v1382
      %1387 = vst [vmem:[#allocation3 + $0xc8] sm:$0xff] %v1383
      %v1388 = vld [vmem:[#allocation2 + $0x8] sm:$0xff]
      %v1389 = vld [vmem:[#allocation2 + $0x10] sm:$0xff]
      %1390 = vst [vmem:[#allocation3 + $0xd0] sm:$0xff] %v1388
      %1391 = vst [vmem:[#allocation3 + $0xd8] sm:$0xff] %v1389
      %v1392 = vld [vmem:[#allocation2 + $0x8] sm:$0xff]
      %v1393 = vld [vmem:[#allocation2 + $0x10] sm:$0xff]
      %v1394 = vld [vmem:[#allocation2 + $0x18] sm:$0xff]
      %v1395 = vmul.f32 %v1392, %v664
      %v1396 = vmul.f32 %v1393, %v667
      %v1397 = vmul.f32 %v1394, %v666
      %1401 = vrot.lane.b32.xlu0 %v1395, 124
      %v1402 = vpop.permute.xlu0 %1401
      %1403 = vrot.lane.b32.xlu0 %v1396, 124
      %v1404 = vpop.permute.xlu0 %1403
      %1405 = vrot.lane.b32.xlu0 %v1397, 124
      %v1406 = vpop.permute.xlu0 %1405
      %v1407 = vsel %vm632, %v1402, %v1404
      %v1408 = vsel %vm632, %v1404, %v1406
      %1411 = vst [vmem:[#allocation3 + $0xe0] sm:$0xff] %v1407
      %1412 = vst [vmem:[#allocation3 + $0xe8] sm:$0xff] %v1408
      %v1413 = vld [vmem:[#allocation2 + $0x8] sm:$0xff]
      %v1414 = vld [vmem:[#allocation2 + $0x10] sm:$0xff]
      %v1415 = vld [vmem:[#allocation2 + $0x18] sm:$0xff]
      %v1416 = vmul.f32 %v1413, %v550
      %v1417 = vmul.f32 %v1414, %v554
      %v1418 = vmul.f32 %v1415, %v552
      %1422 = vrot.lane.b32.xlu0 %v1416, 68
      %v1423 = vpop.permute.xlu0 %1422
      %1424 = vrot.lane.b32.xlu0 %v1417, 68
      %v1425 = vpop.permute.xlu0 %1424
      %1426 = vrot.lane.b32.xlu0 %v1418, 68
      %v1427 = vpop.permute.xlu0 %1426
      %v1428 = vsel %vm570, %v1423, %v1425
      %v1429 = vsel %vm570, %v1425, %v1427
      %1432 = vst [vmem:[#allocation3 + $0xf0] sm:$0xff] %v1428
      %1433 = vst [vmem:[#allocation3 + $0xf8] sm:$0xff] %v1429
      %v1434 = vld [vmem:[#allocation2 + $0x8] sm:$0xff]
      %v1435 = vld [vmem:[#allocation2 + $0x10] sm:$0xff]
      %v1436 = vld [vmem:[#allocation2 + $0x18] sm:$0xff]
      %1440 = vrot.lane.b32.xlu0 %v1434, 64
      %v1441 = vpop.permute.xlu0 %1440
      %1442 = vrot.lane.b32.xlu0 %v1435, 64
      %v1443 = vpop.permute.xlu0 %1442
      %1444 = vrot.lane.b32.xlu0 %v1436, 64
      %v1445 = vpop.permute.xlu0 %1444
      %v1446 = vsel %vm589, %v1441, %v1443
      %v1447 = vsel %vm589, %v1443, %v1445
      %1450 = vst [vmem:[#allocation3 + $0x100] sm:$0xff] %v1446
      %1451 = vst [vmem:[#allocation3 + $0x108] sm:$0xff] %v1447
      %v1452 = vld [vmem:[#allocation2 + $0x8] sm:$0xff]
      %v1453 = vld [vmem:[#allocation2 + $0x10] sm:$0xff]
      %v1454 = vld [vmem:[#allocation2 + $0x18] sm:$0xff]
      %v1455 = vmul.f32 %v1452, %v600
      %v1456 = vmul.f32 %v1453, %v603
      %v1457 = vmul.f32 %v1454, %v602
      %1461 = vrot.lane.b32.xlu0 %v1455, 60
      %v1462 = vpop.permute.xlu0 %1461
      %1463 = vrot.lane.b32.xlu0 %v1456, 60
      %v1464 = vpop.permute.xlu0 %1463
      %1465 = vrot.lane.b32.xlu0 %v1457, 60
      %v1466 = vpop.permute.xlu0 %1465
      %v1467 = vsel %vm553, %v1462, %v1464
      %v1468 = vsel %vm553, %v1464, %v1466
      %1471 = vst [vmem:[#allocation3 + $0x110] sm:$0xff] %v1467
      %1472 = vst [vmem:[#allocation3 + $0x118] sm:$0xff] %v1468
      %v1473 = vld [vmem:[#allocation2] sm:$0xff]
      %v1474 = vld [vmem:[#allocation2 + $0x8] sm:$0xff]
      %v1475 = vld [vmem:[#allocation2 + $0x10] sm:$0xff]
      %v1476 = vmul.f32 %v1473, %v753
      %v1477 = vmul.f32 %v1474, %v757
      %v1478 = vmul.f32 %v1475, %v755
      %1482 = vrot.lane.b32.xlu0 %v1476, 17
      %v1483 = vpop.permute.xlu0 %1482
      %1484 = vrot.lane.b32.xlu0 %v1477, 17
      %v1485 = vpop.permute.xlu0 %1484
      %1486 = vrot.lane.b32.xlu0 %v1478, 17
      %v1487 = vpop.permute.xlu0 %1486
      %v1488 = vsel %vm773, %v1483, %v1485
      %v1489 = vsel %vm773, %v1485, %v1487
      %1492 = vst [vmem:[#allocation3 + $0x120] sm:$0xff] %v1488
      %1493 = vst [vmem:[#allocation3 + $0x128] sm:$0xff] %v1489
      %v1494 = vld [vmem:[#allocation2] sm:$0xff]
      %v1495 = vld [vmem:[#allocation2 + $0x8] sm:$0xff]
      %v1496 = vld [vmem:[#allocation2 + $0x10] sm:$0xff]
      %1500 = vrot.lane.b32.xlu0 %v1494, 16
      %v1501 = vpop.permute.xlu0 %1500
      %1502 = vrot.lane.b32.xlu0 %v1495, 16
      %v1503 = vpop.permute.xlu0 %1502
      %1504 = vrot.lane.b32.xlu0 %v1496, 16
      %v1505 = vpop.permute.xlu0 %1504
      %v1506 = vsel %vm792, %v1501, %v1503
      %v1507 = vsel %vm792, %v1503, %v1505
      %1510 = vst [vmem:[#allocation3 + $0x130] sm:$0xff] %v1506
      %1511 = vst [vmem:[#allocation3 + $0x138] sm:$0xff] %v1507
      %v1512 = vld [vmem:[#allocation2] sm:$0xff]
      %v1513 = vld [vmem:[#allocation2 + $0x8] sm:$0xff]
      %v1514 = vld [vmem:[#allocation2 + $0x10] sm:$0xff]
      %v1515 = vmul.f32 %v1512, %v803
      %v1516 = vmul.f32 %v1513, %v807
      %v1517 = vmul.f32 %v1514, %v805
      %1521 = vrot.lane.b32.xlu0 %v1515, 15
      %v1522 = vpop.permute.xlu0 %1521
      %1523 = vrot.lane.b32.xlu0 %v1516, 15
      %v1524 = vpop.permute.xlu0 %1523
      %1525 = vrot.lane.b32.xlu0 %v1517, 15
      %v1526 = vpop.permute.xlu0 %1525
      %v1527 = vsel %vm823, %v1522, %v1524
      %v1528 = vsel %vm823, %v1524, %v1526
      %1531 = vst [vmem:[#allocation3 + $0x140] sm:$0xff] %v1527
      %1532 = vst [vmem:[#allocation3 + $0x148] sm:$0xff] %v1528
      %v1533 = vld [vmem:[#allocation2] sm:$0xff]
      %v1534 = vld [vmem:[#allocation2 + $0x8] sm:$0xff]
      %v1535 = vld [vmem:[#allocation2 + $0x10] sm:$0xff]
      %v1536 = vmul.f32 %v1533, %v834
      %v1537 = vmul.f32 %v1534, %v838
      %v1538 = vmul.f32 %v1535, %v836
      %1542 = vrot.lane.b32.xlu0 %v1536, 1
      %v1543 = vpop.permute.xlu0 %1542
      %1544 = vrot.lane.b32.xlu0 %v1537, 1
      %v1545 = vpop.permute.xlu0 %1544
      %1546 = vrot.lane.b32.xlu0 %v1538, 1
      %v1547 = vpop.permute.xlu0 %1546
      %v1548 = vsel %vm854, %v1543, %v1545
      %v1549 = vsel %vm854, %v1545, %v1547
      %1552 = vst [vmem:[#allocation3 + $0x150] sm:$0xff] %v1548
      %1553 = vst [vmem:[#allocation3 + $0x158] sm:$0xff] %v1549
      %v1554 = vld [vmem:[#allocation2 + $0x8] sm:$0xff]
      %v1555 = vld [vmem:[#allocation2 + $0x10] sm:$0xff]
      %1556 = vst [vmem:[#allocation3 + $0x160] sm:$0xff] %v1554
      %1557 = vst [vmem:[#allocation3 + $0x168] sm:$0xff] %v1555
      %v1558 = vld [vmem:[#allocation2 + $0x8] sm:$0xff]
      %v1559 = vld [vmem:[#allocation2 + $0x10] sm:$0xff]
      %v1560 = vld [vmem:[#allocation2 + $0x18] sm:$0xff]
      %v1561 = vmul.f32 %v1558, %v869
      %v1562 = vmul.f32 %v1559, %v872
      %v1563 = vmul.f32 %v1560, %v871
      %1567 = vrot.lane.b32.xlu0 %v1561, 127
      %v1568 = vpop.permute.xlu0 %1567
      %1569 = vrot.lane.b32.xlu0 %v1562, 127
      %v1570 = vpop.permute.xlu0 %1569
      %1571 = vrot.lane.b32.xlu0 %v1563, 127
      %v1572 = vpop.permute.xlu0 %1571
      %v1573 = vsel %vm837, %v1568, %v1570
      %v1574 = vsel %vm837, %v1570, %v1572
      %1577 = vst [vmem:[#allocation3 + $0x170] sm:$0xff] %v1573
      %1578 = vst [vmem:[#allocation3 + $0x178] sm:$0xff] %v1574
      %v1579 = vld [vmem:[#allocation2 + $0x8] sm:$0xff]
      %v1580 = vld [vmem:[#allocation2 + $0x10] sm:$0xff]
      %v1581 = vld [vmem:[#allocation2 + $0x18] sm:$0xff]
      %v1582 = vmul.f32 %v1579, %v898
      %v1583 = vmul.f32 %v1580, %v901
      %v1584 = vmul.f32 %v1581, %v900
      %1588 = vrot.lane.b32.xlu0 %v1582, 113
      %v1589 = vpop.permute.xlu0 %1588
      %1590 = vrot.lane.b32.xlu0 %v1583, 113
      %v1591 = vpop.permute.xlu0 %1590
      %1592 = vrot.lane.b32.xlu0 %v1584, 113
      %v1593 = vpop.permute.xlu0 %1592
      %v1594 = vsel %vm806, %v1589, %v1591
      %v1595 = vsel %vm806, %v1591, %v1593
      %1598 = vst [vmem:[#allocation3 + $0x180] sm:$0xff] %v1594
      %1599 = vst [vmem:[#allocation3 + $0x188] sm:$0xff] %v1595
      %v1600 = vld [vmem:[#allocation2 + $0x8] sm:$0xff]
      %v1601 = vld [vmem:[#allocation2 + $0x10] sm:$0xff]
      %v1602 = vld [vmem:[#allocation2 + $0x18] sm:$0xff]
      %1606 = vrot.lane.b32.xlu0 %v1600, 112
      %v1607 = vpop.permute.xlu0 %1606
      %1608 = vrot.lane.b32.xlu0 %v1601, 112
      %v1609 = vpop.permute.xlu0 %1608
      %1610 = vrot.lane.b32.xlu0 %v1602, 112
      %v1611 = vpop.permute.xlu0 %1610
      %v1612 = vsel %vm935, %v1607, %v1609
      %v1613 = vsel %vm935, %v1609, %v1611
      %1616 = vst [vmem:[#allocation3 + $0x190] sm:$0xff] %v1612
      %1617 = vst [vmem:[#allocation3 + $0x198] sm:$0xff] %v1613
      %v1618 = vld [vmem:[#allocation2 + $0x8] sm:$0xff]
      %v1619 = vld [vmem:[#allocation2 + $0x10] sm:$0xff]
      %v1620 = vld [vmem:[#allocation2 + $0x18] sm:$0xff]
      %v1621 = vmul.f32 %v1618, %v946
      %v1622 = vmul.f32 %v1619, %v949
      %v1623 = vmul.f32 %v1620, %v948
      %1627 = vrot.lane.b32.xlu0 %v1621, 111
      %v1628 = vpop.permute.xlu0 %1627
      %1629 = vrot.lane.b32.xlu0 %v1622, 111
      %v1630 = vpop.permute.xlu0 %1629
      %1631 = vrot.lane.b32.xlu0 %v1623, 111
      %v1632 = vpop.permute.xlu0 %1631
      %v1633 = vsel %vm756, %v1628, %v1630
      %v1634 = vsel %vm756, %v1630, %v1632
      %1637 = vst [vmem:[#allocation3 + $0x1a0] sm:$0xff] %v1633
      %1638 = vst [vmem:[#allocation3 + $0x1a8] sm:$0xff] %v1634
      %s1639 = scalar_lea.vmem %s1, 16
      %v1640 = vld [vmem:[%s1639] sm:$0xff]
      %v1641 = vld [vmem:[%s1639 + $0x8] sm:$0xff]
      %v1642 = vld [vmem:[#allocation3] sm:$0xff]
      %v1643 = vld [vmem:[#allocation3 + $0x8] sm:$0xff]
      %v1644 = vld [vmem:[#allocation3 + $0x10] sm:$0xff]
      %v1645 = vld [vmem:[#allocation3 + $0x18] sm:$0xff]
      %v1646 = vld [vmem:[#allocation3 + $0x20] sm:$0xff]
      %v1647 = vld [vmem:[#allocation3 + $0x28] sm:$0xff]
      %v1648 = vld [vmem:[#allocation3 + $0x30] sm:$0xff]
      %v1649 = vld [vmem:[#allocation3 + $0x38] sm:$0xff]
      %v1650 = vld [vmem:[#allocation3 + $0x40] sm:$0xff]
      %v1651 = vld [vmem:[#allocation3 + $0x48] sm:$0xff]
      %v1652 = vld [vmem:[#allocation3 + $0x50] sm:$0xff]
      %v1653 = vld [vmem:[#allocation3 + $0x58] sm:$0xff]
      %v1654 = vld [vmem:[#allocation3 + $0x60] sm:$0xff]
      %v1655 = vld [vmem:[#allocation3 + $0x68] sm:$0xff]
      %v1656 = vld [vmem:[#allocation3 + $0x70] sm:$0xff]
      %v1657 = vld [vmem:[#allocation3 + $0x78] sm:$0xff]
      %v1658 = vld [vmem:[#allocation3 + $0x80] sm:$0xff]
      %v1659 = vld [vmem:[#allocation3 + $0x88] sm:$0xff]
      %v1660 = vld [vmem:[#allocation3 + $0x90] sm:$0xff]
      %v1661 = vld [vmem:[#allocation3 + $0x98] sm:$0xff]
      %v1662 = vld [vmem:[#allocation3 + $0xa0] sm:$0xff]
      %v1663 = vld [vmem:[#allocation3 + $0xa8] sm:$0xff]
      %v1664 = vld [vmem:[#allocation3 + $0xb0] sm:$0xff]
      %v1665 = vld [vmem:[#allocation3 + $0xb8] sm:$0xff]
      %v1666 = vld [vmem:[#allocation3 + $0xc0] sm:$0xff]
      %v1667 = vld [vmem:[#allocation3 + $0xc8] sm:$0xff]
      %v1668 = vld [vmem:[#allocation3 + $0xd0] sm:$0xff]
      %v1669 = vld [vmem:[#allocation3 + $0xd8] sm:$0xff]
      %v1670 = vld [vmem:[#allocation3 + $0xe0] sm:$0xff]
      %v1671 = vld [vmem:[#allocation3 + $0xe8] sm:$0xff]
      %v1672 = vld [vmem:[#allocation3 + $0xf0] sm:$0xff]
      %v1673 = vld [vmem:[#allocation3 + $0xf8] sm:$0xff]
      %v1674 = vld [vmem:[#allocation3 + $0x100] sm:$0xff]
      %v1675 = vld [vmem:[#allocation3 + $0x108] sm:$0xff]
      %v1676 = vld [vmem:[#allocation3 + $0x110] sm:$0xff]
      %v1677 = vld [vmem:[#allocation3 + $0x118] sm:$0xff]
      %v1678 = vld [vmem:[#allocation3 + $0x120] sm:$0xff]
      %v1679 = vld [vmem:[#allocation3 + $0x128] sm:$0xff]
      %v1680 = vld [vmem:[#allocation3 + $0x130] sm:$0xff]
      %v1681 = vld [vmem:[#allocation3 + $0x138] sm:$0xff]
      %v1682 = vld [vmem:[#allocation3 + $0x140] sm:$0xff]
      %v1683 = vld [vmem:[#allocation3 + $0x148] sm:$0xff]
      %v1684 = vld [vmem:[#allocation3 + $0x150] sm:$0xff]
      %v1685 = vld [vmem:[#allocation3 + $0x158] sm:$0xff]
      %v1686 = vld [vmem:[#allocation3 + $0x160] sm:$0xff]
      %v1687 = vld [vmem:[#allocation3 + $0x168] sm:$0xff]
      %v1688 = vld [vmem:[#allocation3 + $0x170] sm:$0xff]
      %v1689 = vld [vmem:[#allocation3 + $0x178] sm:$0xff]
      %v1690 = vld [vmem:[#allocation3 + $0x180] sm:$0xff]
      %v1691 = vld [vmem:[#allocation3 + $0x188] sm:$0xff]
      %v1692 = vld [vmem:[#allocation3 + $0x190] sm:$0xff]
      %v1693 = vld [vmem:[#allocation3 + $0x198] sm:$0xff]
      %v1694 = vld [vmem:[#allocation3 + $0x1a0] sm:$0xff]
      %v1695 = vld [vmem:[#allocation3 + $0x1a8] sm:$0xff]
      %v1697 = vsel %vm1027, %v1641, 0
      %1699 = vmatprep.subr.mxu0 %v1643
      %1700 = vmatpush1.msra.mxu0 %v1642
      %1701 = vmatprep.subr.mxu0 %v1645
      %1702 = vmatpush1.msra.mxu0 %v1644
      %1703 = vmatprep.subr.mxu0 %v1647
      %1704 = vmatpush1.msra.mxu0 %v1646
      %1705 = vmatprep.subr.mxu0 %v1649
      %1706 = vmatpush1.msra.mxu0 %v1648
      %1707 = vmatprep.subr.mxu0 %v1651
      %1708 = vmatpush1.msra.mxu0 %v1650
      %1709 = vmatprep.subr.mxu0 %v1653
      %1710 = vmatpush1.msra.mxu0 %v1652
      %1711 = vmatprep.subr.mxu0 %v1655
      %1712 = vmatpush1.msra.mxu0 %v1654
      %1713 = vmatprep.subr.mxu0 %v1657
      %1714 = vmatpush1.msra.mxu0 %v1656
      %1715 = vmatprep.subr.mxu0 %v1659
      %1716 = vmatpush1.msra.mxu0 %v1658
      %1717 = vmatprep.subr.mxu0 %v1661
      %1718 = vmatpush1.msra.mxu0 %v1660
      %1719 = vmatprep.subr.mxu0 %v1663
      %1720 = vmatpush1.msra.mxu0 %v1662
      %1721 = vmatprep.subr.mxu0 %v1665
      %1722 = vmatpush1.msra.mxu0 %v1664
      %1723 = vmatprep.subr.mxu0 %v1667
      %1724 = vmatpush1.msra.mxu0 %v1666
      %1725 = vmatprep.subr.mxu0 %v1669
      %1726 = vmatpush1.msra.mxu0 %v1668
      %1727 = vmatprep.subr.mxu0 %v1671
      %1728 = vmatpush1.msra.mxu0 %v1670
      %1729 = vmatprep.subr.mxu0 %v1673
      %1730 = vmatpush1.msra.mxu0 %v1672
      %1731 = vmatprep.subr.mxu0 %v1675
      %1732 = vmatpush1.msra.mxu0 %v1674
      %1733 = vmatprep.subr.mxu0 %v1677
      %1734 = vmatpush1.msra.mxu0 %v1676
      %1735 = vmatprep.subr.mxu0 %v1679
      %1736 = vmatpush1.msra.mxu0 %v1678
      %1737 = vmatprep.subr.mxu0 %v1681
      %1738 = vmatpush1.msra.mxu0 %v1680
      %1739 = vmatprep.subr.mxu0 %v1683
      %1740 = vmatpush1.msra.mxu0 %v1682
      %1741 = vmatprep.subr.mxu0 %v1685
      %1742 = vmatpush1.msra.mxu0 %v1684
      %1743 = vmatprep.subr.mxu0 %v1687
      %1744 = vmatpush1.msra.mxu0 %v1686
      %1745 = vmatprep.subr.mxu0 %v1689
      %1746 = vmatpush1.msra.mxu0 %v1688
      %1747 = vmatprep.subr.mxu0 %v1691
      %1748 = vmatpush1.msra.mxu0 %v1690
      %1749 = vmatprep.subr.mxu0 %v1693
      %1750 = vmatpush1.msra.mxu0 %v1692
      %1751 = vmatprep.subr.mxu0 %v1695
      %1752 = vmatpush1.msra.mxu0 %v1694
      %1753 = vmatprep.subr.mxu0 0.0
      %1754 = vmatpush1.msra.mxu0 0.0
      %1755 = vmatprep.subr.mxu0 0.0
      %1756 = vmatpush1.msra.mxu0 0.0
      %1757 = vmatprep.subr.mxu0 0.0
      %1758 = vmatpush1.msra.mxu0 0.0
      %1759 = vmatprep.subr.mxu0 0.0
      %1760 = vmatpush1.msra.mxu0 0.0
      %1761 = vmatprep.subr.mxu0 0.0
      %1762 = vmatpush1.msra.mxu0 0.0
      %1763 = vmatprep.mubr.f32.mxu0 %v1697
      %1764 = vmatmul.mubr.f32.gmra.mrb[0].mxu0 %v1640
      %v1765 = vpop.f32.mrb[0].mxu0
      %v1766 = vadd.f32 0.0, %v1765
      %v1767 = vpop.f32.mrb[0].mxu0
      %v1768 = vadd.f32 0.0, %v1767
      %1769 = vdwg.mxu0
      %v1770 = vld [vmem:[%s2] sm:$0xff]
      %v1771 = vadd.f32 %v1766, %v1768
      %1772 = vadd.xlane.f32.xlu0 %v1771
      %v1773 = vpop.xlane.xlu0 %1772
      %v1774 = vmul.f32 %v1773, %v1106
      %v1775 = vmul.f32 %v1766, %v1766
      %v1776 = vmul.f32 %v1768, %v1768
      %v1777 = vadd.f32 %v1775, %v1776
      %1778 = vadd.xlane.f32.xlu0 %v1777
      %v1779 = vpop.xlane.xlu0 %1778
      %v1780 = vmul.f32 %v1779, %v1106
      %v1781 = vmul.f32 %v1774, %v1774
      %v1782 = vsub.f32 %v1780, %v1781
      %v1783 = vsub.f32 %v1766, %v1774
      %v1784 = vsub.f32 %v1768, %v1774
      %v1785 = vadd.f32 %v1782, 1e-05
      %v1786 = vrsqrt.pop %v1785
      %v1787 = vmul.f32 %v1783, %v1786
      %v1788 = vmul.f32 %v1784, %v1786
      %1790 = vset.pattern.permute.xlu0 2
      %1791 = vperm.xlu0 %1790, %v1770
      %v1792 = vpop.permute.xlu0 %1791
      %v1794 = vmul.f32 %v1787, %v1792
      %v1795 = vmul.f32 %v1788, %v1792
      %1796 = vset.pattern.permute.xlu0 3
      %1797 = vperm.xlu0 %1796, %v1770
      %v1798 = vpop.permute.xlu0 %1797
      %v1800 = vadd.f32 %v1794, %v1798
      %v1801 = vadd.f32 %v1795, %v1798
      %v1802 = vadd.f32 %v320, %v1800
      %v1803 = vadd.f32 %v321, %v1801
      %v1804 = vmax.f32 %v1802, 0.0
      %v1805 = vmax.f32 %v1803, 0.0
      %1806 = vst [vmem:[#allocation2 + $0x8] sm:$0xff] %v1804
      %1807 = vst [vmem:[#allocation2 + $0x10] sm:$0xff] %v1805
      %v1808 = vld [vmem:[#allocation2] sm:$0xff]
      %v1809 = vld [vmem:[#allocation2 + $0x8] sm:$0xff]
      %v1810 = vld [vmem:[#allocation2 + $0x10] sm:$0xff]
      %v1811 = vmul.f32 %v1808, %v328
      %v1812 = vmul.f32 %v1809, %v332
      %v1813 = vmul.f32 %v1810, %v330
      %1817 = vrot.lane.b32.xlu0 %v1811, 34
      %v1818 = vpop.permute.xlu0 %1817
      %1819 = vrot.lane.b32.xlu0 %v1812, 34
      %v1820 = vpop.permute.xlu0 %1819
      %1821 = vrot.lane.b32.xlu0 %v1813, 34
      %v1822 = vpop.permute.xlu0 %1821
      %v1823 = vsel %vm348, %v1818, %v1820
      %v1824 = vsel %vm348, %v1820, %v1822
      %1827 = vst [vmem:[#allocation3] sm:$0xff] %v1823
      %1828 = vst [vmem:[#allocation3 + $0x8] sm:$0xff] %v1824
      %v1829 = vld [vmem:[#allocation2] sm:$0xff]
      %v1830 = vld [vmem:[#allocation2 + $0x8] sm:$0xff]
      %v1831 = vld [vmem:[#allocation2 + $0x10] sm:$0xff]
      %1835 = vrot.lane.b32.xlu0 %v1829, 32
      %v1836 = vpop.permute.xlu0 %1835
      %1837 = vrot.lane.b32.xlu0 %v1830, 32
      %v1838 = vpop.permute.xlu0 %1837
      %1839 = vrot.lane.b32.xlu0 %v1831, 32
      %v1840 = vpop.permute.xlu0 %1839
      %v1841 = vsel %vm367, %v1836, %v1838
      %v1842 = vsel %vm367, %v1838, %v1840
      %1845 = vst [vmem:[#allocation3 + $0x10] sm:$0xff] %v1841
      %1846 = vst [vmem:[#allocation3 + $0x18] sm:$0xff] %v1842
      %v1847 = vld [vmem:[#allocation2] sm:$0xff]
      %v1848 = vld [vmem:[#allocation2 + $0x8] sm:$0xff]
      %v1849 = vld [vmem:[#allocation2 + $0x10] sm:$0xff]
      %v1850 = vmul.f32 %v1847, %v378
      %v1851 = vmul.f32 %v1848, %v382
      %v1852 = vmul.f32 %v1849, %v380
      %1856 = vrot.lane.b32.xlu0 %v1850, 30
      %v1857 = vpop.permute.xlu0 %1856
      %1858 = vrot.lane.b32.xlu0 %v1851, 30
      %v1859 = vpop.permute.xlu0 %1858
      %1860 = vrot.lane.b32.xlu0 %v1852, 30
      %v1861 = vpop.permute.xlu0 %1860
      %v1862 = vsel %vm398, %v1857, %v1859
      %v1863 = vsel %vm398, %v1859, %v1861
      %1866 = vst [vmem:[#allocation3 + $0x20] sm:$0xff] %v1862
      %1867 = vst [vmem:[#allocation3 + $0x28] sm:$0xff] %v1863
      %v1868 = vld [vmem:[#allocation2] sm:$0xff]
      %v1869 = vld [vmem:[#allocation2 + $0x8] sm:$0xff]
      %v1870 = vld [vmem:[#allocation2 + $0x10] sm:$0xff]
      %v1871 = vmul.f32 %v1868, %v409
      %v1872 = vmul.f32 %v1869, %v413
      %v1873 = vmul.f32 %v1870, %v411
      %1877 = vrot.lane.b32.xlu0 %v1871, 2
      %v1878 = vpop.permute.xlu0 %1877
      %1879 = vrot.lane.b32.xlu0 %v1872, 2
      %v1880 = vpop.permute.xlu0 %1879
      %1881 = vrot.lane.b32.xlu0 %v1873, 2
      %v1882 = vpop.permute.xlu0 %1881
      %v1883 = vsel %vm429, %v1878, %v1880
      %v1884 = vsel %vm429, %v1880, %v1882
      %1887 = vst [vmem:[#allocation3 + $0x30] sm:$0xff] %v1883
      %1888 = vst [vmem:[#allocation3 + $0x38] sm:$0xff] %v1884
      %v1889 = vld [vmem:[#allocation2 + $0x8] sm:$0xff]
      %v1890 = vld [vmem:[#allocation2 + $0x10] sm:$0xff]
      %1891 = vst [vmem:[#allocation3 + $0x40] sm:$0xff] %v1889
      %1892 = vst [vmem:[#allocation3 + $0x48] sm:$0xff] %v1890
      %v1893 = vld [vmem:[#allocation2 + $0x8] sm:$0xff]
      %v1894 = vld [vmem:[#allocation2 + $0x10] sm:$0xff]
      %v1895 = vld [vmem:[#allocation2 + $0x18] sm:$0xff]
      %v1896 = vmul.f32 %v1893, %v444
      %v1897 = vmul.f32 %v1894, %v447
      %v1898 = vmul.f32 %v1895, %v446
      %1902 = vrot.lane.b32.xlu0 %v1896, 126
      %v1903 = vpop.permute.xlu0 %1902
      %1904 = vrot.lane.b32.xlu0 %v1897, 126
      %v1905 = vpop.permute.xlu0 %1904
      %1906 = vrot.lane.b32.xlu0 %v1898, 126
      %v1907 = vpop.permute.xlu0 %1906
      %v1908 = vsel %vm412, %v1903, %v1905
      %v1909 = vsel %vm412, %v1905, %v1907
      %1912 = vst [vmem:[#allocation3 + $0x50] sm:$0xff] %v1908
      %1913 = vst [vmem:[#allocation3 + $0x58] sm:$0xff] %v1909
      %v1914 = vld [vmem:[#allocation2 + $0x8] sm:$0xff]
      %v1915 = vld [vmem:[#allocation2 + $0x10] sm:$0xff]
      %v1916 = vld [vmem:[#allocation2 + $0x18] sm:$0xff]
      %v1917 = vmul.f32 %v1914, %v473
      %v1918 = vmul.f32 %v1915, %v476
      %v1919 = vmul.f32 %v1916, %v475
      %1923 = vrot.lane.b32.xlu0 %v1917, 98
      %v1924 = vpop.permute.xlu0 %1923
      %1925 = vrot.lane.b32.xlu0 %v1918, 98
      %v1926 = vpop.permute.xlu0 %1925
      %1927 = vrot.lane.b32.xlu0 %v1919, 98
      %v1928 = vpop.permute.xlu0 %1927
      %v1929 = vsel %vm381, %v1924, %v1926
      %v1930 = vsel %vm381, %v1926, %v1928
      %1933 = vst [vmem:[#allocation3 + $0x60] sm:$0xff] %v1929
      %1934 = vst [vmem:[#allocation3 + $0x68] sm:$0xff] %v1930
      %v1935 = vld [vmem:[#allocation2 + $0x8] sm:$0xff]
      %v1936 = vld [vmem:[#allocation2 + $0x10] sm:$0xff]
      %v1937 = vld [vmem:[#allocation2 + $0x18] sm:$0xff]
      %1941 = vrot.lane.b32.xlu0 %v1935, 96
      %v1942 = vpop.permute.xlu0 %1941
      %1943 = vrot.lane.b32.xlu0 %v1936, 96
      %v1944 = vpop.permute.xlu0 %1943
      %1945 = vrot.lane.b32.xlu0 %v1937, 96
      %v1946 = vpop.permute.xlu0 %1945
      %v1947 = vsel %vm510, %v1942, %v1944
      %v1948 = vsel %vm510, %v1944, %v1946
      %1951 = vst [vmem:[#allocation3 + $0x70] sm:$0xff] %v1947
      %1952 = vst [vmem:[#allocation3 + $0x78] sm:$0xff] %v1948
      %v1953 = vld [vmem:[#allocation2 + $0x8] sm:$0xff]
      %v1954 = vld [vmem:[#allocation2 + $0x10] sm:$0xff]
      %v1955 = vld [vmem:[#allocation2 + $0x18] sm:$0xff]
      %v1956 = vmul.f32 %v1953, %v521
      %v1957 = vmul.f32 %v1954, %v524
      %v1958 = vmul.f32 %v1955, %v523
      %1962 = vrot.lane.b32.xlu0 %v1956, 94
      %v1963 = vpop.permute.xlu0 %1962
      %1964 = vrot.lane.b32.xlu0 %v1957, 94
      %v1965 = vpop.permute.xlu0 %1964
      %1966 = vrot.lane.b32.xlu0 %v1958, 94
      %v1967 = vpop.permute.xlu0 %1966
      %v1968 = vsel %vm331, %v1963, %v1965
      %v1969 = vsel %vm331, %v1965, %v1967
      %1972 = vst [vmem:[#allocation3 + $0x80] sm:$0xff] %v1968
      %1973 = vst [vmem:[#allocation3 + $0x88] sm:$0xff] %v1969
      %v1974 = vld [vmem:[#allocation2] sm:$0xff]
      %v1975 = vld [vmem:[#allocation2 + $0x8] sm:$0xff]
      %v1976 = vld [vmem:[#allocation2 + $0x10] sm:$0xff]
      %v1977 = vmul.f32 %v1974, %v550
      %v1978 = vmul.f32 %v1975, %v554
      %v1979 = vmul.f32 %v1976, %v552
      %1983 = vrot.lane.b32.xlu0 %v1977, 68
      %v1984 = vpop.permute.xlu0 %1983
      %1985 = vrot.lane.b32.xlu0 %v1978, 68
      %v1986 = vpop.permute.xlu0 %1985
      %1987 = vrot.lane.b32.xlu0 %v1979, 68
      %v1988 = vpop.permute.xlu0 %1987
      %v1989 = vsel %vm570, %v1984, %v1986
      %v1990 = vsel %vm570, %v1986, %v1988
      %1993 = vst [vmem:[#allocation3 + $0x90] sm:$0xff] %v1989
      %1994 = vst [vmem:[#allocation3 + $0x98] sm:$0xff] %v1990
      %v1995 = vld [vmem:[#allocation2] sm:$0xff]
      %v1996 = vld [vmem:[#allocation2 + $0x8] sm:$0xff]
      %v1997 = vld [vmem:[#allocation2 + $0x10] sm:$0xff]
      %2001 = vrot.lane.b32.xlu0 %v1995, 64
      %v2002 = vpop.permute.xlu0 %2001
      %2003 = vrot.lane.b32.xlu0 %v1996, 64
      %v2004 = vpop.permute.xlu0 %2003
      %2005 = vrot.lane.b32.xlu0 %v1997, 64
      %v2006 = vpop.permute.xlu0 %2005
      %v2007 = vsel %vm589, %v2002, %v2004
      %v2008 = vsel %vm589, %v2004, %v2006
      %2011 = vst [vmem:[#allocation3 + $0xa0] sm:$0xff] %v2007
      %2012 = vst [vmem:[#allocation3 + $0xa8] sm:$0xff] %v2008
      %v2013 = vld [vmem:[#allocation2] sm:$0xff]
      %v2014 = vld [vmem:[#allocation2 + $0x8] sm:$0xff]
      %v2015 = vld [vmem:[#allocation2 + $0x10] sm:$0xff]
      %v2016 = vmul.f32 %v2013, %v600
      %v2017 = vmul.f32 %v2014, %v603
      %v2018 = vmul.f32 %v2015, %v602
      %2022 = vrot.lane.b32.xlu0 %v2016, 60
      %v2023 = vpop.permute.xlu0 %2022
      %2024 = vrot.lane.b32.xlu0 %v2017, 60
      %v2025 = vpop.permute.xlu0 %2024
      %2026 = vrot.lane.b32.xlu0 %v2018, 60
      %v2027 = vpop.permute.xlu0 %2026
      %v2028 = vsel %vm553, %v2023, %v2025
      %v2029 = vsel %vm553, %v2025, %v2027
      %2032 = vst [vmem:[#allocation3 + $0xb0] sm:$0xff] %v2028
      %2033 = vst [vmem:[#allocation3 + $0xb8] sm:$0xff] %v2029
      %v2034 = vld [vmem:[#allocation2] sm:$0xff]
      %v2035 = vld [vmem:[#allocation2 + $0x8] sm:$0xff]
      %v2036 = vld [vmem:[#allocation2 + $0x10] sm:$0xff]
      %v2037 = vmul.f32 %v2034, %v629
      %v2038 = vmul.f32 %v2035, %v633
      %v2039 = vmul.f32 %v2036, %v631
      %2043 = vrot.lane.b32.xlu0 %v2037, 4
      %v2044 = vpop.permute.xlu0 %2043
      %2045 = vrot.lane.b32.xlu0 %v2038, 4
      %v2046 = vpop.permute.xlu0 %2045
      %2047 = vrot.lane.b32.xlu0 %v2039, 4
      %v2048 = vpop.permute.xlu0 %2047
      %v2049 = vsel %vm649, %v2044, %v2046
      %v2050 = vsel %vm649, %v2046, %v2048
      %2053 = vst [vmem:[#allocation3 + $0xc0] sm:$0xff] %v2049
      %2054 = vst [vmem:[#allocation3 + $0xc8] sm:$0xff] %v2050
      %v2055 = vld [vmem:[#allocation2 + $0x8] sm:$0xff]
      %v2056 = vld [vmem:[#allocation2 + $0x10] sm:$0xff]
      %2057 = vst [vmem:[#allocation3 + $0xd0] sm:$0xff] %v2055
      %2058 = vst [vmem:[#allocation3 + $0xd8] sm:$0xff] %v2056
      %v2059 = vld [vmem:[#allocation2 + $0x8] sm:$0xff]
      %v2060 = vld [vmem:[#allocation2 + $0x10] sm:$0xff]
      %v2061 = vld [vmem:[#allocation2 + $0x18] sm:$0xff]
      %v2062 = vmul.f32 %v2059, %v664
      %v2063 = vmul.f32 %v2060, %v667
      %v2064 = vmul.f32 %v2061, %v666
      %2068 = vrot.lane.b32.xlu0 %v2062, 124
      %v2069 = vpop.permute.xlu0 %2068
      %2070 = vrot.lane.b32.xlu0 %v2063, 124
      %v2071 = vpop.permute.xlu0 %2070
      %2072 = vrot.lane.b32.xlu0 %v2064, 124
      %v2073 = vpop.permute.xlu0 %2072
      %v2074 = vsel %vm632, %v2069, %v2071
      %v2075 = vsel %vm632, %v2071, %v2073
      %2078 = vst [vmem:[#allocation3 + $0xe0] sm:$0xff] %v2074
      %2079 = vst [vmem:[#allocation3 + $0xe8] sm:$0xff] %v2075
      %v2080 = vld [vmem:[#allocation2 + $0x8] sm:$0xff]
      %v2081 = vld [vmem:[#allocation2 + $0x10] sm:$0xff]
      %v2082 = vld [vmem:[#allocation2 + $0x18] sm:$0xff]
      %v2083 = vmul.f32 %v2080, %v550
      %v2084 = vmul.f32 %v2081, %v554
      %v2085 = vmul.f32 %v2082, %v552
      %2089 = vrot.lane.b32.xlu0 %v2083, 68
      %v2090 = vpop.permute.xlu0 %2089
      %2091 = vrot.lane.b32.xlu0 %v2084, 68
      %v2092 = vpop.permute.xlu0 %2091
      %2093 = vrot.lane.b32.xlu0 %v2085, 68
      %v2094 = vpop.permute.xlu0 %2093
      %v2095 = vsel %vm570, %v2090, %v2092
      %v2096 = vsel %vm570, %v2092, %v2094
      %2099 = vst [vmem:[#allocation3 + $0xf0] sm:$0xff] %v2095
      %2100 = vst [vmem:[#allocation3 + $0xf8] sm:$0xff] %v2096
      %v2101 = vld [vmem:[#allocation2 + $0x8] sm:$0xff]
      %v2102 = vld [vmem:[#allocation2 + $0x10] sm:$0xff]
      %v2103 = vld [vmem:[#allocation2 + $0x18] sm:$0xff]
      %2107 = vrot.lane.b32.xlu0 %v2101, 64
      %v2108 = vpop.permute.xlu0 %2107
      %2109 = vrot.lane.b32.xlu0 %v2102, 64
      %v2110 = vpop.permute.xlu0 %2109
      %2111 = vrot.lane.b32.xlu0 %v2103, 64
      %v2112 = vpop.permute.xlu0 %2111
      %v2113 = vsel %vm589, %v2108, %v2110
      %v2114 = vsel %vm589, %v2110, %v2112
      %2117 = vst [vmem:[#allocation3 + $0x100] sm:$0xff] %v2113
      %2118 = vst [vmem:[#allocation3 + $0x108] sm:$0xff] %v2114
      %v2119 = vld [vmem:[#allocation2 + $0x8] sm:$0xff]
      %v2120 = vld [vmem:[#allocation2 + $0x10] sm:$0xff]
      %v2121 = vld [vmem:[#allocation2 + $0x18] sm:$0xff]
      %v2122 = vmul.f32 %v2119, %v600
      %v2123 = vmul.f32 %v2120, %v603
      %v2124 = vmul.f32 %v2121, %v602
      %2128 = vrot.lane.b32.xlu0 %v2122, 60
      %v2129 = vpop.permute.xlu0 %2128
      %2130 = vrot.lane.b32.xlu0 %v2123, 60
      %v2131 = vpop.permute.xlu0 %2130
      %2132 = vrot.lane.b32.xlu0 %v2124, 60
      %v2133 = vpop.permute.xlu0 %2132
      %v2134 = vsel %vm553, %v2129, %v2131
      %v2135 = vsel %vm553, %v2131, %v2133
      %2138 = vst [vmem:[#allocation3 + $0x110] sm:$0xff] %v2134
      %2139 = vst [vmem:[#allocation3 + $0x118] sm:$0xff] %v2135
      %v2140 = vld [vmem:[#allocation2] sm:$0xff]
      %v2141 = vld [vmem:[#allocation2 + $0x8] sm:$0xff]
      %v2142 = vld [vmem:[#allocation2 + $0x10] sm:$0xff]
      %v2143 = vmul.f32 %v2140, %v753
      %v2144 = vmul.f32 %v2141, %v757
      %v2145 = vmul.f32 %v2142, %v755
      %2149 = vrot.lane.b32.xlu0 %v2143, 17
      %v2150 = vpop.permute.xlu0 %2149
      %2151 = vrot.lane.b32.xlu0 %v2144, 17
      %v2152 = vpop.permute.xlu0 %2151
      %2153 = vrot.lane.b32.xlu0 %v2145, 17
      %v2154 = vpop.permute.xlu0 %2153
      %v2155 = vsel %vm773, %v2150, %v2152
      %v2156 = vsel %vm773, %v2152, %v2154
      %2159 = vst [vmem:[#allocation3 + $0x120] sm:$0xff] %v2155
      %2160 = vst [vmem:[#allocation3 + $0x128] sm:$0xff] %v2156
      %v2161 = vld [vmem:[#allocation2] sm:$0xff]
      %v2162 = vld [vmem:[#allocation2 + $0x8] sm:$0xff]
      %v2163 = vld [vmem:[#allocation2 + $0x10] sm:$0xff]
      %2167 = vrot.lane.b32.xlu0 %v2161, 16
      %v2168 = vpop.permute.xlu0 %2167
      %2169 = vrot.lane.b32.xlu0 %v2162, 16
      %v2170 = vpop.permute.xlu0 %2169
      %2171 = vrot.lane.b32.xlu0 %v2163, 16
      %v2172 = vpop.permute.xlu0 %2171
      %v2173 = vsel %vm792, %v2168, %v2170
      %v2174 = vsel %vm792, %v2170, %v2172
      %2177 = vst [vmem:[#allocation3 + $0x130] sm:$0xff] %v2173
      %2178 = vst [vmem:[#allocation3 + $0x138] sm:$0xff] %v2174
      %v2179 = vld [vmem:[#allocation2] sm:$0xff]
      %v2180 = vld [vmem:[#allocation2 + $0x8] sm:$0xff]
      %v2181 = vld [vmem:[#allocation2 + $0x10] sm:$0xff]
      %v2182 = vmul.f32 %v2179, %v803
      %v2183 = vmul.f32 %v2180, %v807
      %v2184 = vmul.f32 %v2181, %v805
      %2188 = vrot.lane.b32.xlu0 %v2182, 15
      %v2189 = vpop.permute.xlu0 %2188
      %2190 = vrot.lane.b32.xlu0 %v2183, 15
      %v2191 = vpop.permute.xlu0 %2190
      %2192 = vrot.lane.b32.xlu0 %v2184, 15
      %v2193 = vpop.permute.xlu0 %2192
      %v2194 = vsel %vm823, %v2189, %v2191
      %v2195 = vsel %vm823, %v2191, %v2193
      %2198 = vst [vmem:[#allocation3 + $0x140] sm:$0xff] %v2194
      %2199 = vst [vmem:[#allocation3 + $0x148] sm:$0xff] %v2195
      %v2200 = vld [vmem:[#allocation2] sm:$0xff]
      %v2201 = vld [vmem:[#allocation2 + $0x8] sm:$0xff]
      %v2202 = vld [vmem:[#allocation2 + $0x10] sm:$0xff]
      %v2203 = vmul.f32 %v2200, %v834
      %v2204 = vmul.f32 %v2201, %v838
      %v2205 = vmul.f32 %v2202, %v836
      %2209 = vrot.lane.b32.xlu0 %v2203, 1
      %v2210 = vpop.permute.xlu0 %2209
      %2211 = vrot.lane.b32.xlu0 %v2204, 1
      %v2212 = vpop.permute.xlu0 %2211
      %2213 = vrot.lane.b32.xlu0 %v2205, 1
      %v2214 = vpop.permute.xlu0 %2213
      %v2215 = vsel %vm854, %v2210, %v2212
      %v2216 = vsel %vm854, %v2212, %v2214
      %2219 = vst [vmem:[#allocation3 + $0x150] sm:$0xff] %v2215
      %2220 = vst [vmem:[#allocation3 + $0x158] sm:$0xff] %v2216
      %v2221 = vld [vmem:[#allocation2 + $0x8] sm:$0xff]
      %v2222 = vld [vmem:[#allocation2 + $0x10] sm:$0xff]
      %2223 = vst [vmem:[#allocation3 + $0x160] sm:$0xff] %v2221
      %2224 = vst [vmem:[#allocation3 + $0x168] sm:$0xff] %v2222
      %v2225 = vld [vmem:[#allocation2 + $0x8] sm:$0xff]
      %v2226 = vld [vmem:[#allocation2 + $0x10] sm:$0xff]
      %v2227 = vld [vmem:[#allocation2 + $0x18] sm:$0xff]
      %v2228 = vmul.f32 %v2225, %v869
      %v2229 = vmul.f32 %v2226, %v872
      %v2230 = vmul.f32 %v2227, %v871
      %2234 = vrot.lane.b32.xlu0 %v2228, 127
      %v2235 = vpop.permute.xlu0 %2234
      %2236 = vrot.lane.b32.xlu0 %v2229, 127
      %v2237 = vpop.permute.xlu0 %2236
      %2238 = vrot.lane.b32.xlu0 %v2230, 127
      %v2239 = vpop.permute.xlu0 %2238
      %v2240 = vsel %vm837, %v2235, %v2237
      %v2241 = vsel %vm837, %v2237, %v2239
      %2244 = vst [vmem:[#allocation3 + $0x170] sm:$0xff] %v2240
      %2245 = vst [vmem:[#allocation3 + $0x178] sm:$0xff] %v2241
      %v2246 = vld [vmem:[#allocation2 + $0x8] sm:$0xff]
      %v2247 = vld [vmem:[#allocation2 + $0x10] sm:$0xff]
      %v2248 = vld [vmem:[#allocation2 + $0x18] sm:$0xff]
      %v2249 = vmul.f32 %v2246, %v898
      %v2250 = vmul.f32 %v2247, %v901
      %v2251 = vmul.f32 %v2248, %v900
      %2255 = vrot.lane.b32.xlu0 %v2249, 113
      %v2256 = vpop.permute.xlu0 %2255
      %2257 = vrot.lane.b32.xlu0 %v2250, 113
      %v2258 = vpop.permute.xlu0 %2257
      %2259 = vrot.lane.b32.xlu0 %v2251, 113
      %v2260 = vpop.permute.xlu0 %2259
      %v2261 = vsel %vm806, %v2256, %v2258
      %v2262 = vsel %vm806, %v2258, %v2260
      %2265 = vst [vmem:[#allocation3 + $0x180] sm:$0xff] %v2261
      %2266 = vst [vmem:[#allocation3 + $0x188] sm:$0xff] %v2262
      %v2267 = vld [vmem:[#allocation2 + $0x8] sm:$0xff]
      %v2268 = vld [vmem:[#allocation2 + $0x10] sm:$0xff]
      %v2269 = vld [vmem:[#allocation2 + $0x18] sm:$0xff]
      %2273 = vrot.lane.b32.xlu0 %v2267, 112
      %v2274 = vpop.permute.xlu0 %2273
      %2275 = vrot.lane.b32.xlu0 %v2268, 112
      %v2276 = vpop.permute.xlu0 %2275
      %2277 = vrot.lane.b32.xlu0 %v2269, 112
      %v2278 = vpop.permute.xlu0 %2277
      %v2279 = vsel %vm935, %v2274, %v2276
      %v2280 = vsel %vm935, %v2276, %v2278
      %2283 = vst [vmem:[#allocation3 + $0x190] sm:$0xff] %v2279
      %2284 = vst [vmem:[#allocation3 + $0x198] sm:$0xff] %v2280
      %v2285 = vld [vmem:[#allocation2 + $0x8] sm:$0xff]
      %v2286 = vld [vmem:[#allocation2 + $0x10] sm:$0xff]
      %v2287 = vld [vmem:[#allocation2 + $0x18] sm:$0xff]
      %v2288 = vmul.f32 %v2285, %v946
      %v2289 = vmul.f32 %v2286, %v949
      %v2290 = vmul.f32 %v2287, %v948
      %2294 = vrot.lane.b32.xlu0 %v2288, 111
      %v2295 = vpop.permute.xlu0 %2294
      %2296 = vrot.lane.b32.xlu0 %v2289, 111
      %v2297 = vpop.permute.xlu0 %2296
      %2298 = vrot.lane.b32.xlu0 %v2290, 111
      %v2299 = vpop.permute.xlu0 %2298
      %v2300 = vsel %vm756, %v2295, %v2297
      %v2301 = vsel %vm756, %v2297, %v2299
      %2304 = vst [vmem:[#allocation3 + $0x1a0] sm:$0xff] %v2300
      %2305 = vst [vmem:[#allocation3 + $0x1a8] sm:$0xff] %v2301
      %s2306 = scalar_lea.vmem %s1, 32
      %v2307 = vld [vmem:[%s2306] sm:$0xff]
      %v2308 = vld [vmem:[%s2306 + $0x8] sm:$0xff]
      %v2309 = vld [vmem:[#allocation3] sm:$0xff]
      %v2310 = vld [vmem:[#allocation3 + $0x8] sm:$0xff]
      %v2311 = vld [vmem:[#allocation3 + $0x10] sm:$0xff]
      %v2312 = vld [vmem:[#allocation3 + $0x18] sm:$0xff]
      %v2313 = vld [vmem:[#allocation3 + $0x20] sm:$0xff]
      %v2314 = vld [vmem:[#allocation3 + $0x28] sm:$0xff]
      %v2315 = vld [vmem:[#allocation3 + $0x30] sm:$0xff]
      %v2316 = vld [vmem:[#allocation3 + $0x38] sm:$0xff]
      %v2317 = vld [vmem:[#allocation3 + $0x40] sm:$0xff]
      %v2318 = vld [vmem:[#allocation3 + $0x48] sm:$0xff]
      %v2319 = vld [vmem:[#allocation3 + $0x50] sm:$0xff]
      %v2320 = vld [vmem:[#allocation3 + $0x58] sm:$0xff]
      %v2321 = vld [vmem:[#allocation3 + $0x60] sm:$0xff]
      %v2322 = vld [vmem:[#allocation3 + $0x68] sm:$0xff]
      %v2323 = vld [vmem:[#allocation3 + $0x70] sm:$0xff]
      %v2324 = vld [vmem:[#allocation3 + $0x78] sm:$0xff]
      %v2325 = vld [vmem:[#allocation3 + $0x80] sm:$0xff]
      %v2326 = vld [vmem:[#allocation3 + $0x88] sm:$0xff]
      %v2327 = vld [vmem:[#allocation3 + $0x90] sm:$0xff]
      %v2328 = vld [vmem:[#allocation3 + $0x98] sm:$0xff]
      %v2329 = vld [vmem:[#allocation3 + $0xa0] sm:$0xff]
      %v2330 = vld [vmem:[#allocation3 + $0xa8] sm:$0xff]
      %v2331 = vld [vmem:[#allocation3 + $0xb0] sm:$0xff]
      %v2332 = vld [vmem:[#allocation3 + $0xb8] sm:$0xff]
      %v2333 = vld [vmem:[#allocation3 + $0xc0] sm:$0xff]
      %v2334 = vld [vmem:[#allocation3 + $0xc8] sm:$0xff]
      %v2335 = vld [vmem:[#allocation3 + $0xd0] sm:$0xff]
      %v2336 = vld [vmem:[#allocation3 + $0xd8] sm:$0xff]
      %v2337 = vld [vmem:[#allocation3 + $0xe0] sm:$0xff]
      %v2338 = vld [vmem:[#allocation3 + $0xe8] sm:$0xff]
      %v2339 = vld [vmem:[#allocation3 + $0xf0] sm:$0xff]
      %v2340 = vld [vmem:[#allocation3 + $0xf8] sm:$0xff]
      %v2341 = vld [vmem:[#allocation3 + $0x100] sm:$0xff]
      %v2342 = vld [vmem:[#allocation3 + $0x108] sm:$0xff]
      %v2343 = vld [vmem:[#allocation3 + $0x110] sm:$0xff]
      %v2344 = vld [vmem:[#allocation3 + $0x118] sm:$0xff]
      %v2345 = vld [vmem:[#allocation3 + $0x120] sm:$0xff]
      %v2346 = vld [vmem:[#allocation3 + $0x128] sm:$0xff]
      %v2347 = vld [vmem:[#allocation3 + $0x130] sm:$0xff]
      %v2348 = vld [vmem:[#allocation3 + $0x138] sm:$0xff]
      %v2349 = vld [vmem:[#allocation3 + $0x140] sm:$0xff]
      %v2350 = vld [vmem:[#allocation3 + $0x148] sm:$0xff]
      %v2351 = vld [vmem:[#allocation3 + $0x150] sm:$0xff]
      %v2352 = vld [vmem:[#allocation3 + $0x158] sm:$0xff]
      %v2353 = vld [vmem:[#allocation3 + $0x160] sm:$0xff]
      %v2354 = vld [vmem:[#allocation3 + $0x168] sm:$0xff]
      %v2355 = vld [vmem:[#allocation3 + $0x170] sm:$0xff]
      %v2356 = vld [vmem:[#allocation3 + $0x178] sm:$0xff]
      %v2357 = vld [vmem:[#allocation3 + $0x180] sm:$0xff]
      %v2358 = vld [vmem:[#allocation3 + $0x188] sm:$0xff]
      %v2359 = vld [vmem:[#allocation3 + $0x190] sm:$0xff]
      %v2360 = vld [vmem:[#allocation3 + $0x198] sm:$0xff]
      %v2361 = vld [vmem:[#allocation3 + $0x1a0] sm:$0xff]
      %v2362 = vld [vmem:[#allocation3 + $0x1a8] sm:$0xff]
      %v2364 = vsel %vm1027, %v2308, 0
      %2366 = vmatprep.subr.mxu0 %v2310
      %2367 = vmatpush1.msra.mxu0 %v2309
      %2368 = vmatprep.subr.mxu0 %v2312
      %2369 = vmatpush1.msra.mxu0 %v2311
      %2370 = vmatprep.subr.mxu0 %v2314
      %2371 = vmatpush1.msra.mxu0 %v2313
      %2372 = vmatprep.subr.mxu0 %v2316
      %2373 = vmatpush1.msra.mxu0 %v2315
      %2374 = vmatprep.subr.mxu0 %v2318
      %2375 = vmatpush1.msra.mxu0 %v2317
      %2376 = vmatprep.subr.mxu0 %v2320
      %2377 = vmatpush1.msra.mxu0 %v2319
      %2378 = vmatprep.subr.mxu0 %v2322
      %2379 = vmatpush1.msra.mxu0 %v2321
      %2380 = vmatprep.subr.mxu0 %v2324
      %2381 = vmatpush1.msra.mxu0 %v2323
      %2382 = vmatprep.subr.mxu0 %v2326
      %2383 = vmatpush1.msra.mxu0 %v2325
      %2384 = vmatprep.subr.mxu0 %v2328
      %2385 = vmatpush1.msra.mxu0 %v2327
      %2386 = vmatprep.subr.mxu0 %v2330
      %2387 = vmatpush1.msra.mxu0 %v2329
      %2388 = vmatprep.subr.mxu0 %v2332
      %2389 = vmatpush1.msra.mxu0 %v2331
      %2390 = vmatprep.subr.mxu0 %v2334
      %2391 = vmatpush1.msra.mxu0 %v2333
      %2392 = vmatprep.subr.mxu0 %v2336
      %2393 = vmatpush1.msra.mxu0 %v2335
      %2394 = vmatprep.subr.mxu0 %v2338
      %2395 = vmatpush1.msra.mxu0 %v2337
      %2396 = vmatprep.subr.mxu0 %v2340
      %2397 = vmatpush1.msra.mxu0 %v2339
      %2398 = vmatprep.subr.mxu0 %v2342
      %2399 = vmatpush1.msra.mxu0 %v2341
      %2400 = vmatprep.subr.mxu0 %v2344
      %2401 = vmatpush1.msra.mxu0 %v2343
      %2402 = vmatprep.subr.mxu0 %v2346
      %2403 = vmatpush1.msra.mxu0 %v2345
      %2404 = vmatprep.subr.mxu0 %v2348
      %2405 = vmatpush1.msra.mxu0 %v2347
      %2406 = vmatprep.subr.mxu0 %v2350
      %2407 = vmatpush1.msra.mxu0 %v2349
      %2408 = vmatprep.subr.mxu0 %v2352
      %2409 = vmatpush1.msra.mxu0 %v2351
      %2410 = vmatprep.subr.mxu0 %v2354
      %2411 = vmatpush1.msra.mxu0 %v2353
      %2412 = vmatprep.subr.mxu0 %v2356
      %2413 = vmatpush1.msra.mxu0 %v2355
      %2414 = vmatprep.subr.mxu0 %v2358
      %2415 = vmatpush1.msra.mxu0 %v2357
      %2416 = vmatprep.subr.mxu0 %v2360
      %2417 = vmatpush1.msra.mxu0 %v2359
      %2418 = vmatprep.subr.mxu0 %v2362
      %2419 = vmatpush1.msra.mxu0 %v2361
      %2420 = vmatprep.subr.mxu0 0.0
      %2421 = vmatpush1.msra.mxu0 0.0
      %2422 = vmatprep.subr.mxu0 0.0
      %2423 = vmatpush1.msra.mxu0 0.0
      %2424 = vmatprep.subr.mxu0 0.0
      %2425 = vmatpush1.msra.mxu0 0.0
      %2426 = vmatprep.subr.mxu0 0.0
      %2427 = vmatpush1.msra.mxu0 0.0
      %2428 = vmatprep.subr.mxu0 0.0
      %2429 = vmatpush1.msra.mxu0 0.0
      %2430 = vmatprep.mubr.f32.mxu0 %v2364
      %2431 = vmatmul.mubr.f32.gmra.mrb[0].mxu0 %v2307
      %v2432 = vpop.f32.mrb[0].mxu0
      %v2433 = vadd.f32 0.0, %v2432
      %v2434 = vpop.f32.mrb[0].mxu0
      %v2435 = vadd.f32 0.0, %v2434
      %2436 = vdwg.mxu0
      %v2437 = vld [vmem:[%s2] sm:$0xff]
      %v2438 = vadd.f32 %v2433, %v2435
      %2439 = vadd.xlane.f32.xlu0 %v2438
      %v2440 = vpop.xlane.xlu0 %2439
      %v2441 = vmul.f32 %v2440, %v1106
      %v2442 = vmul.f32 %v2433, %v2433
      %v2443 = vmul.f32 %v2435, %v2435
      %v2444 = vadd.f32 %v2442, %v2443
      %2445 = vadd.xlane.f32.xlu0 %v2444
      %v2446 = vpop.xlane.xlu0 %2445
      %v2447 = vmul.f32 %v2446, %v1106
      %v2448 = vmul.f32 %v2441, %v2441
      %v2449 = vsub.f32 %v2447, %v2448
      %v2450 = vsub.f32 %v2433, %v2441
      %v2451 = vsub.f32 %v2435, %v2441
      %v2452 = vadd.f32 %v2449, 1e-05
      %v2453 = vrsqrt.pop %v2452
      %v2454 = vmul.f32 %v2450, %v2453
      %v2455 = vmul.f32 %v2451, %v2453
      %2457 = vset.pattern.permute.xlu0 4
      %2458 = vperm.xlu0 %2457, %v2437
      %v2459 = vpop.permute.xlu0 %2458
      %v2461 = vmul.f32 %v2454, %v2459
      %v2462 = vmul.f32 %v2455, %v2459
      %2463 = vset.pattern.permute.xlu0 5
      %2464 = vperm.xlu0 %2463, %v2437
      %v2465 = vpop.permute.xlu0 %2464
      %v2467 = vadd.f32 %v2461, %v2465
      %v2468 = vadd.f32 %v2462, %v2465
      %v2469 = vmax.f32 %v2467, 0.0
      %v2470 = vmax.f32 %v2468, 0.0
      %v2471 = vadd.f32 %v2469, %v1804
      %v2472 = vadd.f32 %v2470, %v1805
      %2473 = vst [vmem:[#allocation2 + $0x8] sm:$0xff] %v2471
      %2474 = vst [vmem:[#allocation2 + $0x10] sm:$0xff] %v2472
      %v2475 = vld [vmem:[#allocation2] sm:$0xff]
      %v2476 = vld [vmem:[#allocation2 + $0x8] sm:$0xff]
      %v2477 = vld [vmem:[#allocation2 + $0x10] sm:$0xff]
      %v2478 = vmul.f32 %v2475, %v328
      %v2479 = vmul.f32 %v2476, %v332
      %v2480 = vmul.f32 %v2477, %v330
      %2484 = vrot.lane.b32.xlu0 %v2478, 34
      %v2485 = vpop.permute.xlu0 %2484
      %2486 = vrot.lane.b32.xlu0 %v2479, 34
      %v2487 = vpop.permute.xlu0 %2486
      %2488 = vrot.lane.b32.xlu0 %v2480, 34
      %v2489 = vpop.permute.xlu0 %2488
      %v2490 = vsel %vm348, %v2485, %v2487
      %v2491 = vsel %vm348, %v2487, %v2489
      %2494 = vst [vmem:[#allocation3] sm:$0xff] %v2490
      %2495 = vst [vmem:[#allocation3 + $0x8] sm:$0xff] %v2491
      %v2496 = vld [vmem:[#allocation2] sm:$0xff]
      %v2497 = vld [vmem:[#allocation2 + $0x8] sm:$0xff]
      %v2498 = vld [vmem:[#allocation2 + $0x10] sm:$0xff]
      %2502 = vrot.lane.b32.xlu0 %v2496, 32
      %v2503 = vpop.permute.xlu0 %2502
      %2504 = vrot.lane.b32.xlu0 %v2497, 32
      %v2505 = vpop.permute.xlu0 %2504
      %2506 = vrot.lane.b32.xlu0 %v2498, 32
      %v2507 = vpop.permute.xlu0 %2506
      %v2508 = vsel %vm367, %v2503, %v2505
      %v2509 = vsel %vm367, %v2505, %v2507
      %2512 = vst [vmem:[#allocation3 + $0x10] sm:$0xff] %v2508
      %2513 = vst [vmem:[#allocation3 + $0x18] sm:$0xff] %v2509
      %v2514 = vld [vmem:[#allocation2] sm:$0xff]
      %v2515 = vld [vmem:[#allocation2 + $0x8] sm:$0xff]
      %v2516 = vld [vmem:[#allocation2 + $0x10] sm:$0xff]
      %v2517 = vmul.f32 %v2514, %v378
      %v2518 = vmul.f32 %v2515, %v382
      %v2519 = vmul.f32 %v2516, %v380
      %2523 = vrot.lane.b32.xlu0 %v2517, 30
      %v2524 = vpop.permute.xlu0 %2523
      %2525 = vrot.lane.b32.xlu0 %v2518, 30
      %v2526 = vpop.permute.xlu0 %2525
      %2527 = vrot.lane.b32.xlu0 %v2519, 30
      %v2528 = vpop.permute.xlu0 %2527
      %v2529 = vsel %vm398, %v2524, %v2526
      %v2530 = vsel %vm398, %v2526, %v2528
      %2533 = vst [vmem:[#allocation3 + $0x20] sm:$0xff] %v2529
      %2534 = vst [vmem:[#allocation3 + $0x28] sm:$0xff] %v2530
      %v2535 = vld [vmem:[#allocation2] sm:$0xff]
      %v2536 = vld [vmem:[#allocation2 + $0x8] sm:$0xff]
      %v2537 = vld [vmem:[#allocation2 + $0x10] sm:$0xff]
      %v2538 = vmul.f32 %v2535, %v409
      %v2539 = vmul.f32 %v2536, %v413
      %v2540 = vmul.f32 %v2537, %v411
      %2544 = vrot.lane.b32.xlu0 %v2538, 2
      %v2545 = vpop.permute.xlu0 %2544
      %2546 = vrot.lane.b32.xlu0 %v2539, 2
      %v2547 = vpop.permute.xlu0 %2546
      %2548 = vrot.lane.b32.xlu0 %v2540, 2
      %v2549 = vpop.permute.xlu0 %2548
      %v2550 = vsel %vm429, %v2545, %v2547
      %v2551 = vsel %vm429, %v2547, %v2549
      %2554 = vst [vmem:[#allocation3 + $0x30] sm:$0xff] %v2550
      %2555 = vst [vmem:[#allocation3 + $0x38] sm:$0xff] %v2551
      %v2556 = vld [vmem:[#allocation2 + $0x8] sm:$0xff]
      %v2557 = vld [vmem:[#allocation2 + $0x10] sm:$0xff]
      %2558 = vst [vmem:[#allocation3 + $0x40] sm:$0xff] %v2556
      %2559 = vst [vmem:[#allocation3 + $0x48] sm:$0xff] %v2557
      %v2560 = vld [vmem:[#allocation2 + $0x8] sm:$0xff]
      %v2561 = vld [vmem:[#allocation2 + $0x10] sm:$0xff]
      %v2562 = vld [vmem:[#allocation2 + $0x18] sm:$0xff]
      %v2563 = vmul.f32 %v2560, %v444
      %v2564 = vmul.f32 %v2561, %v447
      %v2565 = vmul.f32 %v2562, %v446
      %2569 = vrot.lane.b32.xlu0 %v2563, 126
      %v2570 = vpop.permute.xlu0 %2569
      %2571 = vrot.lane.b32.xlu0 %v2564, 126
      %v2572 = vpop.permute.xlu0 %2571
      %2573 = vrot.lane.b32.xlu0 %v2565, 126
      %v2574 = vpop.permute.xlu0 %2573
      %v2575 = vsel %vm412, %v2570, %v2572
      %v2576 = vsel %vm412, %v2572, %v2574
      %2579 = vst [vmem:[#allocation3 + $0x50] sm:$0xff] %v2575
      %2580 = vst [vmem:[#allocation3 + $0x58] sm:$0xff] %v2576
      %v2581 = vld [vmem:[#allocation2 + $0x8] sm:$0xff]
      %v2582 = vld [vmem:[#allocation2 + $0x10] sm:$0xff]
      %v2583 = vld [vmem:[#allocation2 + $0x18] sm:$0xff]
      %v2584 = vmul.f32 %v2581, %v473
      %v2585 = vmul.f32 %v2582, %v476
      %v2586 = vmul.f32 %v2583, %v475
      %2590 = vrot.lane.b32.xlu0 %v2584, 98
      %v2591 = vpop.permute.xlu0 %2590
      %2592 = vrot.lane.b32.xlu0 %v2585, 98
      %v2593 = vpop.permute.xlu0 %2592
      %2594 = vrot.lane.b32.xlu0 %v2586, 98
      %v2595 = vpop.permute.xlu0 %2594
      %v2596 = vsel %vm381, %v2591, %v2593
      %v2597 = vsel %vm381, %v2593, %v2595
      %2600 = vst [vmem:[#allocation3 + $0x60] sm:$0xff] %v2596
      %2601 = vst [vmem:[#allocation3 + $0x68] sm:$0xff] %v2597
      %v2602 = vld [vmem:[#allocation2 + $0x8] sm:$0xff]
      %v2603 = vld [vmem:[#allocation2 + $0x10] sm:$0xff]
      %v2604 = vld [vmem:[#allocation2 + $0x18] sm:$0xff]
      %2608 = vrot.lane.b32.xlu0 %v2602, 96
      %v2609 = vpop.permute.xlu0 %2608
      %2610 = vrot.lane.b32.xlu0 %v2603, 96
      %v2611 = vpop.permute.xlu0 %2610
      %2612 = vrot.lane.b32.xlu0 %v2604, 96
      %v2613 = vpop.permute.xlu0 %2612
      %v2614 = vsel %vm510, %v2609, %v2611
      %v2615 = vsel %vm510, %v2611, %v2613
      %2618 = vst [vmem:[#allocation3 + $0x70] sm:$0xff] %v2614
      %2619 = vst [vmem:[#allocation3 + $0x78] sm:$0xff] %v2615
      %v2620 = vld [vmem:[#allocation2 + $0x8] sm:$0xff]
      %v2621 = vld [vmem:[#allocation2 + $0x10] sm:$0xff]
      %v2622 = vld [vmem:[#allocation2 + $0x18] sm:$0xff]
      %v2623 = vmul.f32 %v2620, %v521
      %v2624 = vmul.f32 %v2621, %v524
      %v2625 = vmul.f32 %v2622, %v523
      %2629 = vrot.lane.b32.xlu0 %v2623, 94
      %v2630 = vpop.permute.xlu0 %2629
      %2631 = vrot.lane.b32.xlu0 %v2624, 94
      %v2632 = vpop.permute.xlu0 %2631
      %2633 = vrot.lane.b32.xlu0 %v2625, 94
      %v2634 = vpop.permute.xlu0 %2633
      %v2635 = vsel %vm331, %v2630, %v2632
      %v2636 = vsel %vm331, %v2632, %v2634
      %2639 = vst [vmem:[#allocation3 + $0x80] sm:$0xff] %v2635
      %2640 = vst [vmem:[#allocation3 + $0x88] sm:$0xff] %v2636
      %v2641 = vld [vmem:[#allocation2] sm:$0xff]
      %v2642 = vld [vmem:[#allocation2 + $0x8] sm:$0xff]
      %v2643 = vld [vmem:[#allocation2 + $0x10] sm:$0xff]
      %v2644 = vmul.f32 %v2641, %v550
      %v2645 = vmul.f32 %v2642, %v554
      %v2646 = vmul.f32 %v2643, %v552
      %2650 = vrot.lane.b32.xlu0 %v2644, 68
      %v2651 = vpop.permute.xlu0 %2650
      %2652 = vrot.lane.b32.xlu0 %v2645, 68
      %v2653 = vpop.permute.xlu0 %2652
      %2654 = vrot.lane.b32.xlu0 %v2646, 68
      %v2655 = vpop.permute.xlu0 %2654
      %v2656 = vsel %vm570, %v2651, %v2653
      %v2657 = vsel %vm570, %v2653, %v2655
      %2660 = vst [vmem:[#allocation3 + $0x90] sm:$0xff] %v2656
      %2661 = vst [vmem:[#allocation3 + $0x98] sm:$0xff] %v2657
      %v2662 = vld [vmem:[#allocation2] sm:$0xff]
      %v2663 = vld [vmem:[#allocation2 + $0x8] sm:$0xff]
      %v2664 = vld [vmem:[#allocation2 + $0x10] sm:$0xff]
      %2668 = vrot.lane.b32.xlu0 %v2662, 64
      %v2669 = vpop.permute.xlu0 %2668
      %2670 = vrot.lane.b32.xlu0 %v2663, 64
      %v2671 = vpop.permute.xlu0 %2670
      %2672 = vrot.lane.b32.xlu0 %v2664, 64
      %v2673 = vpop.permute.xlu0 %2672
      %v2674 = vsel %vm589, %v2669, %v2671
      %v2675 = vsel %vm589, %v2671, %v2673
      %2678 = vst [vmem:[#allocation3 + $0xa0] sm:$0xff] %v2674
      %2679 = vst [vmem:[#allocation3 + $0xa8] sm:$0xff] %v2675
      %v2680 = vld [vmem:[#allocation2] sm:$0xff]
      %v2681 = vld [vmem:[#allocation2 + $0x8] sm:$0xff]
      %v2682 = vld [vmem:[#allocation2 + $0x10] sm:$0xff]
      %v2683 = vmul.f32 %v2680, %v600
      %v2684 = vmul.f32 %v2681, %v603
      %v2685 = vmul.f32 %v2682, %v602
      %2689 = vrot.lane.b32.xlu0 %v2683, 60
      %v2690 = vpop.permute.xlu0 %2689
      %2691 = vrot.lane.b32.xlu0 %v2684, 60
      %v2692 = vpop.permute.xlu0 %2691
      %2693 = vrot.lane.b32.xlu0 %v2685, 60
      %v2694 = vpop.permute.xlu0 %2693
      %v2695 = vsel %vm553, %v2690, %v2692
      %v2696 = vsel %vm553, %v2692, %v2694
      %2699 = vst [vmem:[#allocation3 + $0xb0] sm:$0xff] %v2695
      %2700 = vst [vmem:[#allocation3 + $0xb8] sm:$0xff] %v2696
      %v2701 = vld [vmem:[#allocation2] sm:$0xff]
      %v2702 = vld [vmem:[#allocation2 + $0x8] sm:$0xff]
      %v2703 = vld [vmem:[#allocation2 + $0x10] sm:$0xff]
      %v2704 = vmul.f32 %v2701, %v629
      %v2705 = vmul.f32 %v2702, %v633
      %v2706 = vmul.f32 %v2703, %v631
      %2710 = vrot.lane.b32.xlu0 %v2704, 4
      %v2711 = vpop.permute.xlu0 %2710
      %2712 = vrot.lane.b32.xlu0 %v2705, 4
      %v2713 = vpop.permute.xlu0 %2712
      %2714 = vrot.lane.b32.xlu0 %v2706, 4
      %v2715 = vpop.permute.xlu0 %2714
      %v2716 = vsel %vm649, %v2711, %v2713
      %v2717 = vsel %vm649, %v2713, %v2715
      %2720 = vst [vmem:[#allocation3 + $0xc0] sm:$0xff] %v2716
      %2721 = vst [vmem:[#allocation3 + $0xc8] sm:$0xff] %v2717
      %v2722 = vld [vmem:[#allocation2 + $0x8] sm:$0xff]
      %v2723 = vld [vmem:[#allocation2 + $0x10] sm:$0xff]
      %2724 = vst [vmem:[#allocation3 + $0xd0] sm:$0xff] %v2722
      %2725 = vst [vmem:[#allocation3 + $0xd8] sm:$0xff] %v2723
      %v2726 = vld [vmem:[#allocation2 + $0x8] sm:$0xff]
      %v2727 = vld [vmem:[#allocation2 + $0x10] sm:$0xff]
      %v2728 = vld [vmem:[#allocation2 + $0x18] sm:$0xff]
      %v2729 = vmul.f32 %v2726, %v664
      %v2730 = vmul.f32 %v2727, %v667
      %v2731 = vmul.f32 %v2728, %v666
      %2735 = vrot.lane.b32.xlu0 %v2729, 124
      %v2736 = vpop.permute.xlu0 %2735
      %2737 = vrot.lane.b32.xlu0 %v2730, 124
      %v2738 = vpop.permute.xlu0 %2737
      %2739 = vrot.lane.b32.xlu0 %v2731, 124
      %v2740 = vpop.permute.xlu0 %2739
      %v2741 = vsel %vm632, %v2736, %v2738
      %v2742 = vsel %vm632, %v2738, %v2740
      %2745 = vst [vmem:[#allocation3 + $0xe0] sm:$0xff] %v2741
      %2746 = vst [vmem:[#allocation3 + $0xe8] sm:$0xff] %v2742
      %v2747 = vld [vmem:[#allocation2 + $0x8] sm:$0xff]
      %v2748 = vld [vmem:[#allocation2 + $0x10] sm:$0xff]
      %v2749 = vld [vmem:[#allocation2 + $0x18] sm:$0xff]
      %v2750 = vmul.f32 %v2747, %v550
      %v2751 = vmul.f32 %v2748, %v554
      %v2752 = vmul.f32 %v2749, %v552
      %2756 = vrot.lane.b32.xlu0 %v2750, 68
      %v2757 = vpop.permute.xlu0 %2756
      %2758 = vrot.lane.b32.xlu0 %v2751, 68
      %v2759 = vpop.permute.xlu0 %2758
      %2760 = vrot.lane.b32.xlu0 %v2752, 68
      %v2761 = vpop.permute.xlu0 %2760
      %v2762 = vsel %vm570, %v2757, %v2759
      %v2763 = vsel %vm570, %v2759, %v2761
      %2766 = vst [vmem:[#allocation3 + $0xf0] sm:$0xff] %v2762
      %2767 = vst [vmem:[#allocation3 + $0xf8] sm:$0xff] %v2763
      %v2768 = vld [vmem:[#allocation2 + $0x8] sm:$0xff]
      %v2769 = vld [vmem:[#allocation2 + $0x10] sm:$0xff]
      %v2770 = vld [vmem:[#allocation2 + $0x18] sm:$0xff]
      %2774 = vrot.lane.b32.xlu0 %v2768, 64
      %v2775 = vpop.permute.xlu0 %2774
      %2776 = vrot.lane.b32.xlu0 %v2769, 64
      %v2777 = vpop.permute.xlu0 %2776
      %2778 = vrot.lane.b32.xlu0 %v2770, 64
      %v2779 = vpop.permute.xlu0 %2778
      %v2780 = vsel %vm589, %v2775, %v2777
      %v2781 = vsel %vm589, %v2777, %v2779
      %2784 = vst [vmem:[#allocation3 + $0x100] sm:$0xff] %v2780
      %2785 = vst [vmem:[#allocation3 + $0x108] sm:$0xff] %v2781
      %v2786 = vld [vmem:[#allocation2 + $0x8] sm:$0xff]
      %v2787 = vld [vmem:[#allocation2 + $0x10] sm:$0xff]
      %v2788 = vld [vmem:[#allocation2 + $0x18] sm:$0xff]
      %v2789 = vmul.f32 %v2786, %v600
      %v2790 = vmul.f32 %v2787, %v603
      %v2791 = vmul.f32 %v2788, %v602
      %2795 = vrot.lane.b32.xlu0 %v2789, 60
      %v2796 = vpop.permute.xlu0 %2795
      %2797 = vrot.lane.b32.xlu0 %v2790, 60
      %v2798 = vpop.permute.xlu0 %2797
      %2799 = vrot.lane.b32.xlu0 %v2791, 60
      %v2800 = vpop.permute.xlu0 %2799
      %v2801 = vsel %vm553, %v2796, %v2798
      %v2802 = vsel %vm553, %v2798, %v2800
      %2805 = vst [vmem:[#allocation3 + $0x110] sm:$0xff] %v2801
      %2806 = vst [vmem:[#allocation3 + $0x118] sm:$0xff] %v2802
      %v2807 = vld [vmem:[#allocation2] sm:$0xff]
      %v2808 = vld [vmem:[#allocation2 + $0x8] sm:$0xff]
      %v2809 = vld [vmem:[#allocation2 + $0x10] sm:$0xff]
      %v2810 = vmul.f32 %v2807, %v753
      %v2811 = vmul.f32 %v2808, %v757
      %v2812 = vmul.f32 %v2809, %v755
      %2816 = vrot.lane.b32.xlu0 %v2810, 17
      %v2817 = vpop.permute.xlu0 %2816
      %2818 = vrot.lane.b32.xlu0 %v2811, 17
      %v2819 = vpop.permute.xlu0 %2818
      %2820 = vrot.lane.b32.xlu0 %v2812, 17
      %v2821 = vpop.permute.xlu0 %2820
      %v2822 = vsel %vm773, %v2817, %v2819
      %v2823 = vsel %vm773, %v2819, %v2821
      %2826 = vst [vmem:[#allocation3 + $0x120] sm:$0xff] %v2822
      %2827 = vst [vmem:[#allocation3 + $0x128] sm:$0xff] %v2823
      %v2828 = vld [vmem:[#allocation2] sm:$0xff]
      %v2829 = vld [vmem:[#allocation2 + $0x8] sm:$0xff]
      %v2830 = vld [vmem:[#allocation2 + $0x10] sm:$0xff]
      %2834 = vrot.lane.b32.xlu0 %v2828, 16
      %v2835 = vpop.permute.xlu0 %2834
      %2836 = vrot.lane.b32.xlu0 %v2829, 16
      %v2837 = vpop.permute.xlu0 %2836
      %2838 = vrot.lane.b32.xlu0 %v2830, 16
      %v2839 = vpop.permute.xlu0 %2838
      %v2840 = vsel %vm792, %v2835, %v2837
      %v2841 = vsel %vm792, %v2837, %v2839
      %2844 = vst [vmem:[#allocation3 + $0x130] sm:$0xff] %v2840
      %2845 = vst [vmem:[#allocation3 + $0x138] sm:$0xff] %v2841
      %v2846 = vld [vmem:[#allocation2] sm:$0xff]
      %v2847 = vld [vmem:[#allocation2 + $0x8] sm:$0xff]
      %v2848 = vld [vmem:[#allocation2 + $0x10] sm:$0xff]
      %v2849 = vmul.f32 %v2846, %v803
      %v2850 = vmul.f32 %v2847, %v807
      %v2851 = vmul.f32 %v2848, %v805
      %2855 = vrot.lane.b32.xlu0 %v2849, 15
      %v2856 = vpop.permute.xlu0 %2855
      %2857 = vrot.lane.b32.xlu0 %v2850, 15
      %v2858 = vpop.permute.xlu0 %2857
      %2859 = vrot.lane.b32.xlu0 %v2851, 15
      %v2860 = vpop.permute.xlu0 %2859
      %v2861 = vsel %vm823, %v2856, %v2858
      %v2862 = vsel %vm823, %v2858, %v2860
      %2865 = vst [vmem:[#allocation3 + $0x140] sm:$0xff] %v2861
      %2866 = vst [vmem:[#allocation3 + $0x148] sm:$0xff] %v2862
      %v2867 = vld [vmem:[#allocation2] sm:$0xff]
      %v2868 = vld [vmem:[#allocation2 + $0x8] sm:$0xff]
      %v2869 = vld [vmem:[#allocation2 + $0x10] sm:$0xff]
      %v2870 = vmul.f32 %v2867, %v834
      %v2871 = vmul.f32 %v2868, %v838
      %v2872 = vmul.f32 %v2869, %v836
      %2876 = vrot.lane.b32.xlu0 %v2870, 1
      %v2877 = vpop.permute.xlu0 %2876
      %2878 = vrot.lane.b32.xlu0 %v2871, 1
      %v2879 = vpop.permute.xlu0 %2878
      %2880 = vrot.lane.b32.xlu0 %v2872, 1
      %v2881 = vpop.permute.xlu0 %2880
      %v2882 = vsel %vm854, %v2877, %v2879
      %v2883 = vsel %vm854, %v2879, %v2881
      %2886 = vst [vmem:[#allocation3 + $0x150] sm:$0xff] %v2882
      %2887 = vst [vmem:[#allocation3 + $0x158] sm:$0xff] %v2883
      %v2888 = vld [vmem:[#allocation2 + $0x8] sm:$0xff]
      %v2889 = vld [vmem:[#allocation2 + $0x10] sm:$0xff]
      %2890 = vst [vmem:[#allocation3 + $0x160] sm:$0xff] %v2888
      %2891 = vst [vmem:[#allocation3 + $0x168] sm:$0xff] %v2889
      %v2892 = vld [vmem:[#allocation2 + $0x8] sm:$0xff]
      %v2893 = vld [vmem:[#allocation2 + $0x10] sm:$0xff]
      %v2894 = vld [vmem:[#allocation2 + $0x18] sm:$0xff]
      %v2895 = vmul.f32 %v2892, %v869
      %v2896 = vmul.f32 %v2893, %v872
      %v2897 = vmul.f32 %v2894, %v871
      %2901 = vrot.lane.b32.xlu0 %v2895, 127
      %v2902 = vpop.permute.xlu0 %2901
      %2903 = vrot.lane.b32.xlu0 %v2896, 127
      %v2904 = vpop.permute.xlu0 %2903
      %2905 = vrot.lane.b32.xlu0 %v2897, 127
      %v2906 = vpop.permute.xlu0 %2905
      %v2907 = vsel %vm837, %v2902, %v2904
      %v2908 = vsel %vm837, %v2904, %v2906
      %2911 = vst [vmem:[#allocation3 + $0x170] sm:$0xff] %v2907
      %2912 = vst [vmem:[#allocation3 + $0x178] sm:$0xff] %v2908
      %v2913 = vld [vmem:[#allocation2 + $0x8] sm:$0xff]
      %v2914 = vld [vmem:[#allocation2 + $0x10] sm:$0xff]
      %v2915 = vld [vmem:[#allocation2 + $0x18] sm:$0xff]
      %v2916 = vmul.f32 %v2913, %v898
      %v2917 = vmul.f32 %v2914, %v901
      %v2918 = vmul.f32 %v2915, %v900
      %2922 = vrot.lane.b32.xlu0 %v2916, 113
      %v2923 = vpop.permute.xlu0 %2922
      %2924 = vrot.lane.b32.xlu0 %v2917, 113
      %v2925 = vpop.permute.xlu0 %2924
      %2926 = vrot.lane.b32.xlu0 %v2918, 113
      %v2927 = vpop.permute.xlu0 %2926
      %v2928 = vsel %vm806, %v2923, %v2925
      %v2929 = vsel %vm806, %v2925, %v2927
      %2932 = vst [vmem:[#allocation3 + $0x180] sm:$0xff] %v2928
      %2933 = vst [vmem:[#allocation3 + $0x188] sm:$0xff] %v2929
      %v2934 = vld [vmem:[#allocation2 + $0x8] sm:$0xff]
      %v2935 = vld [vmem:[#allocation2 + $0x10] sm:$0xff]
      %v2936 = vld [vmem:[#allocation2 + $0x18] sm:$0xff]
      %2940 = vrot.lane.b32.xlu0 %v2934, 112
      %v2941 = vpop.permute.xlu0 %2940
      %2942 = vrot.lane.b32.xlu0 %v2935, 112
      %v2943 = vpop.permute.xlu0 %2942
      %2944 = vrot.lane.b32.xlu0 %v2936, 112
      %v2945 = vpop.permute.xlu0 %2944
      %v2946 = vsel %vm935, %v2941, %v2943
      %v2947 = vsel %vm935, %v2943, %v2945
      %2950 = vst [vmem:[#allocation3 + $0x190] sm:$0xff] %v2946
      %2951 = vst [vmem:[#allocation3 + $0x198] sm:$0xff] %v2947
      %v2952 = vld [vmem:[#allocation2 + $0x8] sm:$0xff]
      %v2953 = vld [vmem:[#allocation2 + $0x10] sm:$0xff]
      %v2954 = vld [vmem:[#allocation2 + $0x18] sm:$0xff]
      %v2955 = vmul.f32 %v2952, %v946
      %v2956 = vmul.f32 %v2953, %v949
      %v2957 = vmul.f32 %v2954, %v948
      %2961 = vrot.lane.b32.xlu0 %v2955, 111
      %v2962 = vpop.permute.xlu0 %2961
      %2963 = vrot.lane.b32.xlu0 %v2956, 111
      %v2964 = vpop.permute.xlu0 %2963
      %2965 = vrot.lane.b32.xlu0 %v2957, 111
      %v2966 = vpop.permute.xlu0 %2965
      %v2967 = vsel %vm756, %v2962, %v2964
      %v2968 = vsel %vm756, %v2964, %v2966
      %2971 = vst [vmem:[#allocation3 + $0x1a0] sm:$0xff] %v2967
      %2972 = vst [vmem:[#allocation3 + $0x1a8] sm:$0xff] %v2968
      %s2973 = scalar_lea.vmem %s1, 48
      %v2974 = vld [vmem:[%s2973] sm:$0xff]
      %v2975 = vld [vmem:[%s2973 + $0x8] sm:$0xff]
      %v2976 = vld [vmem:[#allocation3] sm:$0xff]
      %v2977 = vld [vmem:[#allocation3 + $0x8] sm:$0xff]
      %v2978 = vld [vmem:[#allocation3 + $0x10] sm:$0xff]
      %v2979 = vld [vmem:[#allocation3 + $0x18] sm:$0xff]
      %v2980 = vld [vmem:[#allocation3 + $0x20] sm:$0xff]
      %v2981 = vld [vmem:[#allocation3 + $0x28] sm:$0xff]
      %v2982 = vld [vmem:[#allocation3 + $0x30] sm:$0xff]
      %v2983 = vld [vmem:[#allocation3 + $0x38] sm:$0xff]
      %v2984 = vld [vmem:[#allocation3 + $0x40] sm:$0xff]
      %v2985 = vld [vmem:[#allocation3 + $0x48] sm:$0xff]
      %v2986 = vld [vmem:[#allocation3 + $0x50] sm:$0xff]
      %v2987 = vld [vmem:[#allocation3 + $0x58] sm:$0xff]
      %v2988 = vld [vmem:[#allocation3 + $0x60] sm:$0xff]
      %v2989 = vld [vmem:[#allocation3 + $0x68] sm:$0xff]
      %v2990 = vld [vmem:[#allocation3 + $0x70] sm:$0xff]
      %v2991 = vld [vmem:[#allocation3 + $0x78] sm:$0xff]
      %v2992 = vld [vmem:[#allocation3 + $0x80] sm:$0xff]
      %v2993 = vld [vmem:[#allocation3 + $0x88] sm:$0xff]
      %v2994 = vld [vmem:[#allocation3 + $0x90] sm:$0xff]
      %v2995 = vld [vmem:[#allocation3 + $0x98] sm:$0xff]
      %v2996 = vld [vmem:[#allocation3 + $0xa0] sm:$0xff]
      %v2997 = vld [vmem:[#allocation3 + $0xa8] sm:$0xff]
      %v2998 = vld [vmem:[#allocation3 + $0xb0] sm:$0xff]
      %v2999 = vld [vmem:[#allocation3 + $0xb8] sm:$0xff]
      %v3000 = vld [vmem:[#allocation3 + $0xc0] sm:$0xff]
      %v3001 = vld [vmem:[#allocation3 + $0xc8] sm:$0xff]
      %v3002 = vld [vmem:[#allocation3 + $0xd0] sm:$0xff]
      %v3003 = vld [vmem:[#allocation3 + $0xd8] sm:$0xff]
      %v3004 = vld [vmem:[#allocation3 + $0xe0] sm:$0xff]
      %v3005 = vld [vmem:[#allocation3 + $0xe8] sm:$0xff]
      %v3006 = vld [vmem:[#allocation3 + $0xf0] sm:$0xff]
      %v3007 = vld [vmem:[#allocation3 + $0xf8] sm:$0xff]
      %v3008 = vld [vmem:[#allocation3 + $0x100] sm:$0xff]
      %v3009 = vld [vmem:[#allocation3 + $0x108] sm:$0xff]
      %v3010 = vld [vmem:[#allocation3 + $0x110] sm:$0xff]
      %v3011 = vld [vmem:[#allocation3 + $0x118] sm:$0xff]
      %v3012 = vld [vmem:[#allocation3 + $0x120] sm:$0xff]
      %v3013 = vld [vmem:[#allocation3 + $0x128] sm:$0xff]
      %v3014 = vld [vmem:[#allocation3 + $0x130] sm:$0xff]
      %v3015 = vld [vmem:[#allocation3 + $0x138] sm:$0xff]
      %v3016 = vld [vmem:[#allocation3 + $0x140] sm:$0xff]
      %v3017 = vld [vmem:[#allocation3 + $0x148] sm:$0xff]
      %v3018 = vld [vmem:[#allocation3 + $0x150] sm:$0xff]
      %v3019 = vld [vmem:[#allocation3 + $0x158] sm:$0xff]
      %v3020 = vld [vmem:[#allocation3 + $0x160] sm:$0xff]
      %v3021 = vld [vmem:[#allocation3 + $0x168] sm:$0xff]
      %v3022 = vld [vmem:[#allocation3 + $0x170] sm:$0xff]
      %v3023 = vld [vmem:[#allocation3 + $0x178] sm:$0xff]
      %v3024 = vld [vmem:[#allocation3 + $0x180] sm:$0xff]
      %v3025 = vld [vmem:[#allocation3 + $0x188] sm:$0xff]
      %v3026 = vld [vmem:[#allocation3 + $0x190] sm:$0xff]
      %v3027 = vld [vmem:[#allocation3 + $0x198] sm:$0xff]
      %v3028 = vld [vmem:[#allocation3 + $0x1a0] sm:$0xff]
      %v3029 = vld [vmem:[#allocation3 + $0x1a8] sm:$0xff]
      %v3031 = vsel %vm1027, %v2975, 0
      %3033 = vmatprep.subr.mxu0 %v2977
      %3034 = vmatpush1.msra.mxu0 %v2976
      %3035 = vmatprep.subr.mxu0 %v2979
      %3036 = vmatpush1.msra.mxu0 %v2978
      %3037 = vmatprep.subr.mxu0 %v2981
      %3038 = vmatpush1.msra.mxu0 %v2980
      %3039 = vmatprep.subr.mxu0 %v2983
      %3040 = vmatpush1.msra.mxu0 %v2982
      %3041 = vmatprep.subr.mxu0 %v2985
      %3042 = vmatpush1.msra.mxu0 %v2984
      %3043 = vmatprep.subr.mxu0 %v2987
      %3044 = vmatpush1.msra.mxu0 %v2986
      %3045 = vmatprep.subr.mxu0 %v2989
      %3046 = vmatpush1.msra.mxu0 %v2988
      %3047 = vmatprep.subr.mxu0 %v2991
      %3048 = vmatpush1.msra.mxu0 %v2990
      %3049 = vmatprep.subr.mxu0 %v2993
      %3050 = vmatpush1.msra.mxu0 %v2992
      %3051 = vmatprep.subr.mxu0 %v2995
      %3052 = vmatpush1.msra.mxu0 %v2994
      %3053 = vmatprep.subr.mxu0 %v2997
      %3054 = vmatpush1.msra.mxu0 %v2996
      %3055 = vmatprep.subr.mxu0 %v2999
      %3056 = vmatpush1.msra.mxu0 %v2998
      %3057 = vmatprep.subr.mxu0 %v3001
      %3058 = vmatpush1.msra.mxu0 %v3000
      %3059 = vmatprep.subr.mxu0 %v3003
      %3060 = vmatpush1.msra.mxu0 %v3002
      %3061 = vmatprep.subr.mxu0 %v3005
      %3062 = vmatpush1.msra.mxu0 %v3004
      %3063 = vmatprep.subr.mxu0 %v3007
      %3064 = vmatpush1.msra.mxu0 %v3006
      %3065 = vmatprep.subr.mxu0 %v3009
      %3066 = vmatpush1.msra.mxu0 %v3008
      %3067 = vmatprep.subr.mxu0 %v3011
      %3068 = vmatpush1.msra.mxu0 %v3010
      %3069 = vmatprep.subr.mxu0 %v3013
      %3070 = vmatpush1.msra.mxu0 %v3012
      %3071 = vmatprep.subr.mxu0 %v3015
      %3072 = vmatpush1.msra.mxu0 %v3014
      %3073 = vmatprep.subr.mxu0 %v3017
      %3074 = vmatpush1.msra.mxu0 %v3016
      %3075 = vmatprep.subr.mxu0 %v3019
      %3076 = vmatpush1.msra.mxu0 %v3018
      %3077 = vmatprep.subr.mxu0 %v3021
      %3078 = vmatpush1.msra.mxu0 %v3020
      %3079 = vmatprep.subr.mxu0 %v3023
      %3080 = vmatpush1.msra.mxu0 %v3022
      %3081 = vmatprep.subr.mxu0 %v3025
      %3082 = vmatpush1.msra.mxu0 %v3024
      %3083 = vmatprep.subr.mxu0 %v3027
      %3084 = vmatpush1.msra.mxu0 %v3026
      %3085 = vmatprep.subr.mxu0 %v3029
      %3086 = vmatpush1.msra.mxu0 %v3028
      %3087 = vmatprep.subr.mxu0 0.0
      %3088 = vmatpush1.msra.mxu0 0.0
      %3089 = vmatprep.subr.mxu0 0.0
      %3090 = vmatpush1.msra.mxu0 0.0
      %3091 = vmatprep.subr.mxu0 0.0
      %3092 = vmatpush1.msra.mxu0 0.0
      %3093 = vmatprep.subr.mxu0 0.0
      %3094 = vmatpush1.msra.mxu0 0.0
      %3095 = vmatprep.subr.mxu0 0.0
      %3096 = vmatpush1.msra.mxu0 0.0
      %3097 = vmatprep.mubr.f32.mxu0 %v3031
      %3098 = vmatmul.mubr.f32.gmra.mrb[0].mxu0 %v2974
      %v3099 = vpop.f32.mrb[0].mxu0
      %v3100 = vadd.f32 0.0, %v3099
      %v3101 = vpop.f32.mrb[0].mxu0
      %v3102 = vadd.f32 0.0, %v3101
      %3103 = vdwg.mxu0
      %v3104 = vld [vmem:[%s2] sm:$0xff]
      %v3105 = vadd.f32 %v3100, %v3102
      %3106 = vadd.xlane.f32.xlu0 %v3105
      %v3107 = vpop.xlane.xlu0 %3106
      %v3108 = vmul.f32 %v3107, %v1106
      %v3109 = vmul.f32 %v3100, %v3100
      %v3110 = vmul.f32 %v3102, %v3102
      %v3111 = vadd.f32 %v3109, %v3110
      %3112 = vadd.xlane.f32.xlu0 %v3111
      %v3113 = vpop.xlane.xlu0 %3112
      %v3114 = vmul.f32 %v3113, %v1106
      %v3115 = vmul.f32 %v3108, %v3108
      %v3116 = vsub.f32 %v3114, %v3115
      %v3117 = vsub.f32 %v3100, %v3108
      %v3118 = vsub.f32 %v3102, %v3108
      %v3119 = vadd.f32 %v3116, 1e-05
      %v3120 = vrsqrt.pop %v3119
      %v3121 = vmul.f32 %v3117, %v3120
      %v3122 = vmul.f32 %v3118, %v3120
      %3124 = vset.pattern.permute.xlu0 6
      %3125 = vperm.xlu0 %3124, %v3104
      %v3126 = vpop.permute.xlu0 %3125
      %v3128 = vmul.f32 %v3121, %v3126
      %v3129 = vmul.f32 %v3122, %v3126
      %3130 = vset.pattern.permute.xlu0 7
      %3131 = vperm.xlu0 %3130, %v3104
      %v3132 = vpop.permute.xlu0 %3131
      %v3134 = vadd.f32 %v3128, %v3132
      %v3135 = vadd.f32 %v3129, %v3132
      %v3136 = vadd.f32 %v1804, %v3134
      %v3137 = vadd.f32 %v1805, %v3135
      %v3138 = vmax.f32 %v3136, 0.0
      %v3139 = vmax.f32 %v3137, 0.0
      %v3140 = vld [vmem:[%s3] sm:$0x1]
      %s3141 = sld [smem:[#allocation4]]
      %v3142 = vstv %s3141
      %vm3143 = vcmask 64512
      %v3145 = vsel %vm3143, %v3140, 0
      %3147 = vmatprep.subr.mxu0 %v3139
      %3148 = vmatpush1.msra.mxu0 %v3138
      %3149 = vmatprep.subr.mxu0 0.0
      %3150 = vmatpush1.msra.mxu0 0.0
      %3151 = vmatprep.subr.mxu0 0.0
      %3152 = vmatpush1.msra.mxu0 0.0
      %3153 = vmatprep.subr.mxu0 0.0
      %3154 = vmatpush1.msra.mxu0 0.0
      %3155 = vmatprep.subr.mxu0 0.0
      %3156 = vmatpush1.msra.mxu0 0.0
      %3157 = vmatprep.subr.mxu0 0.0
      %3158 = vmatpush1.msra.mxu0 0.0
      %3159 = vmatprep.subr.mxu0 0.0
      %3160 = vmatpush1.msra.mxu0 0.0
      %3161 = vmatprep.subr.mxu0 0.0
      %3162 = vmatpush1.msra.mxu0 0.0
      %3163 = vmatprep.subr.mxu0 0.0
      %3164 = vmatpush1.msra.mxu0 0.0
      %3165 = vmatprep.subr.mxu0 0.0
      %3166 = vmatpush1.msra.mxu0 0.0
      %3167 = vmatprep.subr.mxu0 0.0
      %3168 = vmatpush1.msra.mxu0 0.0
      %3169 = vmatprep.subr.mxu0 0.0
      %3170 = vmatpush1.msra.mxu0 0.0
      %3171 = vmatprep.subr.mxu0 0.0
      %3172 = vmatpush1.msra.mxu0 0.0
      %3173 = vmatprep.subr.mxu0 0.0
      %3174 = vmatpush1.msra.mxu0 0.0
      %3175 = vmatprep.subr.mxu0 0.0
      %3176 = vmatpush1.msra.mxu0 0.0
      %3177 = vmatprep.subr.mxu0 0.0
      %3178 = vmatpush1.msra.mxu0 0.0
      %3179 = vmatprep.subr.mxu0 0.0
      %3180 = vmatpush1.msra.mxu0 0.0
      %3181 = vmatprep.subr.mxu0 0.0
      %3182 = vmatpush1.msra.mxu0 0.0
      %3183 = vmatprep.subr.mxu0 0.0
      %3184 = vmatpush1.msra.mxu0 0.0
      %3185 = vmatprep.subr.mxu0 0.0
      %3186 = vmatpush1.msra.mxu0 0.0
      %3187 = vmatprep.subr.mxu0 0.0
      %3188 = vmatpush1.msra.mxu0 0.0
      %3189 = vmatprep.subr.mxu0 0.0
      %3190 = vmatpush1.msra.mxu0 0.0
      %3191 = vmatprep.subr.mxu0 0.0
      %3192 = vmatpush1.msra.mxu0 0.0
      %3193 = vmatprep.subr.mxu0 0.0
      %3194 = vmatpush1.msra.mxu0 0.0
      %3195 = vmatprep.subr.mxu0 0.0
      %3196 = vmatpush1.msra.mxu0 0.0
      %3197 = vmatprep.subr.mxu0 0.0
      %3198 = vmatpush1.msra.mxu0 0.0
      %3199 = vmatprep.subr.mxu0 0.0
      %3200 = vmatpush1.msra.mxu0 0.0
      %3201 = vmatprep.subr.mxu0 0.0
      %3202 = vmatpush1.msra.mxu0 0.0
      %3203 = vmatprep.subr.mxu0 0.0
      %3204 = vmatpush1.msra.mxu0 0.0
      %3205 = vmatprep.subr.mxu0 0.0
      %3206 = vmatpush1.msra.mxu0 0.0
      %3207 = vmatprep.subr.mxu0 0.0
      %3208 = vmatpush1.msra.mxu0 0.0
      %3209 = vmatprep.subr.mxu0 0.0
      %3210 = vmatpush1.msra.mxu0 0.0
      %3211 = vmatprep.mubr.f32.mxu0 0.0
      %3212 = vmatmul.mubr.f32.gmra.mrb[0].mxu0 %v3145
      %v3213 = vpop.f32.mrb[0].mxu0
      %v3214 = vadd.f32 %v3142, %v3213
      %v3215 = vpop.f32.mrb[0].mxu0
      %v3216 = vadd.f32 %v3142, %v3215
      %3217 = vdwg.mxu0
      %v3218 = vsub.f32 0.0, %v3214
      %v3219 = vsub.f32 0.0, %v3216
      %v3220 = vmul.f32 %v3218, 1.442695
      %v3221 = vpow.pop %v3220
      %v3222 = vmul.f32 %v3219, 1.442695
      %v3223 = vpow.pop %v3222
      %v3224 = vadd.f32 %v3221, 1.0
      %v3225 = vadd.f32 %v3223, 1.0
      %v3226 = vrcp.pop %v3224
      %v3227 = vrcp.pop %v3225
      %v3228 = vlaneseq
      %v3229 = vshrl.u32 %v3228, 7
      %v3230 = vsub.s32 0, %v3229
      %v3231 = vrot.slane %v3226, %v3230
      %v3232 = vlaneseq
      %v3233 = vshrl.u32 %v3232, 7
      %v3234 = vsub.s32 0, %v3233
      %v3235 = vrot.slane %v3227, %v3234
      %v3236 = vmul.f32 %v3138, %v3231
      %v3237 = vmul.f32 %v3139, %v3235
      %v3238 = vadd.f32 %v320, %v3236
      %v3239 = vadd.f32 %v321, %v3237
      %3240 = vst [vmem:[%s252] sm:$0xff] %v3238
      %3241 = vst [vmem:[%s252 + $0x8] sm:$0xff] %v3239
      %p3242 = scmp.lt.s32.totalorder %s18, 1
      %s3243 = scalar_select %p3242, %s18, 1
      %s3244 = smul.addr %s3243, 2
      %s3245 = smul.addr %s3244, 8
      %s3246 = scalar_lea.vmem %s6, %s3245
      // Predicated region
      $region45: #{group_forward.1} parent=43 // pred_check
        %p3247 = pneg %p167
      $region46: #{group_forward.1} parent=43 // pred_check_branch
        %3249 = sbr.rel (%p3247) target = $region48
      $region47: #{group_forward.1} parent=43 // pred_region
        _
      $region48: #{group_forward.1} parent=43 // pred_fallthru
        _
    $region44: #{group_forward.1} parent=5 // pred_fallthru
      _
    %p3250 = scmp.le.s32.totalorder 2, %s13
    // Predicated region
    $region49: #{group_forward.1} parent=5 // pred_check
      %p3251 = pneg %p3250
    $region50: #{group_forward.1} parent=5 // pred_check_branch
      %3253 = sbr.rel (%p3251) target = $region52
    $region51: #{group_forward.1} parent=5 // pred_region
      %s3254 = ssub.s32 %s13, 2
      // Predicated region
      $region53: #{group_forward.1} parent=51 // pred_check
        %p3255 = pneg %p173
      $region54: #{group_forward.1} parent=51 // pred_check_branch
        %3257 = sbr.rel (%p3255) target = $region56
      $region55: #{group_forward.1} parent=51 // pred_region
        %p3258 = scmp.lt.s32.totalorder %s19, 1
        %s3259 = scalar_select %p3258, %s19, 1
        %s3260 = smul.addr %s3259, 2
        %s3261 = smul.addr %s3260, 8
        %s3262 = scalar_lea.vmem %s6, %s3261
      $region56: #{group_forward.1} parent=51 // pred_fallthru
        _
    $region52: #{group_forward.1} parent=5 // pred_fallthru
      _
  $region6: #{group_forward.1} parent=0 // loop_footer
    %s17 = sadd.s32 1, %s13
  $region7: #{group_forward.1} parent=0 // loop_footer_branch
    %12 = sbr.rel target = $region3
  $region8: #{group_forward.1} parent=0 // loop_exit
    _

</llo_original>
